<compile_context>
chip_gen: v6e
topology: v6e:2x2x1
jax: 0.10.0
libtpu: 0.0.40
codegen_flags: <defaults>
</compile_context>

<pallas_src>
import functools

import jax
import jax.numpy as jnp
import numpy as np
from jax import lax
from jax.experimental import pallas as pl
from jax.experimental.pallas import tpu as pltpu

_VMEM_LIMIT = 48 * 1024 * 1024          # explicit scoped-VMEM limit (< 64 MiB/TC on v7x)
_SINGLE_PASS_BUDGET = 24 * 1024 * 1024  # attention-tile budget for the single-kv-pass path


# ---------------------------------------------------------------------------
# tiling helpers
# ---------------------------------------------------------------------------
def _round_up(n, m):
    return ((n + m - 1) // m) * m


def _pick_tile(n, target, align):
    """Largest multiple of `align` that divides n and is <= target; else n (full)."""
    if n <= target:
        return n
    t = (target // align) * align
    while t >= align:
        if n % t == 0:
            return t
        t -= align
    return n


# ---------------------------------------------------------------------------
# Tiled bf16 GEMM (no bias) — the qkv projection (qkv_bias=False)
# ---------------------------------------------------------------------------
def _matmul_kernel(x_ref, w_ref, o_ref, acc_ref):
    @pl.when(pl.program_id(2) == 0)
    def _():
        acc_ref[...] = jnp.zeros_like(acc_ref)

    acc_ref[...] += jnp.dot(x_ref[...].astype(jnp.bfloat16), w_ref[...],
                            preferred_element_type=jnp.float32)

    @pl.when(pl.program_id(2) == pl.num_programs(2) - 1)
    def _():
        o_ref[...] = acc_ref[...].astype(o_ref.dtype)


def matmul_pallas(x2d, w_bf16, out_dtype=jnp.bfloat16):
    """(M, K) @ (K, N) tiled GEMM; bf16 MXU operands, f32 VMEM accumulator."""
    M, K = x2d.shape
    K2, N = w_bf16.shape
    assert K == K2
    tm = _pick_tile(M, 512, 16)      # 16-row multiples keep bf16 sublane tiles packed
    tn = _pick_tile(N, 512, 128)     # >=256 wide when the shape allows (v6e/v7x MXU)
    tk = _pick_tile(K, 512, 128)
    grid = (M // tm, N // tn, K // tk)
    return pl.pallas_call(
        _matmul_kernel,
        out_shape=jax.ShapeDtypeStruct((M, N), out_dtype),
        grid=grid,
        in_specs=[
            pl.BlockSpec((tm, tk), lambda i, j, k: (i, k)),
            pl.BlockSpec((tk, tn), lambda i, j, k: (k, j)),
        ],
        out_specs=pl.BlockSpec((tm, tn), lambda i, j, k: (i, j)),
        scratch_shapes=[pltpu.VMEM((tm, tn), jnp.float32)],
        compiler_params=pltpu.CompilerParams(
            dimension_semantics=("parallel", "parallel", "arbitrary"),
            vmem_limit_bytes=_VMEM_LIMIT),
    )(x2d, w_bf16)


# ---------------------------------------------------------------------------
# Fused attention + proj + bias + `v.squeeze(1) + x` residual
# ---------------------------------------------------------------------------
def _attn_proj_single_kernel(q_ref, kv_ref, vres_ref, wp_ref, bp_ref, o_ref, *, p_dim):
    """Single kv pass: plain softmax + fused proj/bias/residual epilogue."""
    q = q_ref[0]                                       # (tq, P) bf16, scale pre-folded
    kv = kv_ref[0]                                     # (S, 2P) bf16 — one merged DMA
    k = kv[:, :p_dim]
    v = kv[:, p_dim:]

    # q @ k^T without materializing a transpose: contract the last dims.
    s = lax.dot_general(q, k, (((1,), (1,)), ((), ())),
                        preferred_element_type=jnp.float32)            # (tq, S)
    m = s.max(axis=-1, keepdims=True)
    p = jnp.exp(s - m)
    l = p.sum(axis=-1, keepdims=True)
    o = jnp.dot(p.astype(v.dtype), v, preferred_element_type=jnp.float32)
    o = o * pl.reciprocal(l, approx=True)              # EUP slot; ~1e-3 rel err acceptable here

    # fused proj + bias + `v.squeeze(1) + x` residual (o never leaves VMEM)
    y = jnp.dot(o.astype(wp_ref.dtype), wp_ref[...],
                preferred_element_type=jnp.float32)
    y = y + bp_ref[...] + vres_ref[0].astype(jnp.float32)
    o_ref[0] = y.astype(o_ref.dtype)


def _attn_proj_flash_kernel(q_ref, kv_ref, vres_ref, wp_ref, bp_ref, o_ref,
                            m_ref, l_ref, acc_ref, *, p_dim):
    """Flash-style fallback for large S: kv grid axis innermost ('arbitrary')."""
    j = pl.program_id(2)

    @pl.when(j == 0)
    def _():
        m_ref[...] = jnp.full_like(m_ref, -jnp.inf)
        l_ref[...] = jnp.zeros_like(l_ref)
        acc_ref[...] = jnp.zeros_like(acc_ref)

    q = q_ref[0]                                       # (tq, P) bf16, scale pre-folded
    kv = kv_ref[0]                                     # (tkv, 2P) bf16 — one merged DMA
    k = kv[:, :p_dim]
    v = kv[:, p_dim:]

    s = lax.dot_general(q, k, (((1,), (1,)), ((), ())),
                        preferred_element_type=jnp.float32)            # (tq, tkv)
    m_prev = m_ref[...]
    m_new = jnp.maximum(m_prev, s.max(axis=-1, keepdims=True))
    alpha = jnp.exp(m_prev - m_new)
    p = jnp.exp(s - m_new)
    l_ref[...] = alpha * l_ref[...] + p.sum(axis=-1, keepdims=True)
    acc_ref[...] = alpha * acc_ref[...] + jnp.dot(
        p.astype(v.dtype), v, preferred_element_type=jnp.float32)
    m_ref[...] = m_new

    @pl.when(j == pl.num_programs(2) - 1)
    def _():
        o = acc_ref[...] * pl.reciprocal(l_ref[...], approx=True)
        y = jnp.dot(o.astype(wp_ref.dtype), wp_ref[...],
                    preferred_element_type=jnp.float32)
        y = y + bp_ref[...] + vres_ref[0].astype(jnp.float32)
        o_ref[0] = y.astype(o_ref.dtype)


def _single_pass_fits(S, P, tq, budget=_SINGLE_PASS_BUDGET):
    bytes_ = 2 * (S * 2 * P) * 2          # merged k|v block, double-buffered, bf16
    bytes_ += 2 * (P * P) * 2             # resident w_proj (bf16)
    bytes_ += 2 * 2 * (tq * P) * 2        # q + v-residual blocks (bf16, double-buffered)
    bytes_ += 2 * (tq * P) * 4            # output block (f32, double-buffered)
    bytes_ += 2 * (tq * S) * 4            # scores / probs temporaries (f32)
    bytes_ += 2 * (tq * P) * 4            # attention / proj f32 temporaries
    return bytes_ <= budget


def fused_attention_proj(qkv3, w_proj_bf16, b_proj_row, *, p_dim, out_dtype,
                         force_flash=False, q_block_rows=None, kv_block_rows=None):
    """softmax(q k^T) v @ w_proj + b_proj + v, reading q / merged k|v / the v residual
    straight out of the packed [k | v | q] qkv buffer (q pre-scaled)."""
    B, S, _ = qkv3.shape
    tq = q_block_rows if q_block_rows is not None else _pick_tile(S, 256, 16)
    assert S % tq == 0

    if (not force_flash) and _single_pass_fits(S, p_dim, tq):
        grid = (B, S // tq)
        return pl.pallas_call(
            functools.partial(_attn_proj_single_kernel, p_dim=p_dim),
            out_shape=jax.ShapeDtypeStruct((B, S, p_dim), out_dtype),
            grid=grid,
            in_specs=[
                pl.BlockSpec((1, tq, p_dim), lambda b, i: (b, i, 2)),        # q (pre-scaled)
                pl.BlockSpec((1, S, 2 * p_dim), lambda b, i: (b, 0, 0)),     # merged k|v
                pl.BlockSpec((1, tq, p_dim), lambda b, i: (b, i, 1)),        # v residual rows
                pl.BlockSpec((p_dim, p_dim), lambda b, i: (0, 0)),           # w_proj (resident)
                pl.BlockSpec((1, p_dim), lambda b, i: (0, 0)),               # b_proj
            ],
            out_specs=pl.BlockSpec((1, tq, p_dim), lambda b, i: (b, i, 0)),
            compiler_params=pltpu.CompilerParams(
                dimension_semantics=("parallel", "parallel"),
                vmem_limit_bytes=_VMEM_LIMIT),
        )(qkv3, qkv3, qkv3, w_proj_bf16, b_proj_row)

    # Large-S fallback: flash-style online softmax over a kv grid axis.
    tkv = kv_block_rows if kv_block_rows is not None else _pick_tile(S, 512, 16)
    assert S % tkv == 0
    grid = (B, S // tq, S // tkv)
    # NOTE: pipeline_mode=pl.Buffered(3) on the merged k|v spec is a further knob to
    # hide exposed DMA latency (mostly on v5e); left at the default double-buffering.
    return pl.pallas_call(
        functools.partial(_attn_proj_flash_kernel, p_dim=p_dim),
        out_shape=jax.ShapeDtypeStruct((B, S, p_dim), out_dtype),
        grid=grid,
        in_specs=[
            pl.BlockSpec((1, tq, p_dim), lambda b, i, j: (b, i, 2)),         # q (pre-scaled)
            pl.BlockSpec((1, tkv, 2 * p_dim), lambda b, i, j: (b, j, 0)),    # merged k|v
            pl.BlockSpec((1, tq, p_dim), lambda b, i, j: (b, i, 1)),         # v residual rows
            pl.BlockSpec((p_dim, p_dim), lambda b, i, j: (0, 0)),            # w_proj (resident)
            pl.BlockSpec((1, p_dim), lambda b, i, j: (0, 0)),                # b_proj
        ],
        out_specs=pl.BlockSpec((1, tq, p_dim), lambda b, i, j: (b, i, 0)),
        scratch_shapes=[pltpu.VMEM((tq, 1), jnp.float32),                    # running max
                        pltpu.VMEM((tq, 1), jnp.float32),                    # running sum
                        pltpu.VMEM((tq, p_dim), jnp.float32)],               # output accumulator
        compiler_params=pltpu.CompilerParams(
            dimension_semantics=("parallel", "parallel", "arbitrary"),
            vmem_limit_bytes=_VMEM_LIMIT),
    )(qkv3, qkv3, qkv3, w_proj_bf16, b_proj_row)


# ---------------------------------------------------------------------------
# Attention2 forward factory — dropouts are identity (eval / p=0.0)
# ---------------------------------------------------------------------------
def make_attention2_forward(params, num_heads, *, qk_scale=None, force_flash=False,
                            q_block_rows=None, kv_block_rows=None):
    """One-time host-side parameter prep + a jitted Pallas forward."""
    if num_heads != 1:
        raise ValueError("Attention2's `v.squeeze(1) + x` residual requires num_heads == 1")
    w_qkv = jnp.asarray(params["w_qkv"], jnp.float32)      # (dim, 3*in_dim), q|k|v columns
    w_proj = jnp.asarray(params["w_proj"], jnp.float32)    # (in_dim, in_dim)
    b_proj = jnp.asarray(params["b_proj"], jnp.float32)    # (in_dim,)
    dim = w_qkv.shape[0]
    in_dim = w_qkv.shape[1] // 3
    head_dim = dim // num_heads
    scale = qk_scale if qk_scale is not None else head_dim ** (-0.5)
    p_dim = _round_up(in_dim, 128)                         # lane-dense channel width
    pad = p_dim - in_dim

    # --- one-time parameter prep (host side, zero per-call cost) ---
    #  * fold the softmax scale into the q columns,
    #  * reorder the packed columns to [k | v | q] so k/v are one merged DMA,
    #  * zero-pad in_dim -> p_dim (exact no-op through scores/softmax/proj),
    #  * pre-cast matmul weights to bf16 (f32 accumulation stays in-kernel).
    w_q = jnp.pad(w_qkv[:, :in_dim] * scale, ((0, 0), (0, pad)))
    w_k = jnp.pad(w_qkv[:, in_dim:2 * in_dim], ((0, 0), (0, pad)))
    w_v = jnp.pad(w_qkv[:, 2 * in_dim:], ((0, 0), (0, pad)))
    w_packed = jnp.concatenate([w_k, w_v, w_q], axis=1).astype(jnp.bfloat16)   # (dim, 3*p_dim)
    w_proj_p = jnp.pad(w_proj, ((0, pad), (0, pad))).astype(jnp.bfloat16)      # (p_dim, p_dim)
    b_proj_p = jnp.pad(b_proj, ((0, pad),)).reshape(1, p_dim)                  # f32 (1, p_dim)
    # TODO(synk): qkv_bias=True would need a bias operand in the qkv GEMM
    # (the module default qkv_bias=False is what we implement).

    def forward(x):
        B, S, D = x.shape                 # PyTorch names these (B, C, N)
        if not (D == dim and S == in_dim and D == in_dim):
            raise ValueError(
                "Attention2's reshapes require x.shape[1] == x.shape[2] == dim == in_dim")
        # qkv = Linear(dim, 3*in_dim, bias=False) over all tokens: one tiled bf16 GEMM.
        qkv2d = matmul_pallas(x.reshape(B * S, D), w_packed)          # (B*S, 3*p_dim) bf16
        qkv3 = qkv2d.reshape(B, S, 3 * p_dim)                         # free reshape
        # attention + proj + bias + `v.squeeze(1) + x` residual, all in one kernel.
        y = fused_attention_proj(qkv3, w_proj_p, b_proj_p, p_dim=p_dim,
                                 out_dtype=x.dtype, force_flash=force_flash,
                                 q_block_rows=q_block_rows, kv_block_rows=kv_block_rows)
        if p_dim != in_dim:
            y = y[:, :, :in_dim]          # drop the zero padding channels
        return y

    return jax.jit(forward)


# ---------------------------------------------------------------------------
# Pure-JAX reference mirroring the PyTorch forward line by line (f32 throughout)
# ---------------------------------------------------------------------------
def reference_forward(x, params, num_heads):
    B, C, N = x.shape
    dim = params["w_qkv"].shape[0]
    in_dim = params["w_qkv"].shape[1] // 3
    scale = (dim // num_heads) ** (-0.5)
    qkv = x @ params["w_qkv"]                                  # qkv_bias=False
    qkv = qkv.reshape(B, N, 3, num_heads, C // num_heads).transpose(2, 0, 3, 1, 4)
    q, k, v = qkv[0], qkv[1], qkv[2]
    attn = jnp.einsum("bhqd,bhkd->bhqk", q, k) * scale
    attn = jax.nn.softmax(attn, axis=-1)
    o = jnp.einsum("bhqk,bhkd->bhqd", attn, v)
    o = o.transpose(0, 2, 1, 3).reshape(B, N, in_dim)
    o = o @ params["w_proj"] + params["b_proj"]
    return jnp.squeeze(v, axis=1) + o


if __name__ == "__main__":
    def run_case(case_id, B, dim_, *, force_flash=False, q_block_rows=None,
                 kv_block_rows=None, tol=3e-2):
        num_heads = 1                     # required by the `v.squeeze(1) + x` residual
        in_dim = dim_
        S = dim_                          # Attention2's reshapes force tokens == channels == dim
        key = jax.random.fold_in(jax.random.PRNGKey(0), case_id)
        kx, kq, kp, kb = jax.random.split(key, 4)
        x = jax.random.normal(kx, (B, S, dim_), dtype=jnp.float32)
        params = {
            "w_qkv": jax.random.normal(kq, (dim_, 3 * in_dim), jnp.float32) * 0.05,
            "w_proj": jax.random.normal(kp, (in_dim, in_dim), jnp.float32) * 0.05,
            "b_proj": jax.random.normal(kb, (in_dim,), jnp.float32) * 0.05,
        }
        fwd = make_attention2_forward(params, num_heads, force_flash=force_flash,
                                      q_block_rows=q_block_rows,
                                      kv_block_rows=kv_block_rows)
        out = jax.block_until_ready(fwd(x))
        ref = reference_forward(x, params, num_heads)
        # bf16 MXU operands (f32 accumulation) -> compare against the f32 reference
        # at a bf16-appropriate tolerance.
        np.testing.assert_allclose(np.asarray(out), np.asarray(ref), rtol=tol, atol=tol)

    # main path: single-kv-pass fused attention + proj kernel (128-lane dense)
    run_case(0, B=2, dim_=128)
    # padded-channel path: in_dim = 96 zero-padded to 128 lanes inside the kernels
    run_case(1, B=1, dim_=96)
    # large-S fallback coverage: force the flash-style multi-kv-step kernel
    run_case(2, B=2, dim_=128, force_flash=True, kv_block_rows=64)
    print("KERNEL_OK")
</pallas_src>

<mosaic_0001>
module attributes {stable_mosaic.version = 11 : i64} {
  func.func @_matmul_kernel(%arg0: i32, %arg1: i32, %arg2: i32, %arg3: memref<256x128xf32, #tpu.memory_space<vmem>>, %arg4: memref<128x384xbf16, #tpu.memory_space<vmem>>, %arg5: memref<256x384xbf16, #tpu.memory_space<vmem>>, %arg6: memref<256x384xf32, #tpu.memory_space<vmem>>) attributes {dimension_semantics = [#tpu.dimension_semantics<parallel>, #tpu.dimension_semantics<parallel>, #tpu.dimension_semantics<arbitrary>], iteration_bounds = array<i64: 1, 1, 1>, scalar_prefetch = 0 : i64, scratch_operands = 1 : i64, tpu.core_type = #tpu.core_type<tc>, window_params = [{transform_indices = @transform_0, window_bounds = array<i64: 256, 128>}, {transform_indices = @transform_1, window_bounds = array<i64: 128, 384>}, {transform_indices = @transform_2, window_bounds = array<i64: 256, 384>}]} {
    %c0_i32 = arith.constant 0 : i32
    %0 = arith.cmpi eq, %arg2, %c0_i32 : i32
    %1 = arith.extui %0 : i1 to i32
    %c0_i32_0 = arith.constant 0 : i32
    %2 = arith.cmpi ne, %1, %c0_i32_0 : i32
    scf.if %2 {
      %cst_10 = arith.constant 0.000000e+00 : f32
      %13 = vector.broadcast %cst_10 : f32 to vector<256x384xf32>
      %c0_11 = arith.constant 0 : index
      %c0_12 = arith.constant 0 : index
      %14 = vector.load %arg6[%c0_11, %c0_12] : memref<256x384xf32, #tpu.memory_space<vmem>>, vector<256x384xf32>
      tpu.vector_store %arg6[%c0_11, %c0_12], %13 {strides = array<i32>} : memref<256x384xf32, #tpu.memory_space<vmem>>, vector<256x384xf32>,
    } else {
    }
    %c0 = arith.constant 0 : index
    %c0_1 = arith.constant 0 : index
    %3 = vector.load %arg6[%c0, %c0_1] : memref<256x384xf32, #tpu.memory_space<vmem>>, vector<256x384xf32>
    %c0_2 = arith.constant 0 : index
    %c0_3 = arith.constant 0 : index
    %4 = vector.load %arg3[%c0_2, %c0_3] : memref<256x128xf32, #tpu.memory_space<vmem>>, vector<256x128xf32>
    %5 = arith.truncf %4 : vector<256x128xf32> to vector<256x128xbf16>
    %c0_4 = arith.constant 0 : index
    %c0_5 = arith.constant 0 : index
    %6 = vector.load %arg4[%c0_4, %c0_5] : memref<128x384xbf16, #tpu.memory_space<vmem>>, vector<128x384xbf16>
    %cst = arith.constant dense<0.000000e+00> : vector<256x384xf32>
    %7 = tpu.matmul %5, %6, %cst {dimension_numbers = #tpu.dot_dimension_numbers<[1], [0], [0], [1], [0, 0, 1, 1], [], []>} : vector<256x128xbf16>, vector<128x384xbf16>, vector<256x384xf32> -> vector<256x384xf32>
    %8 = arith.addf %3, %7 : vector<256x384xf32>
    %c0_6 = arith.constant 0 : index
    %c0_7 = arith.constant 0 : index
    %9 = vector.load %arg6[%c0_6, %c0_7] : memref<256x384xf32, #tpu.memory_space<vmem>>, vector<256x384xf32>
    tpu.vector_store %arg6[%c0_6, %c0_7], %8 {strides = array<i32>} : memref<256x384xf32, #tpu.memory_space<vmem>>, vector<256x384xf32>,
    %c0_i32_8 = arith.constant 0 : i32
    %10 = arith.cmpi eq, %arg2, %c0_i32_8 : i32
    %11 = arith.extui %10 : i1 to i32
    %c0_i32_9 = arith.constant 0 : i32
    %12 = arith.cmpi ne, %11, %c0_i32_9 : i32
    scf.if %12 {
      %c0_10 = arith.constant 0 : index
      %c0_11 = arith.constant 0 : index
      %13 = vector.load %arg6[%c0_10, %c0_11] : memref<256x384xf32, #tpu.memory_space<vmem>>, vector<256x384xf32>
      %14 = arith.truncf %13 : vector<256x384xf32> to vector<256x384xbf16>
      %c0_12 = arith.constant 0 : index
      %c0_13 = arith.constant 0 : index
      %15 = vector.load %arg5[%c0_12, %c0_13] : memref<256x384xbf16, #tpu.memory_space<vmem>>, vector<256x384xbf16>
      tpu.vector_store %arg5[%c0_12, %c0_13], %14 {strides = array<i32>} : memref<256x384xbf16, #tpu.memory_space<vmem>>, vector<256x384xbf16>,
    } else {
    }
    return
  }
  func.func @transform_0(%arg0: i32, %arg1: i32, %arg2: i32) -> (i32, i32) {
    %c0_i32 = arith.constant 0 : i32
    return %arg0, %arg2 : i32, i32
  }
  func.func @transform_1(%arg0: i32, %arg1: i32, %arg2: i32) -> (i32, i32) {
    %c0_i32 = arith.constant 0 : i32
    return %arg2, %arg1 : i32, i32
  }
  func.func @transform_2(%arg0: i32, %arg1: i32, %arg2: i32) -> (i32, i32) {
    %c0_i32 = arith.constant 0 : i32
    return %arg0, %arg1 : i32, i32
  }
}

module attributes {stable_mosaic.version = 11 : i64} {
  func.func @_attn_proj_single_kernel(%arg0: i32, %arg1: i32, %arg2: memref<1x128x128xbf16, #tpu.memory_space<vmem>>, %arg3: memref<1x128x256xbf16, #tpu.memory_space<vmem>>, %arg4: memref<1x128x128xbf16, #tpu.memory_space<vmem>>, %arg5: memref<128x128xbf16, #tpu.memory_space<vmem>>, %arg6: memref<1x128xf32, #tpu.memory_space<vmem>>, %arg7: memref<1x128x128xf32, #tpu.memory_space<vmem>>) attributes {dimension_semantics = [#tpu.dimension_semantics<parallel>, #tpu.dimension_semantics<parallel>], iteration_bounds = array<i64: 2, 1>, scalar_prefetch = 0 : i64, scratch_operands = 0 : i64, tpu.core_type = #tpu.core_type<tc>, window_params = [{transform_indices = @transform_0, window_bounds = array<i64: 1, 128, 128>}, {transform_indices = @transform_1, window_bounds = array<i64: 1, 128, 256>}, {transform_indices = @transform_2, window_bounds = array<i64: 1, 128, 128>}, {pipeline_mode = #tpu.pipeline_mode<synchronous>, transform_indices = @transform_3, window_bounds = array<i64: 128, 128>}, {pipeline_mode = #tpu.pipeline_mode<synchronous>, transform_indices = @transform_4, window_bounds = array<i64: 1, 128>}, {transform_indices = @transform_5, window_bounds = array<i64: 1, 128, 128>}]} {
    %c0 = arith.constant 0 : index
    %c0_0 = arith.constant 0 : index
    %c0_1 = arith.constant 0 : index
    %0 = vector.load %arg2[%c0, %c0_0, %c0_1] : memref<1x128x128xbf16, #tpu.memory_space<vmem>>, vector<1x128x128xbf16>
    %1 = vector.shape_cast %0 : vector<1x128x128xbf16> to vector<128x128xbf16>
    %c0_2 = arith.constant 0 : index
    %c0_3 = arith.constant 0 : index
    %c0_4 = arith.constant 0 : index
    %2 = vector.load %arg3[%c0_2, %c0_3, %c0_4] : memref<1x128x256xbf16, #tpu.memory_space<vmem>>, vector<1x128x256xbf16>
    %3 = vector.shape_cast %2 : vector<1x128x256xbf16> to vector<128x256xbf16>
    %4 = vector.extract_strided_slice %3 {offsets = [0, 0], sizes = [128, 128], strides = [1, 1]} : vector<128x256xbf16> to vector<128x128xbf16>
    %5 = vector.extract_strided_slice %3 {offsets = [0, 128], sizes = [128, 128], strides = [1, 1]} : vector<128x256xbf16> to vector<128x128xbf16>
    %cst = arith.constant dense<0.000000e+00> : vector<128x128xf32>
    %6 = tpu.matmul %1, %4, %cst {dimension_numbers = #tpu.dot_dimension_numbers<[1], [1], [0], [0], [0, 0, 1, 0], [], []>} : vector<128x128xbf16>, vector<128x128xbf16>, vector<128x128xf32> -> vector<128x128xf32>
    %cst_5 = arith.constant dense<0xFF800000> : vector<128xf32>
    %7 = vector.multi_reduction <maximumf>, %6, %cst_5 [1] : vector<128x128xf32> to vector<128xf32>
    %8 = vector.shape_cast %7 : vector<128xf32> to vector<128x1xf32>
    %9 = vector.broadcast %8 : vector<128x1xf32> to vector<128x128xf32>
    %10 = arith.subf %6, %9 : vector<128x128xf32>
    %11 = math.exp %10 : vector<128x128xf32>
    %cst_6 = arith.constant dense<0.000000e+00> : vector<128xf32>
    %12 = vector.multi_reduction <add>, %11, %cst_6 [1] : vector<128x128xf32> to vector<128xf32>
    %13 = vector.shape_cast %12 : vector<128xf32> to vector<128x1xf32>
    %14 = arith.truncf %11 : vector<128x128xf32> to vector<128x128xbf16>
    %cst_7 = arith.constant dense<0.000000e+00> : vector<128x128xf32>
    %15 = tpu.matmul %14, %5, %cst_7 {dimension_numbers = #tpu.dot_dimension_numbers<[1], [0], [0], [1], [0, 0, 1, 1], [], []>} : vector<128x128xbf16>, vector<128x128xbf16>, vector<128x128xf32> -> vector<128x128xf32>
    %16 = tpu.reciprocal %13 {approx = true} : vector<128x1xf32> -> vector<128x1xf32>
    %17 = vector.broadcast %16 : vector<128x1xf32> to vector<128x128xf32>
    %18 = arith.mulf %15, %17 : vector<128x128xf32>
    %19 = arith.truncf %18 : vector<128x128xf32> to vector<128x128xbf16>
    %c0_8 = arith.constant 0 : index
    %c0_9 = arith.constant 0 : index
    %20 = vector.load %arg5[%c0_8, %c0_9] : memref<128x128xbf16, #tpu.memory_space<vmem>>, vector<128x128xbf16>
    %cst_10 = arith.constant dense<0.000000e+00> : vector<128x128xf32>
    %21 = tpu.matmul %19, %20, %cst_10 {dimension_numbers = #tpu.dot_dimension_numbers<[1], [0], [0], [1], [0, 0, 1, 1], [], []>} : vector<128x128xbf16>, vector<128x128xbf16>, vector<128x128xf32> -> vector<128x128xf32>
    %c0_11 = arith.constant 0 : index
    %c0_12 = arith.constant 0 : index
    %22 = vector.load %arg6[%c0_11, %c0_12] : memref<1x128xf32, #tpu.memory_space<vmem>>, vector<1x128xf32>
    %23 = vector.broadcast %22 : vector<1x128xf32> to vector<128x128xf32>
    %24 = arith.addf %21, %23 : vector<128x128xf32>
    %c0_13 = arith.constant 0 : index
    %c0_14 = arith.constant 0 : index
    %c0_15 = arith.constant 0 : index
    %25 = vector.load %arg4[%c0_13, %c0_14, %c0_15] : memref<1x128x128xbf16, #tpu.memory_space<vmem>>, vector<1x128x128xbf16>
    %26 = vector.shape_cast %25 : vector<1x128x128xbf16> to vector<128x128xbf16>
    %27 = arith.extf %26 : vector<128x128xbf16> to vector<128x128xf32>
    %28 = arith.addf %24, %27 : vector<128x128xf32>
    %c0_16 = arith.constant 0 : index
    %c0_17 = arith.constant 0 : index
    %c0_18 = arith.constant 0 : index
    %29 = vector.load %arg7[%c0_16, %c0_17, %c0_18] : memref<1x128x128xf32, #tpu.memory_space<vmem>>, vector<1x128x128xf32>
    %30 = vector.shape_cast %29 : vector<1x128x128xf32> to vector<128x128xf32>
    %31 = vector.shape_cast %28 : vector<128x128xf32> to vector<1x128x128xf32>
    tpu.vector_store %arg7[%c0_16, %c0_17, %c0_18], %31 {strides = array<i32>} : memref<1x128x128xf32, #tpu.memory_space<vmem>>, vector<1x128x128xf32>,
    return
  }
  func.func @transform_0(%arg0: i32, %arg1: i32) -> (i32, i32, i32) {
    %c2_i32 = arith.constant 2 : i32
    %c0_i32 = arith.constant 0 : i32
    return %arg0, %arg1, %c2_i32 : i32, i32, i32
  }
  func.func @transform_1(%arg0: i32, %arg1: i32) -> (i32, i32, i32) {
    %c0_i32 = arith.constant 0 : i32
    %c0_i32_0 = arith.constant 0 : i32
    %c0_i32_1 = arith.constant 0 : i32
    return %arg0, %c0_i32, %c0_i32_0 : i32, i32, i32
  }
  func.func @transform_2(%arg0: i32, %arg1: i32) -> (i32, i32, i32) {
    %c1_i32 = arith.constant 1 : i32
    %c0_i32 = arith.constant 0 : i32
    return %arg0, %arg1, %c1_i32 : i32, i32, i32
  }
  func.func @transform_3(%arg0: i32, %arg1: i32) -> (i32, i32) {
    %c0_i32 = arith.constant 0 : i32
    %c0_i32_0 = arith.constant 0 : i32
    %c0_i32_1 = arith.constant 0 : i32
    return %c0_i32, %c0_i32_0 : i32, i32
  }
  func.func @transform_4(%arg0: i32, %arg1: i32) -> (i32, i32) {
    %c0_i32 = arith.constant 0 : i32
    %c0_i32_0 = arith.constant 0 : i32
    %c0_i32_1 = arith.constant 0 : i32
    return %c0_i32, %c0_i32_0 : i32, i32
  }
  func.func @transform_5(%arg0: i32, %arg1: i32) -> (i32, i32, i32) {
    %c0_i32 = arith.constant 0 : i32
    %c0_i32_0 = arith.constant 0 : i32
    return %arg0, %arg1, %c0_i32 : i32, i32, i32
  }
}

</mosaic_0001>

<llo_original>
// kernel: forward.3
$region0: #{forward.3}
  #allocation0 [shape = 'u32[]', space=smem, size = 0x4, offset = 0x4, fixed_abs, tag = 'smem constant byte address 0x4 - core index']
  #allocation1 [shape = 'u32[144,128]{1,0:T(1,128)}', space=vmem, size = 0x12000, scoped, tag = 'internal scratch']
  %s0 = inlined_call_operand.vmem [shape: bf16[2,128,384], index: 0, kind: input, shape index: {}, may-alias: {0,1,2}]
  %s1 = inlined_call_operand.vmem [shape: bf16[2,128,384], index: 1, kind: input, shape index: {}, may-alias: {0,1,2}]
  %s2 = inlined_call_operand.vmem [shape: bf16[2,128,384], index: 2, kind: input, shape index: {}, may-alias: {0,1,2}]
  %s3 = inlined_call_operand.vmem [shape: bf16[128,128], index: 3, kind: input, shape index: {}]
  %s4 = inlined_call_operand.vmem [shape: f32[1,128], index: 4, kind: input, shape index: {}]
  %s5 = inlined_call_operand.hbm [shape: f32[2,128,128], index: 5, kind: output, shape index: {}]
  %s6 = sld [smem:[#allocation0]]
  $region173: #{forward.3} parent=0
    _
  %s8 = ssub.s32 1, %s6
  %s9 = scalar_select 0, %s8, %s6
  $region1: #{forward.3} parent=0
    #allocation2 [shape = 'u8[65536]{0}', space=vmem, size = 0x10000, scoped, tag = 'input window, operand 0']
    #allocation3 [shape = 'u8[131072]{0}', space=vmem, size = 0x20000, scoped, tag = 'input window, operand 1']
    #allocation4 [shape = 'u8[65536]{0}', space=vmem, size = 0x10000, scoped, tag = 'input window, operand 2']
    #allocation5 [shape = 'u8[131072]{0}', space=vmem, size = 0x20000, scoped, tag = 'output window, operand 0']
    #allocation6 [shape = 's32[2]{0}', space=sflag, size = 0x8, scoped, tag = 'scoped memory for forward.3']
    %10 = vsyncpa [#allocation6], 0
    %s11 = scalar_lea.sflag [#allocation6], 1
    %12 = vsyncpa %s11, 0
    loop: start=0, step=1, limit=4
    $region2: #{forward.3} parent=1 // loop_pre_header
      _
    $region3: #{forward.3} parent=1 // loop_header
      %s14 = sphi 0, %s18
      %p15 = scmp.ge.s32.totalorder %s14, 4
      %s21 = sphi 0, %s33
      %s22 = sphi 0, %s29
      %s23 = sphi 0, %s21
      %s24 = sphi 0, %s22
      %s25 = sphi 0, %s23
      %s26 = sphi 0, %s24
      %s38 = sphi 0, %s40
      %s41 = sphi 0, %s38
      %s42 = sphi 0, %s41
      %s58 = sphi 0, %s42
      %s64 = sphi 0, %s66
      %s67 = sphi 0, %s64
      %s68 = sphi 0, %s67
      %s84 = sphi 0, %s68
      %s92 = sphi 0, %s94
      %s95 = sphi 0, %s92
      %s96 = sphi 0, %s95
      %s112 = sphi 0, %s96
      %s116 = sphi 0, %s116
      %s118 = sphi 0, %s116
      %s119 = sphi 0, %s118
      %s133 = sphi 0, %s119
      %s137 = sphi 0, %s137
      %s139 = sphi 0, %s137
      %s140 = sphi 0, %s139
      %s154 = sphi 0, %s140
      %s162 = sphi 0, %s164
      %s165 = sphi 0, %s162
      %s166 = sphi 0, %s165
      %s182 = sphi 0, %s166
    $region4: #{forward.3} parent=1 // loop_header_branch
      %17 = sbr.rel (%p15) target = $region8
    $region5: #{forward.3} parent=1 // loop_body
      %s19 = ssub.s32 %s14, 1
      %s20 = ssub.s32 %s14, 2
      %s27 = sadd.s32 1, %s22
      %p28 = scmp.ge.s32.totalorder %s27, 1
      %s29 = scalar_select %p28, 0, %s27
      %s30 = sadd.s32 1, %s21
      %s31 = scalar_select %p28, %s30, %s21
      %p32 = scmp.ge.s32.totalorder %s31, 2
      %s33 = scalar_select %p32, 0, %s31
      %s34 = ssub.s32 %s21, %s33
      %s35 = ssub.s32 %s22, %s29
      %s36 = sor.u32 %s34, %s35
      %p37 = scmp.eq.s32.totalorder %s36, 0
      %s39 = sadd.s32 %s38, 1
      %s40 = scalar_select %p37, %s38, %s39
      %p43 = pneg %p37
      %p44 = scmp.eq.s32.totalorder %s14, 1
      %p45 = por %p43, %p44
      %p46 = scmp.ne.s32.totalorder %s38, %s41
      %p47 = scmp.eq.s32.totalorder %s14, 0
      %p48 = por %p46, %p47
      %p49 = scmp.ne.s32.totalorder %s38, %s41
      %p50 = scmp.eq.s32.totalorder %s19, 1
      %p51 = por %p49, %p50
      %p52 = scmp.ne.s32.totalorder %s41, %s42
      %p53 = scmp.eq.s32.totalorder %s19, 0
      %p54 = por %p52, %p53
      %p55 = scmp.ne.s32.totalorder %s41, %s42
      %p56 = scmp.eq.s32.totalorder %s20, 1
      %p57 = por %p55, %p56
      %p59 = scmp.ne.s32.totalorder %s42, %s58
      %p60 = scmp.eq.s32.totalorder %s20, 0
      %p61 = por %p59, %p60
      %s62 = ssub.s32 %s21, %s33
      %p63 = scmp.eq.s32.totalorder %s62, 0
      %s65 = sadd.s32 %s64, 1
      %s66 = scalar_select %p63, %s64, %s65
      %p69 = pneg %p63
      %p70 = scmp.eq.s32.totalorder %s14, 1
      %p71 = por %p69, %p70
      %p72 = scmp.ne.s32.totalorder %s64, %s67
      %p73 = scmp.eq.s32.totalorder %s14, 0
      %p74 = por %p72, %p73
      %p75 = scmp.ne.s32.totalorder %s64, %s67
      %p76 = scmp.eq.s32.totalorder %s19, 1
      %p77 = por %p75, %p76
      %p78 = scmp.ne.s32.totalorder %s67, %s68
      %p79 = scmp.eq.s32.totalorder %s19, 0
      %p80 = por %p78, %p79
      %p81 = scmp.ne.s32.totalorder %s67, %s68
      %p82 = scmp.eq.s32.totalorder %s20, 1
      %p83 = por %p81, %p82
      %p85 = scmp.ne.s32.totalorder %s68, %s84
      %p86 = scmp.eq.s32.totalorder %s20, 0
      %p87 = por %p85, %p86
      %s88 = ssub.s32 %s21, %s33
      %s89 = ssub.s32 %s22, %s29
      %s90 = sor.u32 %s88, %s89
      %p91 = scmp.eq.s32.totalorder %s90, 0
      %s93 = sadd.s32 %s92, 1
      %s94 = scalar_select %p91, %s92, %s93
      %p97 = pneg %p91
      %p98 = scmp.eq.s32.totalorder %s14, 1
      %p99 = por %p97, %p98
      %p100 = scmp.ne.s32.totalorder %s92, %s95
      %p101 = scmp.eq.s32.totalorder %s14, 0
      %p102 = por %p100, %p101
      %p103 = scmp.ne.s32.totalorder %s92, %s95
      %p104 = scmp.eq.s32.totalorder %s19, 1
      %p105 = por %p103, %p104
      %p106 = scmp.ne.s32.totalorder %s95, %s96
      %p107 = scmp.eq.s32.totalorder %s19, 0
      %p108 = por %p106, %p107
      %p109 = scmp.ne.s32.totalorder %s95, %s96
      %p110 = scmp.eq.s32.totalorder %s20, 1
      %p111 = por %p109, %p110
      %p113 = scmp.ne.s32.totalorder %s96, %s112
      %p114 = scmp.eq.s32.totalorder %s20, 0
      %p115 = por %p113, %p114
      %s117 = sadd.s32 %s116, 1
      %p120 = scmp.eq.s32.totalorder %s14, 1
      %p121 = scmp.ne.s32.totalorder %s116, %s118
      %p122 = scmp.eq.s32.totalorder %s14, 0
      %p123 = por %p121, %p122
      %p124 = scmp.ne.s32.totalorder %s116, %s118
      %p125 = scmp.eq.s32.totalorder %s19, 1
      %p126 = por %p124, %p125
      %p127 = scmp.ne.s32.totalorder %s118, %s119
      %p128 = scmp.eq.s32.totalorder %s19, 0
      %p129 = por %p127, %p128
      %p130 = scmp.ne.s32.totalorder %s118, %s119
      %p131 = scmp.eq.s32.totalorder %s20, 1
      %p132 = por %p130, %p131
      %p134 = scmp.ne.s32.totalorder %s119, %s133
      %p135 = scmp.eq.s32.totalorder %s20, 0
      %p136 = por %p134, %p135
      %s138 = sadd.s32 %s137, 1
      %p141 = scmp.eq.s32.totalorder %s14, 1
      %p142 = scmp.ne.s32.totalorder %s137, %s139
      %p143 = scmp.eq.s32.totalorder %s14, 0
      %p144 = por %p142, %p143
      %p145 = scmp.ne.s32.totalorder %s137, %s139
      %p146 = scmp.eq.s32.totalorder %s19, 1
      %p147 = por %p145, %p146
      %p148 = scmp.ne.s32.totalorder %s139, %s140
      %p149 = scmp.eq.s32.totalorder %s19, 0
      %p150 = por %p148, %p149
      %p151 = scmp.ne.s32.totalorder %s139, %s140
      %p152 = scmp.eq.s32.totalorder %s20, 1
      %p153 = por %p151, %p152
      %p155 = scmp.ne.s32.totalorder %s140, %s154
      %p156 = scmp.eq.s32.totalorder %s20, 0
      %p157 = por %p155, %p156
      %s158 = ssub.s32 %s21, %s33
      %s159 = ssub.s32 %s22, %s29
      %s160 = sor.u32 %s158, %s159
      %p161 = scmp.eq.s32.totalorder %s160, 0
      %s163 = sadd.s32 %s162, 1
      %s164 = scalar_select %p161, %s162, %s163
      %p167 = pneg %p161
      %p168 = scmp.eq.s32.totalorder %s14, 1
      %p169 = por %p167, %p168
      %p170 = scmp.ne.s32.totalorder %s162, %s165
      %p171 = scmp.eq.s32.totalorder %s14, 0
      %p172 = por %p170, %p171
      %p173 = scmp.ne.s32.totalorder %s162, %s165
      %p174 = scmp.eq.s32.totalorder %s19, 1
      %p175 = por %p173, %p174
      %p176 = scmp.ne.s32.totalorder %s165, %s166
      %p177 = scmp.eq.s32.totalorder %s19, 0
      %p178 = por %p176, %p177
      %p179 = scmp.ne.s32.totalorder %s165, %s166
      %p180 = scmp.eq.s32.totalorder %s20, 1
      %p181 = por %p179, %p180
      %p183 = scmp.ne.s32.totalorder %s166, %s182
      %p184 = scmp.eq.s32.totalorder %s20, 0
      %p185 = por %p183, %p184
      %p186 = scmp.le.s32.totalorder 1, %s14
      %p187 = scmp.lt.s32.totalorder %s14, 3
      %p188 = pnand %p186, %p187
      %p189 = pneg %p188
      // Predicated region
      $region9: #{forward.3} parent=5 // pred_check
        _
      $region10: #{forward.3} parent=5 // pred_check_branch
        %191 = sbr.rel (%p188) target = $region12
      $region11: #{forward.3} parent=5 // pred_region
        %s192 = ssub.s32 %s14, 1
        // Predicated region
        $region13: #{forward.3} parent=11 // pred_check
          %p193 = pneg %p129
        $region14: #{forward.3} parent=11 // pred_check_branch
          %195 = sbr.rel (%p193) target = $region16
        $region15: #{forward.3} parent=11 // pred_region
          _
        $region16: #{forward.3} parent=11 // pred_fallthru
          _
        // Predicated region
        $region17: #{forward.3} parent=11 // pred_check
          %p196 = pneg %p150
        $region18: #{forward.3} parent=11 // pred_check_branch
          %198 = sbr.rel (%p196) target = $region20
        $region19: #{forward.3} parent=11 // pred_region
          _
        $region20: #{forward.3} parent=11 // pred_fallthru
          _
      $region12: #{forward.3} parent=5 // pred_fallthru
        _
      %p199 = scmp.lt.s32.totalorder %s14, 2
      // Predicated region
      $region21: #{forward.3} parent=5 // pred_check
        %p200 = pneg %p199
      $region22: #{forward.3} parent=5 // pred_check_branch
        %202 = sbr.rel (%p200) target = $region24
      $region23: #{forward.3} parent=5 // pred_region
        // Predicated region
        $region25: #{forward.3} parent=23 // pred_check
          %p203 = pneg %p48
        $region26: #{forward.3} parent=23 // pred_check_branch
          %205 = sbr.rel (%p203) target = $region28
        $region27: #{forward.3} parent=23 // pred_region
          %s206 = sand.u32 %s38, 1
          %s207 = sand.u32 %s38, 1
          %s208 = smul.addr %s207, 64
          %s209 = scalar_lea.vmem [#allocation2], %s208
          %s210 = smul.u32 16, %s22
          %s211 = smul.addr %s210, 3
          %s212 = sadd.s32 2, %s211
          %s213 = smul.addr %s21, 48
          %s214 = sadd.s32 %s212, %s213
          %s215 = smul.addr %s214, 4
          %s216 = scalar_lea.vmem %s0, %s215
          // Predicated region
          $region29: #{forward.3} parent=27 // pred_check
            _
          $region30: #{forward.3} parent=27 // pred_check_branch
            %218 = sbr.rel (0) target = $region32
          $region31: #{forward.3} parent=27 // pred_region
            // Predicated region
            $region33: #{forward.3} parent=31 // pred_check
              _
            $region34: #{forward.3} parent=31 // pred_check_branch
              %220 = sbr.rel target = $region36
            $region35: #{forward.3} parent=31 // pred_region
              // Predicated region
              $region48: #{forward.3} parent=35 // pred_check
                _
              $region49: #{forward.3} parent=35 // pred_check_branch
                %266 = sbr.rel (0) target = $region51
              $region50: #{forward.3} parent=35 // pred_region
                loop: start=0, step=1, limit=1
                $region52: #{forward.3} parent=50 // loop_pre_header
                  _
                $region53: #{forward.3} parent=50 // loop_header
                  %s268 = sphi 0, %s272
                  %p269 = scmp.ge.s32.totalorder %s268, 1
                  %s273 = sphi %s216, %s216
                  %s274 = sphi %s209, %s209
                $region54: #{forward.3} parent=50 // loop_header_branch
                  %271 = sbr.rel (%p269) target = $region58
                $region55: #{forward.3} parent=50 // loop_body
                  _
                $region56: #{forward.3} parent=50 // loop_footer
                  %s272 = sadd.s32 1, %s268
                $region57: #{forward.3} parent=50 // loop_footer_branch
                  %267 = sbr.rel target = $region53
                $region58: #{forward.3} parent=50 // loop_exit
                  _
                %s276 = ssub.s32 16, 1
                loop: start=0, step=1, limit=1
                $region59: #{forward.3} parent=50 // loop_pre_header
                  _
                $region60: #{forward.3} parent=50 // loop_header
                  %s278 = sphi 0, %s282
                  %p279 = scmp.ge.s32.totalorder %s278, 1
                  %s283 = sphi %s216, %s216
                  %s284 = sphi %s209, %s209
                $region61: #{forward.3} parent=50 // loop_header_branch
                  %281 = sbr.rel (%p279) target = $region65
                $region62: #{forward.3} parent=50 // loop_body
                  %v285 = vld [vmem:[%s283] sm:%s276]
                  %286 = vst [vmem:[%s284] sm:%s276] %v285
                  %v287 = vld [vmem:[%s283 + $0xc] sm:%s276]
                  %288 = vst [vmem:[%s284 + $0x4] sm:%s276] %v287
                  %v289 = vld [vmem:[%s283 + $0x18] sm:%s276]
                  %290 = vst [vmem:[%s284 + $0x8] sm:%s276] %v289
                  %v291 = vld [vmem:[%s283 + $0x24] sm:%s276]
                  %292 = vst [vmem:[%s284 + $0xc] sm:%s276] %v291
                  %v293 = vld [vmem:[%s283 + $0x30] sm:%s276]
                  %294 = vst [vmem:[%s284 + $0x10] sm:%s276] %v293
                  %v295 = vld [vmem:[%s283 + $0x3c] sm:%s276]
                  %296 = vst [vmem:[%s284 + $0x14] sm:%s276] %v295
                  %v297 = vld [vmem:[%s283 + $0x48] sm:%s276]
                  %298 = vst [vmem:[%s284 + $0x18] sm:%s276] %v297
                  %v299 = vld [vmem:[%s283 + $0x54] sm:%s276]
                  %300 = vst [vmem:[%s284 + $0x1c] sm:%s276] %v299
                  %v301 = vld [vmem:[%s283 + $0x60] sm:%s276]
                  %302 = vst [vmem:[%s284 + $0x20] sm:%s276] %v301
                  %v303 = vld [vmem:[%s283 + $0x6c] sm:%s276]
                  %304 = vst [vmem:[%s284 + $0x24] sm:%s276] %v303
                  %v305 = vld [vmem:[%s283 + $0x78] sm:%s276]
                  %306 = vst [vmem:[%s284 + $0x28] sm:%s276] %v305
                  %v307 = vld [vmem:[%s283 + $0x84] sm:%s276]
                  %308 = vst [vmem:[%s284 + $0x2c] sm:%s276] %v307
                  %v309 = vld [vmem:[%s283 + $0x90] sm:%s276]
                  %310 = vst [vmem:[%s284 + $0x30] sm:%s276] %v309
                  %v311 = vld [vmem:[%s283 + $0x9c] sm:%s276]
                  %312 = vst [vmem:[%s284 + $0x34] sm:%s276] %v311
                  %v313 = vld [vmem:[%s283 + $0xa8] sm:%s276]
                  %314 = vst [vmem:[%s284 + $0x38] sm:%s276] %v313
                  %v315 = vld [vmem:[%s283 + $0xb4] sm:%s276]
                  %316 = vst [vmem:[%s284 + $0x3c] sm:%s276] %v315
                $region63: #{forward.3} parent=50 // loop_footer
                  %s282 = sadd.s32 1, %s278
                $region64: #{forward.3} parent=50 // loop_footer_branch
                  %277 = sbr.rel target = $region60
                $region65: #{forward.3} parent=50 // loop_exit
                  _
              $region51: #{forward.3} parent=35 // pred_fallthru
                _
            $region36: #{forward.3} parent=31 // pred_fallthru
              _
            // Predicated region
            $region37: #{forward.3} parent=31 // pred_check
              _
            $region38: #{forward.3} parent=31 // pred_check_branch
              %222 = sbr.rel (0) target = $region40
            $region39: #{forward.3} parent=31 // pred_region
              %s224 = ssub.s32 16, 1
              loop: start=0, step=1, limit=1
              $region41: #{forward.3} parent=39 // loop_pre_header
                _
              $region42: #{forward.3} parent=39 // loop_header
                %s226 = sphi 0, %s230
                %p227 = scmp.ge.s32.totalorder %s226, 1
                %s231 = sphi %s216, %s216
                %s232 = sphi %s209, %s209
              $region43: #{forward.3} parent=39 // loop_header_branch
                %229 = sbr.rel (%p227) target = $region47
              $region44: #{forward.3} parent=39 // loop_body
                %v233 = vld [vmem:[%s231] sm:%s224]
                %234 = vst [vmem:[%s232] sm:%s224] %v233
                %v235 = vld [vmem:[%s231 + $0xc] sm:%s224]
                %236 = vst [vmem:[%s232 + $0x4] sm:%s224] %v235
                %v237 = vld [vmem:[%s231 + $0x18] sm:%s224]
                %238 = vst [vmem:[%s232 + $0x8] sm:%s224] %v237
                %v239 = vld [vmem:[%s231 + $0x24] sm:%s224]
                %240 = vst [vmem:[%s232 + $0xc] sm:%s224] %v239
                %v241 = vld [vmem:[%s231 + $0x30] sm:%s224]
                %242 = vst [vmem:[%s232 + $0x10] sm:%s224] %v241
                %v243 = vld [vmem:[%s231 + $0x3c] sm:%s224]
                %244 = vst [vmem:[%s232 + $0x14] sm:%s224] %v243
                %v245 = vld [vmem:[%s231 + $0x48] sm:%s224]
                %246 = vst [vmem:[%s232 + $0x18] sm:%s224] %v245
                %v247 = vld [vmem:[%s231 + $0x54] sm:%s224]
                %248 = vst [vmem:[%s232 + $0x1c] sm:%s224] %v247
                %v249 = vld [vmem:[%s231 + $0x60] sm:%s224]
                %250 = vst [vmem:[%s232 + $0x20] sm:%s224] %v249
                %v251 = vld [vmem:[%s231 + $0x6c] sm:%s224]
                %252 = vst [vmem:[%s232 + $0x24] sm:%s224] %v251
                %v253 = vld [vmem:[%s231 + $0x78] sm:%s224]
                %254 = vst [vmem:[%s232 + $0x28] sm:%s224] %v253
                %v255 = vld [vmem:[%s231 + $0x84] sm:%s224]
                %256 = vst [vmem:[%s232 + $0x2c] sm:%s224] %v255
                %v257 = vld [vmem:[%s231 + $0x90] sm:%s224]
                %258 = vst [vmem:[%s232 + $0x30] sm:%s224] %v257
                %v259 = vld [vmem:[%s231 + $0x9c] sm:%s224]
                %260 = vst [vmem:[%s232 + $0x34] sm:%s224] %v259
                %v261 = vld [vmem:[%s231 + $0xa8] sm:%s224]
                %262 = vst [vmem:[%s232 + $0x38] sm:%s224] %v261
                %v263 = vld [vmem:[%s231 + $0xb4] sm:%s224]
                %264 = vst [vmem:[%s232 + $0x3c] sm:%s224] %v263
              $region45: #{forward.3} parent=39 // loop_footer
                %s230 = sadd.s32 1, %s226
              $region46: #{forward.3} parent=39 // loop_footer_branch
                %225 = sbr.rel target = $region42
              $region47: #{forward.3} parent=39 // loop_exit
                _
            $region40: #{forward.3} parent=31 // pred_fallthru
              _
          $region32: #{forward.3} parent=27 // pred_fallthru
            _
          %317 = vnop
        $region28: #{forward.3} parent=23 // pred_fallthru
          _
        // Predicated region
        $region66: #{forward.3} parent=23 // pred_check
          %p318 = pneg %p74
        $region67: #{forward.3} parent=23 // pred_check_branch
          %320 = sbr.rel (%p318) target = $region69
        $region68: #{forward.3} parent=23 // pred_region
          %s321 = sand.u32 %s64, 1
          %s322 = sand.u32 %s64, 1
          %s323 = smul.addr %s322, 128
          %s324 = scalar_lea.vmem [#allocation3], %s323
          %s325 = smul.addr %s21, 48
          %s326 = smul.addr %s325, 4
          %s327 = scalar_lea.vmem %s1, %s326
          // Predicated region
          $region70: #{forward.3} parent=68 // pred_check
            _
          $region71: #{forward.3} parent=68 // pred_check_branch
            %329 = sbr.rel (0) target = $region73
          $region72: #{forward.3} parent=68 // pred_region
            // Predicated region
            $region74: #{forward.3} parent=72 // pred_check
              _
            $region75: #{forward.3} parent=72 // pred_check_branch
              %331 = sbr.rel (0) target = $region77
            $region76: #{forward.3} parent=72 // pred_region
              // Predicated region
              $region89: #{forward.3} parent=76 // pred_check
                _
              $region90: #{forward.3} parent=76 // pred_check_branch
                %377 = sbr.rel (0) target = $region92
              $region91: #{forward.3} parent=76 // pred_region
                loop: start=0, step=1, limit=1
                $region93: #{forward.3} parent=91 // loop_pre_header
                  _
                $region94: #{forward.3} parent=91 // loop_header
                  %s379 = sphi 0, %s383
                  %p380 = scmp.ge.s32.totalorder %s379, 1
                  %s384 = sphi %s327, %s327
                  %s385 = sphi %s324, %s324
                $region95: #{forward.3} parent=91 // loop_header_branch
                  %382 = sbr.rel (%p380) target = $region99
                $region96: #{forward.3} parent=91 // loop_body
                  %v386 = vld [vmem:[%s384] sm:$0xff]
                  %387 = vst [vmem:[%s385] sm:$0xff] %v386
                  %v388 = vld [vmem:[%s384 + $0xc] sm:$0xff]
                  %389 = vst [vmem:[%s385 + $0x8] sm:$0xff] %v388
                  %v390 = vld [vmem:[%s384 + $0x18] sm:$0xff]
                  %391 = vst [vmem:[%s385 + $0x10] sm:$0xff] %v390
                  %v392 = vld [vmem:[%s384 + $0x24] sm:$0xff]
                  %393 = vst [vmem:[%s385 + $0x18] sm:$0xff] %v392
                  %v394 = vld [vmem:[%s384 + $0x30] sm:$0xff]
                  %395 = vst [vmem:[%s385 + $0x20] sm:$0xff] %v394
                  %v396 = vld [vmem:[%s384 + $0x3c] sm:$0xff]
                  %397 = vst [vmem:[%s385 + $0x28] sm:$0xff] %v396
                  %v398 = vld [vmem:[%s384 + $0x48] sm:$0xff]
                  %399 = vst [vmem:[%s385 + $0x30] sm:$0xff] %v398
                  %v400 = vld [vmem:[%s384 + $0x54] sm:$0xff]
                  %401 = vst [vmem:[%s385 + $0x38] sm:$0xff] %v400
                  %v402 = vld [vmem:[%s384 + $0x60] sm:$0xff]
                  %403 = vst [vmem:[%s385 + $0x40] sm:$0xff] %v402
                  %v404 = vld [vmem:[%s384 + $0x6c] sm:$0xff]
                  %405 = vst [vmem:[%s385 + $0x48] sm:$0xff] %v404
                  %v406 = vld [vmem:[%s384 + $0x78] sm:$0xff]
                  %407 = vst [vmem:[%s385 + $0x50] sm:$0xff] %v406
                  %v408 = vld [vmem:[%s384 + $0x84] sm:$0xff]
                  %409 = vst [vmem:[%s385 + $0x58] sm:$0xff] %v408
                  %v410 = vld [vmem:[%s384 + $0x90] sm:$0xff]
                  %411 = vst [vmem:[%s385 + $0x60] sm:$0xff] %v410
                  %v412 = vld [vmem:[%s384 + $0x9c] sm:$0xff]
                  %413 = vst [vmem:[%s385 + $0x68] sm:$0xff] %v412
                  %v414 = vld [vmem:[%s384 + $0xa8] sm:$0xff]
                  %415 = vst [vmem:[%s385 + $0x70] sm:$0xff] %v414
                  %v416 = vld [vmem:[%s384 + $0xb4] sm:$0xff]
                  %417 = vst [vmem:[%s385 + $0x78] sm:$0xff] %v416
                $region97: #{forward.3} parent=91 // loop_footer
                  %s383 = sadd.s32 1, %s379
                $region98: #{forward.3} parent=91 // loop_footer_branch
                  %378 = sbr.rel target = $region94
                $region99: #{forward.3} parent=91 // loop_exit
                  _
              $region92: #{forward.3} parent=76 // pred_fallthru
                _
              // Predicated region
              $region100: #{forward.3} parent=76 // pred_check
                _
              $region101: #{forward.3} parent=76 // pred_check_branch
                %419 = sbr.rel target = $region103
              $region102: #{forward.3} parent=76 // pred_region
                _
              $region103: #{forward.3} parent=76 // pred_fallthru
                _
            $region77: #{forward.3} parent=72 // pred_fallthru
              _
            // Predicated region
            $region78: #{forward.3} parent=72 // pred_check
              _
            $region79: #{forward.3} parent=72 // pred_check_branch
              %333 = sbr.rel target = $region81
            $region80: #{forward.3} parent=72 // pred_region
              %s335 = ssub.s32 256, 1
              loop: start=0, step=1, limit=1
              $region82: #{forward.3} parent=80 // loop_pre_header
                _
              $region83: #{forward.3} parent=80 // loop_header
                %s337 = sphi 0, %s341
                %p338 = scmp.ge.s32.totalorder %s337, 1
                %s342 = sphi %s327, %s327
                %s343 = sphi %s324, %s324
              $region84: #{forward.3} parent=80 // loop_header_branch
                %340 = sbr.rel (%p338) target = $region88
              $region85: #{forward.3} parent=80 // loop_body
                %v344 = vld [vmem:[%s342] sm:%s335]
                %345 = vst [vmem:[%s343] sm:%s335] %v344
                %v346 = vld [vmem:[%s342 + $0xc] sm:%s335]
                %347 = vst [vmem:[%s343 + $0x8] sm:%s335] %v346
                %v348 = vld [vmem:[%s342 + $0x18] sm:%s335]
                %349 = vst [vmem:[%s343 + $0x10] sm:%s335] %v348
                %v350 = vld [vmem:[%s342 + $0x24] sm:%s335]
                %351 = vst [vmem:[%s343 + $0x18] sm:%s335] %v350
                %v352 = vld [vmem:[%s342 + $0x30] sm:%s335]
                %353 = vst [vmem:[%s343 + $0x20] sm:%s335] %v352
                %v354 = vld [vmem:[%s342 + $0x3c] sm:%s335]
                %355 = vst [vmem:[%s343 + $0x28] sm:%s335] %v354
                %v356 = vld [vmem:[%s342 + $0x48] sm:%s335]
                %357 = vst [vmem:[%s343 + $0x30] sm:%s335] %v356
                %v358 = vld [vmem:[%s342 + $0x54] sm:%s335]
                %359 = vst [vmem:[%s343 + $0x38] sm:%s335] %v358
                %v360 = vld [vmem:[%s342 + $0x60] sm:%s335]
                %361 = vst [vmem:[%s343 + $0x40] sm:%s335] %v360
                %v362 = vld [vmem:[%s342 + $0x6c] sm:%s335]
                %363 = vst [vmem:[%s343 + $0x48] sm:%s335] %v362
                %v364 = vld [vmem:[%s342 + $0x78] sm:%s335]
                %365 = vst [vmem:[%s343 + $0x50] sm:%s335] %v364
                %v366 = vld [vmem:[%s342 + $0x84] sm:%s335]
                %367 = vst [vmem:[%s343 + $0x58] sm:%s335] %v366
                %v368 = vld [vmem:[%s342 + $0x90] sm:%s335]
                %369 = vst [vmem:[%s343 + $0x60] sm:%s335] %v368
                %v370 = vld [vmem:[%s342 + $0x9c] sm:%s335]
                %371 = vst [vmem:[%s343 + $0x68] sm:%s335] %v370
                %v372 = vld [vmem:[%s342 + $0xa8] sm:%s335]
                %373 = vst [vmem:[%s343 + $0x70] sm:%s335] %v372
                %v374 = vld [vmem:[%s342 + $0xb4] sm:%s335]
                %375 = vst [vmem:[%s343 + $0x78] sm:%s335] %v374
              $region86: #{forward.3} parent=80 // loop_footer
                %s341 = sadd.s32 1, %s337
              $region87: #{forward.3} parent=80 // loop_footer_branch
                %336 = sbr.rel target = $region83
              $region88: #{forward.3} parent=80 // loop_exit
                _
            $region81: #{forward.3} parent=72 // pred_fallthru
              _
          $region73: #{forward.3} parent=68 // pred_fallthru
            _
          %420 = vnop
        $region69: #{forward.3} parent=23 // pred_fallthru
          _
        // Predicated region
        $region104: #{forward.3} parent=23 // pred_check
          %p421 = pneg %p102
        $region105: #{forward.3} parent=23 // pred_check_branch
          %423 = sbr.rel (%p421) target = $region107
        $region106: #{forward.3} parent=23 // pred_region
          %s424 = sand.u32 %s92, 1
          %s425 = sand.u32 %s92, 1
          %s426 = smul.addr %s425, 64
          %s427 = scalar_lea.vmem [#allocation4], %s426
          %s428 = smul.u32 16, %s22
          %s429 = smul.addr %s428, 3
          %s430 = sadd.s32 1, %s429
          %s431 = smul.addr %s21, 48
          %s432 = sadd.s32 %s430, %s431
          %s433 = smul.addr %s432, 4
          %s434 = scalar_lea.vmem %s2, %s433
          // Predicated region
          $region108: #{forward.3} parent=106 // pred_check
            _
          $region109: #{forward.3} parent=106 // pred_check_branch
            %436 = sbr.rel (0) target = $region111
          $region110: #{forward.3} parent=106 // pred_region
            // Predicated region
            $region112: #{forward.3} parent=110 // pred_check
              _
            $region113: #{forward.3} parent=110 // pred_check_branch
              %438 = sbr.rel target = $region115
            $region114: #{forward.3} parent=110 // pred_region
              // Predicated region
              $region127: #{forward.3} parent=114 // pred_check
                _
              $region128: #{forward.3} parent=114 // pred_check_branch
                %484 = sbr.rel (0) target = $region130
              $region129: #{forward.3} parent=114 // pred_region
                loop: start=0, step=1, limit=1
                $region131: #{forward.3} parent=129 // loop_pre_header
                  _
                $region132: #{forward.3} parent=129 // loop_header
                  %s486 = sphi 0, %s490
                  %p487 = scmp.ge.s32.totalorder %s486, 1
                  %s491 = sphi %s434, %s434
                  %s492 = sphi %s427, %s427
                $region133: #{forward.3} parent=129 // loop_header_branch
                  %489 = sbr.rel (%p487) target = $region137
                $region134: #{forward.3} parent=129 // loop_body
                  _
                $region135: #{forward.3} parent=129 // loop_footer
                  %s490 = sadd.s32 1, %s486
                $region136: #{forward.3} parent=129 // loop_footer_branch
                  %485 = sbr.rel target = $region132
                $region137: #{forward.3} parent=129 // loop_exit
                  _
                %s494 = ssub.s32 16, 1
                loop: start=0, step=1, limit=1
                $region138: #{forward.3} parent=129 // loop_pre_header
                  _
                $region139: #{forward.3} parent=129 // loop_header
                  %s496 = sphi 0, %s500
                  %p497 = scmp.ge.s32.totalorder %s496, 1
                  %s501 = sphi %s434, %s434
                  %s502 = sphi %s427, %s427
                $region140: #{forward.3} parent=129 // loop_header_branch
                  %499 = sbr.rel (%p497) target = $region144
                $region141: #{forward.3} parent=129 // loop_body
                  %v503 = vld [vmem:[%s501] sm:%s494]
                  %504 = vst [vmem:[%s502] sm:%s494] %v503
                  %v505 = vld [vmem:[%s501 + $0xc] sm:%s494]
                  %506 = vst [vmem:[%s502 + $0x4] sm:%s494] %v505
                  %v507 = vld [vmem:[%s501 + $0x18] sm:%s494]
                  %508 = vst [vmem:[%s502 + $0x8] sm:%s494] %v507
                  %v509 = vld [vmem:[%s501 + $0x24] sm:%s494]
                  %510 = vst [vmem:[%s502 + $0xc] sm:%s494] %v509
                  %v511 = vld [vmem:[%s501 + $0x30] sm:%s494]
                  %512 = vst [vmem:[%s502 + $0x10] sm:%s494] %v511
                  %v513 = vld [vmem:[%s501 + $0x3c] sm:%s494]
                  %514 = vst [vmem:[%s502 + $0x14] sm:%s494] %v513
                  %v515 = vld [vmem:[%s501 + $0x48] sm:%s494]
                  %516 = vst [vmem:[%s502 + $0x18] sm:%s494] %v515
                  %v517 = vld [vmem:[%s501 + $0x54] sm:%s494]
                  %518 = vst [vmem:[%s502 + $0x1c] sm:%s494] %v517
                  %v519 = vld [vmem:[%s501 + $0x60] sm:%s494]
                  %520 = vst [vmem:[%s502 + $0x20] sm:%s494] %v519
                  %v521 = vld [vmem:[%s501 + $0x6c] sm:%s494]
                  %522 = vst [vmem:[%s502 + $0x24] sm:%s494] %v521
                  %v523 = vld [vmem:[%s501 + $0x78] sm:%s494]
                  %524 = vst [vmem:[%s502 + $0x28] sm:%s494] %v523
                  %v525 = vld [vmem:[%s501 + $0x84] sm:%s494]
                  %526 = vst [vmem:[%s502 + $0x2c] sm:%s494] %v525
                  %v527 = vld [vmem:[%s501 + $0x90] sm:%s494]
                  %528 = vst [vmem:[%s502 + $0x30] sm:%s494] %v527
                  %v529 = vld [vmem:[%s501 + $0x9c] sm:%s494]
                  %530 = vst [vmem:[%s502 + $0x34] sm:%s494] %v529
                  %v531 = vld [vmem:[%s501 + $0xa8] sm:%s494]
                  %532 = vst [vmem:[%s502 + $0x38] sm:%s494] %v531
                  %v533 = vld [vmem:[%s501 + $0xb4] sm:%s494]
                  %534 = vst [vmem:[%s502 + $0x3c] sm:%s494] %v533
                $region142: #{forward.3} parent=129 // loop_footer
                  %s500 = sadd.s32 1, %s496
                $region143: #{forward.3} parent=129 // loop_footer_branch
                  %495 = sbr.rel target = $region139
                $region144: #{forward.3} parent=129 // loop_exit
                  _
              $region130: #{forward.3} parent=114 // pred_fallthru
                _
            $region115: #{forward.3} parent=110 // pred_fallthru
              _
            // Predicated region
            $region116: #{forward.3} parent=110 // pred_check
              _
            $region117: #{forward.3} parent=110 // pred_check_branch
              %440 = sbr.rel (0) target = $region119
            $region118: #{forward.3} parent=110 // pred_region
              %s442 = ssub.s32 16, 1
              loop: start=0, step=1, limit=1
              $region120: #{forward.3} parent=118 // loop_pre_header
                _
              $region121: #{forward.3} parent=118 // loop_header
                %s444 = sphi 0, %s448
                %p445 = scmp.ge.s32.totalorder %s444, 1
                %s449 = sphi %s434, %s434
                %s450 = sphi %s427, %s427
              $region122: #{forward.3} parent=118 // loop_header_branch
                %447 = sbr.rel (%p445) target = $region126
              $region123: #{forward.3} parent=118 // loop_body
                %v451 = vld [vmem:[%s449] sm:%s442]
                %452 = vst [vmem:[%s450] sm:%s442] %v451
                %v453 = vld [vmem:[%s449 + $0xc] sm:%s442]
                %454 = vst [vmem:[%s450 + $0x4] sm:%s442] %v453
                %v455 = vld [vmem:[%s449 + $0x18] sm:%s442]
                %456 = vst [vmem:[%s450 + $0x8] sm:%s442] %v455
                %v457 = vld [vmem:[%s449 + $0x24] sm:%s442]
                %458 = vst [vmem:[%s450 + $0xc] sm:%s442] %v457
                %v459 = vld [vmem:[%s449 + $0x30] sm:%s442]
                %460 = vst [vmem:[%s450 + $0x10] sm:%s442] %v459
                %v461 = vld [vmem:[%s449 + $0x3c] sm:%s442]
                %462 = vst [vmem:[%s450 + $0x14] sm:%s442] %v461
                %v463 = vld [vmem:[%s449 + $0x48] sm:%s442]
                %464 = vst [vmem:[%s450 + $0x18] sm:%s442] %v463
                %v465 = vld [vmem:[%s449 + $0x54] sm:%s442]
                %466 = vst [vmem:[%s450 + $0x1c] sm:%s442] %v465
                %v467 = vld [vmem:[%s449 + $0x60] sm:%s442]
                %468 = vst [vmem:[%s450 + $0x20] sm:%s442] %v467
                %v469 = vld [vmem:[%s449 + $0x6c] sm:%s442]
                %470 = vst [vmem:[%s450 + $0x24] sm:%s442] %v469
                %v471 = vld [vmem:[%s449 + $0x78] sm:%s442]
                %472 = vst [vmem:[%s450 + $0x28] sm:%s442] %v471
                %v473 = vld [vmem:[%s449 + $0x84] sm:%s442]
                %474 = vst [vmem:[%s450 + $0x2c] sm:%s442] %v473
                %v475 = vld [vmem:[%s449 + $0x90] sm:%s442]
                %476 = vst [vmem:[%s450 + $0x30] sm:%s442] %v475
                %v477 = vld [vmem:[%s449 + $0x9c] sm:%s442]
                %478 = vst [vmem:[%s450 + $0x34] sm:%s442] %v477
                %v479 = vld [vmem:[%s449 + $0xa8] sm:%s442]
                %480 = vst [vmem:[%s450 + $0x38] sm:%s442] %v479
                %v481 = vld [vmem:[%s449 + $0xb4] sm:%s442]
                %482 = vst [vmem:[%s450 + $0x3c] sm:%s442] %v481
              $region124: #{forward.3} parent=118 // loop_footer
                %s448 = sadd.s32 1, %s444
              $region125: #{forward.3} parent=118 // loop_footer_branch
                %443 = sbr.rel target = $region121
              $region126: #{forward.3} parent=118 // loop_exit
                _
            $region119: #{forward.3} parent=110 // pred_fallthru
              _
          $region111: #{forward.3} parent=106 // pred_fallthru
            _
          %535 = vnop
        $region107: #{forward.3} parent=23 // pred_fallthru
          _
      $region24: #{forward.3} parent=5 // pred_fallthru
        _
      %p536 = scmp.le.s32.totalorder 1, %s14
      %p537 = scmp.lt.s32.totalorder %s14, 3
      %p538 = pnand %p536, %p537
      %p539 = pneg %p538
      // Predicated region
      $region145: #{forward.3} parent=5 // pred_check
        _
      $region146: #{forward.3} parent=5 // pred_check_branch
        %541 = sbr.rel (%p538) target = $region148
      $region147: #{forward.3} parent=5 // pred_region
        %s542 = ssub.s32 %s14, 1
        %s543 = sand.u32 %s41, 1
        %s544 = sand.u32 %s41, 1
        %s545 = smul.addr %s544, 64
        %s546 = scalar_lea.vmem [#allocation2], %s545
        // Predicated region
        $region149: #{forward.3} parent=147 // pred_check
          %p547 = pneg %p54
        $region150: #{forward.3} parent=147 // pred_check_branch
          %549 = sbr.rel (%p547) target = $region152
        $region151: #{forward.3} parent=147 // pred_region
          _
        $region152: #{forward.3} parent=147 // pred_fallthru
          _
        %s550 = sand.u32 %s67, 1
        %s551 = sand.u32 %s67, 1
        %s552 = smul.addr %s551, 128
        %s553 = scalar_lea.vmem [#allocation3], %s552
        // Predicated region
        $region153: #{forward.3} parent=147 // pred_check
          %p554 = pneg %p80
        $region154: #{forward.3} parent=147 // pred_check_branch
          %556 = sbr.rel (%p554) target = $region156
        $region155: #{forward.3} parent=147 // pred_region
          _
        $region156: #{forward.3} parent=147 // pred_fallthru
          _
        %s557 = sand.u32 %s95, 1
        %s558 = sand.u32 %s95, 1
        %s559 = smul.addr %s558, 64
        %s560 = scalar_lea.vmem [#allocation4], %s559
        // Predicated region
        $region157: #{forward.3} parent=147 // pred_check
          %p561 = pneg %p108
        $region158: #{forward.3} parent=147 // pred_check_branch
          %563 = sbr.rel (%p561) target = $region160
        $region159: #{forward.3} parent=147 // pred_region
          _
        $region160: #{forward.3} parent=147 // pred_fallthru
          _
        %s564 = sand.u32 %s41, 1
        %s565 = sand.u32 %s41, 1
        %s566 = smul.addr %s565, 64
        %s567 = scalar_lea.vmem [#allocation2], %s566
        %p568 = pneg %p54
        %p569 = pneg %p51
        %s570 = sand.u32 %s67, 1
        %s571 = sand.u32 %s67, 1
        %s572 = smul.addr %s571, 128
        %s573 = scalar_lea.vmem [#allocation3], %s572
        %p574 = pneg %p80
        %p575 = pneg %p77
        %s576 = sand.u32 %s95, 1
        %s577 = sand.u32 %s95, 1
        %s578 = smul.addr %s577, 64
        %s579 = scalar_lea.vmem [#allocation4], %s578
        %p580 = pneg %p108
        %p581 = pneg %p105
        %p582 = pneg %p129
        %p583 = pneg %p126
        %p584 = pneg %p150
        %p585 = pneg %p147
        %p586 = pneg %p178
        %p587 = pneg %p175
        %s588 = sand.u32 %s165, 1
        %s589 = scalar_lea.sflag [#allocation6], %s588
        %s590 = sand.u32 %s165, 1
        %s591 = smul.addr %s590, 128
        %s592 = scalar_lea.vmem [#allocation5], %s591
        %s593 = smul.u32 16, %s24
        %s594 = smul.u32 16, %s24
        %s595 = smul.u32 16, %s24
        %v597 = vld [vmem:[%s546] sm:$0xf]
        %v598 = vld [vmem:[%s546 + $0x4] sm:$0xf]
        %v599 = vld [vmem:[%s546 + $0x8] sm:$0xf]
        %v600 = vld [vmem:[%s546 + $0xc] sm:$0xf]
        %v601 = vld [vmem:[%s546 + $0x10] sm:$0xf]
        %v602 = vld [vmem:[%s546 + $0x14] sm:$0xf]
        %v603 = vld [vmem:[%s546 + $0x18] sm:$0xf]
        %v604 = vld [vmem:[%s546 + $0x1c] sm:$0xf]
        %v605 = vld [vmem:[%s546 + $0x20] sm:$0xf]
        %v606 = vld [vmem:[%s546 + $0x24] sm:$0xf]
        %v607 = vld [vmem:[%s546 + $0x28] sm:$0xf]
        %v608 = vld [vmem:[%s546 + $0x2c] sm:$0xf]
        %v609 = vld [vmem:[%s546 + $0x30] sm:$0xf]
        %v610 = vld [vmem:[%s546 + $0x34] sm:$0xf]
        %v611 = vld [vmem:[%s546 + $0x38] sm:$0xf]
        %v612 = vld [vmem:[%s546 + $0x3c] sm:$0xf]
        %v613 = vld [vmem:[%s553] sm:$0xff]
        %v614 = vld [vmem:[%s553 + $0x8] sm:$0xff]
        %v615 = vld [vmem:[%s553 + $0x10] sm:$0xff]
        %v616 = vld [vmem:[%s553 + $0x18] sm:$0xff]
        %v617 = vld [vmem:[%s553 + $0x20] sm:$0xff]
        %v618 = vld [vmem:[%s553 + $0x28] sm:$0xff]
        %v619 = vld [vmem:[%s553 + $0x30] sm:$0xff]
        %v620 = vld [vmem:[%s553 + $0x38] sm:$0xff]
        %v621 = vld [vmem:[%s553 + $0x40] sm:$0xff]
        %v622 = vld [vmem:[%s553 + $0x48] sm:$0xff]
        %v623 = vld [vmem:[%s553 + $0x50] sm:$0xff]
        %v624 = vld [vmem:[%s553 + $0x58] sm:$0xff]
        %v625 = vld [vmem:[%s553 + $0x60] sm:$0xff]
        %v626 = vld [vmem:[%s553 + $0x68] sm:$0xff]
        %v627 = vld [vmem:[%s553 + $0x70] sm:$0xff]
        %v628 = vld [vmem:[%s553 + $0x78] sm:$0xff]
        %v645 = vunpack.c.l.b16 %v597
        %v646 = vunpack.c.l.b16 %v598
        %v647 = vunpack.c.l.b16 %v599
        %v648 = vunpack.c.l.b16 %v600
        %v649 = vunpack.c.l.b16 %v601
        %v650 = vunpack.c.l.b16 %v602
        %v651 = vunpack.c.l.b16 %v603
        %v652 = vunpack.c.l.b16 %v604
        %v653 = vunpack.c.l.b16 %v605
        %v654 = vunpack.c.l.b16 %v606
        %v655 = vunpack.c.l.b16 %v607
        %v656 = vunpack.c.l.b16 %v608
        %v657 = vunpack.c.l.b16 %v609
        %v658 = vunpack.c.l.b16 %v610
        %v659 = vunpack.c.l.b16 %v611
        %v660 = vunpack.c.l.b16 %v612
        %v661 = vpack.c.b16 %v646, %v645
        %v662 = vpack.c.b16 %v648, %v647
        %v663 = vpack.c.b16 %v650, %v649
        %v664 = vpack.c.b16 %v652, %v651
        %v665 = vpack.c.b16 %v654, %v653
        %v666 = vpack.c.b16 %v656, %v655
        %v667 = vpack.c.b16 %v658, %v657
        %v668 = vpack.c.b16 %v660, %v659
        %v693 = vunpack.c.l.b16 %v613
        %v694 = vunpack.c.l.b16 %v614
        %v695 = vunpack.c.l.b16 %v615
        %v696 = vunpack.c.l.b16 %v616
        %v697 = vunpack.c.l.b16 %v617
        %v698 = vunpack.c.l.b16 %v618
        %v699 = vunpack.c.l.b16 %v619
        %v700 = vunpack.c.l.b16 %v620
        %v701 = vunpack.c.l.b16 %v621
        %v702 = vunpack.c.l.b16 %v622
        %v703 = vunpack.c.l.b16 %v623
        %v704 = vunpack.c.l.b16 %v624
        %v705 = vunpack.c.l.b16 %v625
        %v706 = vunpack.c.l.b16 %v626
        %v707 = vunpack.c.l.b16 %v627
        %v708 = vunpack.c.l.b16 %v628
        %v709 = vpack.c.b16 %v694, %v693
        %v710 = vpack.c.b16 %v696, %v695
        %v711 = vpack.c.b16 %v698, %v697
        %v712 = vpack.c.b16 %v700, %v699
        %v713 = vpack.c.b16 %v702, %v701
        %v714 = vpack.c.b16 %v704, %v703
        %v715 = vpack.c.b16 %v706, %v705
        %v716 = vpack.c.b16 %v708, %v707
        %725 = vmatprep.subr.bf16.mxu0 0
        %726 = vmatpush1.bf16.xpose.msra.mxu0 %v716
        %727 = vmatprep.subr.bf16.mxu0 0
        %728 = vmatpush1.bf16.xpose.msra.mxu0 %v715
        %729 = vmatprep.subr.bf16.mxu0 0
        %730 = vmatpush1.bf16.xpose.msra.mxu0 %v714
        %731 = vmatprep.subr.bf16.mxu0 0
        %732 = vmatpush1.bf16.xpose.msra.mxu0 %v713
        %733 = vmatprep.subr.bf16.mxu0 0
        %734 = vmatpush1.bf16.xpose.msra.mxu0 %v712
        %735 = vmatprep.subr.bf16.mxu0 0
        %736 = vmatpush1.bf16.xpose.msra.mxu0 %v711
        %737 = vmatprep.subr.bf16.mxu0 0
        %738 = vmatpush1.bf16.xpose.msra.mxu0 %v710
        %739 = vmatprep.subr.bf16.mxu0 0
        %740 = vmatpush1.bf16.xpose.msra.mxu0 %v709
        %741 = vmatprep.subr.bf16.mxu0 0
        %742 = vmatpush2.bf16.xpose.msra.mxu0 0
        %743 = vmatprep.subr.bf16.mxu0 0
        %744 = vmatpush2.bf16.xpose.msra.mxu0 0
        %745 = vmatprep.subr.bf16.mxu0 0
        %746 = vmatpush2.bf16.xpose.msra.mxu0 0
        %747 = vmatprep.subr.bf16.mxu0 0
        %748 = vmatpush2.bf16.xpose.msra.mxu0 0
        %749 = vmatprep.subr.bf16.mxu0 0
        %750 = vmatpush2.bf16.xpose.msra.mxu0 0
        %751 = vmatprep.subr.bf16.mxu0 0
        %752 = vmatpush2.bf16.xpose.msra.mxu0 0
        %753 = vmatprep.subr.bf16.mxu0 0
        %754 = vmatpush2.bf16.xpose.msra.mxu0 0
        %755 = vmatprep.subr.bf16.mxu0 0
        %756 = vmatpush2.bf16.xpose.msra.mxu0 0
        %757 = vmatprep.mubr.bf16.mxu0 0
        %758 = vmatmul.mubr.bf16.gmra.mxu0 %v661
        %v759 = vpop.f32.mrf.mxu0
        %v760 = vadd.f32 0.0, %v759
        %v761 = vpop.f32.mrf.mxu0
        %v762 = vpop.f32.mrf.mxu0
        %v763 = vadd.f32 0.0, %v762
        %v764 = vpop.f32.mrf.mxu0
        %765 = vmatprep.mubr.bf16.mxu0 0
        %766 = vmatmul.mubr.bf16.gmra.mxu0 %v662
        %v767 = vpop.f32.mrf.mxu0
        %v768 = vadd.f32 0.0, %v767
        %v769 = vpop.f32.mrf.mxu0
        %v770 = vpop.f32.mrf.mxu0
        %v771 = vadd.f32 0.0, %v770
        %v772 = vpop.f32.mrf.mxu0
        %773 = vmatprep.mubr.bf16.mxu0 0
        %774 = vmatmul.mubr.bf16.gmra.mxu0 %v663
        %v775 = vpop.f32.mrf.mxu0
        %v776 = vadd.f32 0.0, %v775
        %v777 = vpop.f32.mrf.mxu0
        %v778 = vpop.f32.mrf.mxu0
        %v779 = vadd.f32 0.0, %v778
        %v780 = vpop.f32.mrf.mxu0
        %781 = vmatprep.mubr.bf16.mxu0 0
        %782 = vmatmul.mubr.bf16.gmra.mxu0 %v664
        %v783 = vpop.f32.mrf.mxu0
        %v784 = vadd.f32 0.0, %v783
        %v785 = vpop.f32.mrf.mxu0
        %v786 = vpop.f32.mrf.mxu0
        %v787 = vadd.f32 0.0, %v786
        %v788 = vpop.f32.mrf.mxu0
        %789 = vmatprep.mubr.bf16.mxu0 0
        %790 = vmatmul.mubr.bf16.gmra.mxu0 %v665
        %v791 = vpop.f32.mrf.mxu0
        %v792 = vadd.f32 0.0, %v791
        %v793 = vpop.f32.mrf.mxu0
        %v794 = vpop.f32.mrf.mxu0
        %v795 = vadd.f32 0.0, %v794
        %v796 = vpop.f32.mrf.mxu0
        %797 = vmatprep.mubr.bf16.mxu0 0
        %798 = vmatmul.mubr.bf16.gmra.mxu0 %v666
        %v799 = vpop.f32.mrf.mxu0
        %v800 = vadd.f32 0.0, %v799
        %v801 = vpop.f32.mrf.mxu0
        %v802 = vpop.f32.mrf.mxu0
        %v803 = vadd.f32 0.0, %v802
        %v804 = vpop.f32.mrf.mxu0
        %805 = vmatprep.mubr.bf16.mxu0 0
        %806 = vmatmul.mubr.bf16.gmra.mxu0 %v667
        %v807 = vpop.f32.mrf.mxu0
        %v808 = vadd.f32 0.0, %v807
        %v809 = vpop.f32.mrf.mxu0
        %v810 = vpop.f32.mrf.mxu0
        %v811 = vadd.f32 0.0, %v810
        %v812 = vpop.f32.mrf.mxu0
        %813 = vmatprep.mubr.bf16.mxu0 0
        %814 = vmatmul.mubr.bf16.gmra.mxu0 %v668
        %v815 = vpop.f32.mrf.mxu0
        %v816 = vadd.f32 0.0, %v815
        %v817 = vpop.f32.mrf.mxu0
        %v818 = vpop.f32.mrf.mxu0
        %v819 = vadd.f32 0.0, %v818
        %v820 = vpop.f32.mrf.mxu0
        %821 = vdwg.mxu0
        %822 = vmax.xlane.f32.xlu0 %v760
        %v823 = vpop.xlane.xlu0 %822
        %824 = vmax.xlane.f32.xlu0 %v763
        %v825 = vpop.xlane.xlu0 %824
        %826 = vmax.xlane.f32.xlu0 %v768
        %v827 = vpop.xlane.xlu0 %826
        %828 = vmax.xlane.f32.xlu0 %v771
        %v829 = vpop.xlane.xlu0 %828
        %830 = vmax.xlane.f32.xlu0 %v776
        %v831 = vpop.xlane.xlu0 %830
        %832 = vmax.xlane.f32.xlu0 %v779
        %v833 = vpop.xlane.xlu0 %832
        %834 = vmax.xlane.f32.xlu0 %v784
        %v835 = vpop.xlane.xlu0 %834
        %836 = vmax.xlane.f32.xlu0 %v787
        %v837 = vpop.xlane.xlu0 %836
        %838 = vmax.xlane.f32.xlu0 %v792
        %v839 = vpop.xlane.xlu0 %838
        %840 = vmax.xlane.f32.xlu0 %v795
        %v841 = vpop.xlane.xlu0 %840
        %842 = vmax.xlane.f32.xlu0 %v800
        %v843 = vpop.xlane.xlu0 %842
        %844 = vmax.xlane.f32.xlu0 %v803
        %v845 = vpop.xlane.xlu0 %844
        %846 = vmax.xlane.f32.xlu0 %v808
        %v847 = vpop.xlane.xlu0 %846
        %848 = vmax.xlane.f32.xlu0 %v811
        %v849 = vpop.xlane.xlu0 %848
        %850 = vmax.xlane.f32.xlu0 %v816
        %v851 = vpop.xlane.xlu0 %850
        %852 = vmax.xlane.f32.xlu0 %v819
        %v853 = vpop.xlane.xlu0 %852
        %v854 = vsub.f32 %v760, %v823
        %v855 = vsub.f32 %v763, %v825
        %v856 = vsub.f32 %v768, %v827
        %v857 = vsub.f32 %v771, %v829
        %v858 = vsub.f32 %v776, %v831
        %v859 = vsub.f32 %v779, %v833
        %v860 = vsub.f32 %v784, %v835
        %v861 = vsub.f32 %v787, %v837
        %v862 = vsub.f32 %v792, %v839
        %v863 = vsub.f32 %v795, %v841
        %v864 = vsub.f32 %v800, %v843
        %v865 = vsub.f32 %v803, %v845
        %v866 = vsub.f32 %v808, %v847
        %v867 = vsub.f32 %v811, %v849
        %v868 = vsub.f32 %v816, %v851
        %v869 = vsub.f32 %v819, %v853
        %v870 = vmul.f32 %v854, 1.442695
        %v871 = vpow.pop %v870
        %v872 = vmul.f32 %v855, 1.442695
        %v873 = vpow.pop %v872
        %v874 = vmul.f32 %v856, 1.442695
        %v875 = vpow.pop %v874
        %v876 = vmul.f32 %v857, 1.442695
        %v877 = vpow.pop %v876
        %v878 = vmul.f32 %v858, 1.442695
        %v879 = vpow.pop %v878
        %v880 = vmul.f32 %v859, 1.442695
        %v881 = vpow.pop %v880
        %v882 = vmul.f32 %v860, 1.442695
        %v883 = vpow.pop %v882
        %v884 = vmul.f32 %v861, 1.442695
        %v885 = vpow.pop %v884
        %v886 = vmul.f32 %v862, 1.442695
        %v887 = vpow.pop %v886
        %v888 = vmul.f32 %v863, 1.442695
        %v889 = vpow.pop %v888
        %v890 = vmul.f32 %v864, 1.442695
        %v891 = vpow.pop %v890
        %v892 = vmul.f32 %v865, 1.442695
        %v893 = vpow.pop %v892
        %v894 = vmul.f32 %v866, 1.442695
        %v895 = vpow.pop %v894
        %v896 = vmul.f32 %v867, 1.442695
        %v897 = vpow.pop %v896
        %v898 = vmul.f32 %v868, 1.442695
        %v899 = vpow.pop %v898
        %v900 = vmul.f32 %v869, 1.442695
        %v901 = vpow.pop %v900
        %902 = vadd.xlane.f32.xlu0 %v871
        %v903 = vpop.xlane.xlu0 %902
        %904 = vadd.xlane.f32.xlu0 %v873
        %v905 = vpop.xlane.xlu0 %904
        %906 = vadd.xlane.f32.xlu0 %v875
        %v907 = vpop.xlane.xlu0 %906
        %908 = vadd.xlane.f32.xlu0 %v877
        %v909 = vpop.xlane.xlu0 %908
        %910 = vadd.xlane.f32.xlu0 %v879
        %v911 = vpop.xlane.xlu0 %910
        %912 = vadd.xlane.f32.xlu0 %v881
        %v913 = vpop.xlane.xlu0 %912
        %914 = vadd.xlane.f32.xlu0 %v883
        %v915 = vpop.xlane.xlu0 %914
        %916 = vadd.xlane.f32.xlu0 %v885
        %v917 = vpop.xlane.xlu0 %916
        %918 = vadd.xlane.f32.xlu0 %v887
        %v919 = vpop.xlane.xlu0 %918
        %920 = vadd.xlane.f32.xlu0 %v889
        %v921 = vpop.xlane.xlu0 %920
        %922 = vadd.xlane.f32.xlu0 %v891
        %v923 = vpop.xlane.xlu0 %922
        %924 = vadd.xlane.f32.xlu0 %v893
        %v925 = vpop.xlane.xlu0 %924
        %926 = vadd.xlane.f32.xlu0 %v895
        %v927 = vpop.xlane.xlu0 %926
        %928 = vadd.xlane.f32.xlu0 %v897
        %v929 = vpop.xlane.xlu0 %928
        %930 = vadd.xlane.f32.xlu0 %v899
        %v931 = vpop.xlane.xlu0 %930
        %932 = vadd.xlane.f32.xlu0 %v901
        %v933 = vpop.xlane.xlu0 %932
        %v934 = vpack.c.bf16 %v873, %v871
        %v935 = vpack.c.bf16 %v877, %v875
        %v936 = vpack.c.bf16 %v881, %v879
        %v937 = vpack.c.bf16 %v885, %v883
        %v938 = vpack.c.bf16 %v889, %v887
        %v939 = vpack.c.bf16 %v893, %v891
        %v940 = vpack.c.bf16 %v897, %v895
        %v941 = vpack.c.bf16 %v901, %v899
        %v942 = vunpack.c.h.b16 %v613
        %v943 = vunpack.c.h.b16 %v614
        %v944 = vunpack.c.h.b16 %v615
        %v945 = vunpack.c.h.b16 %v616
        %v946 = vunpack.c.h.b16 %v617
        %v947 = vunpack.c.h.b16 %v618
        %v948 = vunpack.c.h.b16 %v619
        %v949 = vunpack.c.h.b16 %v620
        %v950 = vunpack.c.h.b16 %v621
        %v951 = vunpack.c.h.b16 %v622
        %v952 = vunpack.c.h.b16 %v623
        %v953 = vunpack.c.h.b16 %v624
        %v954 = vunpack.c.h.b16 %v625
        %v955 = vunpack.c.h.b16 %v626
        %v956 = vunpack.c.h.b16 %v627
        %v957 = vunpack.c.h.b16 %v628
        %v958 = vpack.c.b16 %v943, %v942
        %v959 = vpack.c.b16 %v945, %v944
        %v960 = vpack.c.b16 %v947, %v946
        %v961 = vpack.c.b16 %v949, %v948
        %v962 = vpack.c.b16 %v951, %v950
        %v963 = vpack.c.b16 %v953, %v952
        %v964 = vpack.c.b16 %v955, %v954
        %v965 = vpack.c.b16 %v957, %v956
        %974 = vmatprep.subr.bf16.mxu0 0
        %975 = vmatpush1.bf16.msra.mxu0 %v965
        %976 = vmatprep.subr.bf16.mxu0 0
        %977 = vmatpush1.bf16.msra.mxu0 %v964
        %978 = vmatprep.subr.bf16.mxu0 0
        %979 = vmatpush1.bf16.msra.mxu0 %v963
        %980 = vmatprep.subr.bf16.mxu0 0
        %981 = vmatpush1.bf16.msra.mxu0 %v962
        %982 = vmatprep.subr.bf16.mxu0 0
        %983 = vmatpush1.bf16.msra.mxu0 %v961
        %984 = vmatprep.subr.bf16.mxu0 0
        %985 = vmatpush1.bf16.msra.mxu0 %v960
        %986 = vmatprep.subr.bf16.mxu0 0
        %987 = vmatpush1.bf16.msra.mxu0 %v959
        %988 = vmatprep.subr.bf16.mxu0 0
        %989 = vmatpush1.bf16.msra.mxu0 %v958
        %990 = vmatprep.subr.bf16.mxu0 0
        %991 = vmatpush2.bf16.msra.mxu0 0
        %992 = vmatprep.subr.bf16.mxu0 0
        %993 = vmatpush2.bf16.msra.mxu0 0
        %994 = vmatprep.subr.bf16.mxu0 0
        %995 = vmatpush2.bf16.msra.mxu0 0
        %996 = vmatprep.subr.bf16.mxu0 0
        %997 = vmatpush2.bf16.msra.mxu0 0
        %998 = vmatprep.subr.bf16.mxu0 0
        %999 = vmatpush2.bf16.msra.mxu0 0
        %1000 = vmatprep.subr.bf16.mxu0 0
        %1001 = vmatpush2.bf16.msra.mxu0 0
        %1002 = vmatprep.subr.bf16.mxu0 0
        %1003 = vmatpush2.bf16.msra.mxu0 0
        %1004 = vmatprep.subr.bf16.mxu0 0
        %1005 = vmatpush2.bf16.msra.mxu0 0
        %1006 = vmatprep.mubr.bf16.mxu0 0
        %1007 = vmatmul.mubr.bf16.gmra.mxu0 %v934
        %v1008 = vpop.f32.mrf.mxu0
        %v1009 = vadd.f32 0.0, %v1008
        %v1010 = vpop.f32.mrf.mxu0
        %v1011 = vpop.f32.mrf.mxu0
        %v1012 = vadd.f32 0.0, %v1011
        %v1013 = vpop.f32.mrf.mxu0
        %1014 = vmatprep.mubr.bf16.mxu0 0
        %1015 = vmatmul.mubr.bf16.gmra.mxu0 %v935
        %v1016 = vpop.f32.mrf.mxu0
        %v1017 = vadd.f32 0.0, %v1016
        %v1018 = vpop.f32.mrf.mxu0
        %v1019 = vpop.f32.mrf.mxu0
        %v1020 = vadd.f32 0.0, %v1019
        %v1021 = vpop.f32.mrf.mxu0
        %1022 = vmatprep.mubr.bf16.mxu0 0
        %1023 = vmatmul.mubr.bf16.gmra.mxu0 %v936
        %v1024 = vpop.f32.mrf.mxu0
        %v1025 = vadd.f32 0.0, %v1024
        %v1026 = vpop.f32.mrf.mxu0
        %v1027 = vpop.f32.mrf.mxu0
        %v1028 = vadd.f32 0.0, %v1027
        %v1029 = vpop.f32.mrf.mxu0
        %1030 = vmatprep.mubr.bf16.mxu0 0
        %1031 = vmatmul.mubr.bf16.gmra.mxu0 %v937
        %v1032 = vpop.f32.mrf.mxu0
        %v1033 = vadd.f32 0.0, %v1032
        %v1034 = vpop.f32.mrf.mxu0
        %v1035 = vpop.f32.mrf.mxu0
        %v1036 = vadd.f32 0.0, %v1035
        %v1037 = vpop.f32.mrf.mxu0
        %1038 = vmatprep.mubr.bf16.mxu0 0
        %1039 = vmatmul.mubr.bf16.gmra.mxu0 %v938
        %v1040 = vpop.f32.mrf.mxu0
        %v1041 = vadd.f32 0.0, %v1040
        %v1042 = vpop.f32.mrf.mxu0
        %v1043 = vpop.f32.mrf.mxu0
        %v1044 = vadd.f32 0.0, %v1043
        %v1045 = vpop.f32.mrf.mxu0
        %1046 = vmatprep.mubr.bf16.mxu0 0
        %1047 = vmatmul.mubr.bf16.gmra.mxu0 %v939
        %v1048 = vpop.f32.mrf.mxu0
        %v1049 = vadd.f32 0.0, %v1048
        %v1050 = vpop.f32.mrf.mxu0
        %v1051 = vpop.f32.mrf.mxu0
        %v1052 = vadd.f32 0.0, %v1051
        %v1053 = vpop.f32.mrf.mxu0
        %1054 = vmatprep.mubr.bf16.mxu0 0
        %1055 = vmatmul.mubr.bf16.gmra.mxu0 %v940
        %v1056 = vpop.f32.mrf.mxu0
        %v1057 = vadd.f32 0.0, %v1056
        %v1058 = vpop.f32.mrf.mxu0
        %v1059 = vpop.f32.mrf.mxu0
        %v1060 = vadd.f32 0.0, %v1059
        %v1061 = vpop.f32.mrf.mxu0
        %1062 = vmatprep.mubr.bf16.mxu0 0
        %1063 = vmatmul.mubr.bf16.gmra.mxu0 %v941
        %v1064 = vpop.f32.mrf.mxu0
        %v1065 = vadd.f32 0.0, %v1064
        %v1066 = vpop.f32.mrf.mxu0
        %v1067 = vpop.f32.mrf.mxu0
        %v1068 = vadd.f32 0.0, %v1067
        %v1069 = vpop.f32.mrf.mxu0
        %1070 = vdwg.mxu0
        %v1071 = vrcp.pop %v903
        %v1072 = vrcp.pop %v905
        %v1073 = vrcp.pop %v907
        %v1074 = vrcp.pop %v909
        %v1075 = vrcp.pop %v911
        %v1076 = vrcp.pop %v913
        %v1077 = vrcp.pop %v915
        %v1078 = vrcp.pop %v917
        %v1079 = vrcp.pop %v919
        %v1080 = vrcp.pop %v921
        %v1081 = vrcp.pop %v923
        %v1082 = vrcp.pop %v925
        %v1083 = vrcp.pop %v927
        %v1084 = vrcp.pop %v929
        %v1085 = vrcp.pop %v931
        %v1086 = vrcp.pop %v933
        %v1087 = vmul.f32 %v1009, %v1071
        %v1088 = vmul.f32 %v1012, %v1072
        %v1089 = vmul.f32 %v1017, %v1073
        %v1090 = vmul.f32 %v1020, %v1074
        %v1091 = vmul.f32 %v1025, %v1075
        %v1092 = vmul.f32 %v1028, %v1076
        %v1093 = vmul.f32 %v1033, %v1077
        %v1094 = vmul.f32 %v1036, %v1078
        %v1095 = vmul.f32 %v1041, %v1079
        %v1096 = vmul.f32 %v1044, %v1080
        %v1097 = vmul.f32 %v1049, %v1081
        %v1098 = vmul.f32 %v1052, %v1082
        %v1099 = vmul.f32 %v1057, %v1083
        %v1100 = vmul.f32 %v1060, %v1084
        %v1101 = vmul.f32 %v1065, %v1085
        %v1102 = vmul.f32 %v1068, %v1086
        %v1103 = vpack.c.bf16 %v1088, %v1087
        %v1104 = vpack.c.bf16 %v1090, %v1089
        %v1105 = vpack.c.bf16 %v1092, %v1091
        %v1106 = vpack.c.bf16 %v1094, %v1093
        %v1107 = vpack.c.bf16 %v1096, %v1095
        %v1108 = vpack.c.bf16 %v1098, %v1097
        %v1109 = vpack.c.bf16 %v1100, %v1099
        %v1110 = vpack.c.bf16 %v1102, %v1101
        %v1111 = vld [vmem:[%s3] sm:$0xf]
        %v1112 = vld [vmem:[%s3 + $0x4] sm:$0xf]
        %v1113 = vld [vmem:[%s3 + $0x8] sm:$0xf]
        %v1114 = vld [vmem:[%s3 + $0xc] sm:$0xf]
        %v1115 = vld [vmem:[%s3 + $0x10] sm:$0xf]
        %v1116 = vld [vmem:[%s3 + $0x14] sm:$0xf]
        %v1117 = vld [vmem:[%s3 + $0x18] sm:$0xf]
        %v1118 = vld [vmem:[%s3 + $0x1c] sm:$0xf]
        %v1119 = vld [vmem:[%s3 + $0x20] sm:$0xf]
        %v1120 = vld [vmem:[%s3 + $0x24] sm:$0xf]
        %v1121 = vld [vmem:[%s3 + $0x28] sm:$0xf]
        %v1122 = vld [vmem:[%s3 + $0x2c] sm:$0xf]
        %v1123 = vld [vmem:[%s3 + $0x30] sm:$0xf]
        %v1124 = vld [vmem:[%s3 + $0x34] sm:$0xf]
        %v1125 = vld [vmem:[%s3 + $0x38] sm:$0xf]
        %v1126 = vld [vmem:[%s3 + $0x3c] sm:$0xf]
        %v1127 = vld [vmem:[%s4] sm:$0x1]
        %v1129 = vlaneseq
        %v1130 = vshrl.u32 %v1129, 7
        %v1131 = vsub.s32 0, %v1130
        %v1132 = vrot.slane %v1127, %v1131
        %v1150 = vunpack.c.l.b16 %v1111
        %v1151 = vunpack.c.l.b16 %v1112
        %v1152 = vunpack.c.l.b16 %v1113
        %v1153 = vunpack.c.l.b16 %v1114
        %v1154 = vunpack.c.l.b16 %v1115
        %v1155 = vunpack.c.l.b16 %v1116
        %v1156 = vunpack.c.l.b16 %v1117
        %v1157 = vunpack.c.l.b16 %v1118
        %v1158 = vunpack.c.l.b16 %v1119
        %v1159 = vunpack.c.l.b16 %v1120
        %v1160 = vunpack.c.l.b16 %v1121
        %v1161 = vunpack.c.l.b16 %v1122
        %v1162 = vunpack.c.l.b16 %v1123
        %v1163 = vunpack.c.l.b16 %v1124
        %v1164 = vunpack.c.l.b16 %v1125
        %v1165 = vunpack.c.l.b16 %v1126
        %v1166 = vpack.c.b16 %v1151, %v1150
        %v1167 = vpack.c.b16 %v1153, %v1152
        %v1168 = vpack.c.b16 %v1155, %v1154
        %v1169 = vpack.c.b16 %v1157, %v1156
        %v1170 = vpack.c.b16 %v1159, %v1158
        %v1171 = vpack.c.b16 %v1161, %v1160
        %v1172 = vpack.c.b16 %v1163, %v1162
        %v1173 = vpack.c.b16 %v1165, %v1164
        %1182 = vmatprep.subr.bf16.mxu0 0
        %1183 = vmatpush1.bf16.msra.mxu0 %v1173
        %1184 = vmatprep.subr.bf16.mxu0 0
        %1185 = vmatpush1.bf16.msra.mxu0 %v1172
        %1186 = vmatprep.subr.bf16.mxu0 0
        %1187 = vmatpush1.bf16.msra.mxu0 %v1171
        %1188 = vmatprep.subr.bf16.mxu0 0
        %1189 = vmatpush1.bf16.msra.mxu0 %v1170
        %1190 = vmatprep.subr.bf16.mxu0 0
        %1191 = vmatpush1.bf16.msra.mxu0 %v1169
        %1192 = vmatprep.subr.bf16.mxu0 0
        %1193 = vmatpush1.bf16.msra.mxu0 %v1168
        %1194 = vmatprep.subr.bf16.mxu0 0
        %1195 = vmatpush1.bf16.msra.mxu0 %v1167
        %1196 = vmatprep.subr.bf16.mxu0 0
        %1197 = vmatpush1.bf16.msra.mxu0 %v1166
        %1198 = vmatprep.subr.bf16.mxu0 0
        %1199 = vmatpush2.bf16.msra.mxu0 0
        %1200 = vmatprep.subr.bf16.mxu0 0
        %1201 = vmatpush2.bf16.msra.mxu0 0
        %1202 = vmatprep.subr.bf16.mxu0 0
        %1203 = vmatpush2.bf16.msra.mxu0 0
        %1204 = vmatprep.subr.bf16.mxu0 0
        %1205 = vmatpush2.bf16.msra.mxu0 0
        %1206 = vmatprep.subr.bf16.mxu0 0
        %1207 = vmatpush2.bf16.msra.mxu0 0
        %1208 = vmatprep.subr.bf16.mxu0 0
        %1209 = vmatpush2.bf16.msra.mxu0 0
        %1210 = vmatprep.subr.bf16.mxu0 0
        %1211 = vmatpush2.bf16.msra.mxu0 0
        %1212 = vmatprep.subr.bf16.mxu0 0
        %1213 = vmatpush2.bf16.msra.mxu0 0
        %1214 = vmatprep.mubr.bf16.mxu0 0
        %1215 = vmatmul.mubr.bf16.gmra.mxu0 %v1103
        %v1216 = vpop.f32.mrf.mxu0
        %v1217 = vadd.f32 %v1132, %v1216
        %v1218 = vpop.f32.mrf.mxu0
        %v1219 = vpop.f32.mrf.mxu0
        %v1220 = vadd.f32 %v1132, %v1219
        %v1221 = vpop.f32.mrf.mxu0
        %1222 = vmatprep.mubr.bf16.mxu0 0
        %1223 = vmatmul.mubr.bf16.gmra.mxu0 %v1104
        %v1224 = vpop.f32.mrf.mxu0
        %v1225 = vadd.f32 %v1132, %v1224
        %v1226 = vpop.f32.mrf.mxu0
        %v1227 = vpop.f32.mrf.mxu0
        %v1228 = vadd.f32 %v1132, %v1227
        %v1229 = vpop.f32.mrf.mxu0
        %1230 = vmatprep.mubr.bf16.mxu0 0
        %1231 = vmatmul.mubr.bf16.gmra.mxu0 %v1105
        %v1232 = vpop.f32.mrf.mxu0
        %v1233 = vadd.f32 %v1132, %v1232
        %v1234 = vpop.f32.mrf.mxu0
        %v1235 = vpop.f32.mrf.mxu0
        %v1236 = vadd.f32 %v1132, %v1235
        %v1237 = vpop.f32.mrf.mxu0
        %1238 = vmatprep.mubr.bf16.mxu0 0
        %1239 = vmatmul.mubr.bf16.gmra.mxu0 %v1106
        %v1240 = vpop.f32.mrf.mxu0
        %v1241 = vadd.f32 %v1132, %v1240
        %v1242 = vpop.f32.mrf.mxu0
        %v1243 = vpop.f32.mrf.mxu0
        %v1244 = vadd.f32 %v1132, %v1243
        %v1245 = vpop.f32.mrf.mxu0
        %1246 = vmatprep.mubr.bf16.mxu0 0
        %1247 = vmatmul.mubr.bf16.gmra.mxu0 %v1107
        %v1248 = vpop.f32.mrf.mxu0
        %v1249 = vadd.f32 %v1132, %v1248
        %v1250 = vpop.f32.mrf.mxu0
        %v1251 = vpop.f32.mrf.mxu0
        %v1252 = vadd.f32 %v1132, %v1251
        %v1253 = vpop.f32.mrf.mxu0
        %1254 = vmatprep.mubr.bf16.mxu0 0
        %1255 = vmatmul.mubr.bf16.gmra.mxu0 %v1108
        %v1256 = vpop.f32.mrf.mxu0
        %v1257 = vadd.f32 %v1132, %v1256
        %v1258 = vpop.f32.mrf.mxu0
        %v1259 = vpop.f32.mrf.mxu0
        %v1260 = vadd.f32 %v1132, %v1259
        %v1261 = vpop.f32.mrf.mxu0
        %1262 = vmatprep.mubr.bf16.mxu0 0
        %1263 = vmatmul.mubr.bf16.gmra.mxu0 %v1109
        %v1264 = vpop.f32.mrf.mxu0
        %v1265 = vadd.f32 %v1132, %v1264
        %v1266 = vpop.f32.mrf.mxu0
        %v1267 = vpop.f32.mrf.mxu0
        %v1268 = vadd.f32 %v1132, %v1267
        %v1269 = vpop.f32.mrf.mxu0
        %1270 = vmatprep.mubr.bf16.mxu0 0
        %1271 = vmatmul.mubr.bf16.gmra.mxu0 %v1110
        %v1272 = vpop.f32.mrf.mxu0
        %v1273 = vadd.f32 %v1132, %v1272
        %v1274 = vpop.f32.mrf.mxu0
        %v1275 = vpop.f32.mrf.mxu0
        %v1276 = vadd.f32 %v1132, %v1275
        %v1277 = vpop.f32.mrf.mxu0
        %1278 = vdwg.mxu0
        %v1279 = vld [vmem:[%s560] sm:$0xf]
        %v1280 = vld [vmem:[%s560 + $0x4] sm:$0xf]
        %v1281 = vld [vmem:[%s560 + $0x8] sm:$0xf]
        %v1282 = vld [vmem:[%s560 + $0xc] sm:$0xf]
        %v1283 = vld [vmem:[%s560 + $0x10] sm:$0xf]
        %v1284 = vld [vmem:[%s560 + $0x14] sm:$0xf]
        %v1285 = vld [vmem:[%s560 + $0x18] sm:$0xf]
        %v1286 = vld [vmem:[%s560 + $0x1c] sm:$0xf]
        %v1287 = vld [vmem:[%s560 + $0x20] sm:$0xf]
        %v1288 = vld [vmem:[%s560 + $0x24] sm:$0xf]
        %v1289 = vld [vmem:[%s560 + $0x28] sm:$0xf]
        %v1290 = vld [vmem:[%s560 + $0x2c] sm:$0xf]
        %v1291 = vld [vmem:[%s560 + $0x30] sm:$0xf]
        %v1292 = vld [vmem:[%s560 + $0x34] sm:$0xf]
        %v1293 = vld [vmem:[%s560 + $0x38] sm:$0xf]
        %v1294 = vld [vmem:[%s560 + $0x3c] sm:$0xf]
        %v1295 = vunpack.c.l.bf16 %v1279
        %v1296 = vunpack.c.l.bf16 %v1280
        %v1297 = vunpack.c.l.bf16 %v1281
        %v1298 = vunpack.c.l.bf16 %v1282
        %v1299 = vunpack.c.l.bf16 %v1283
        %v1300 = vunpack.c.l.bf16 %v1284
        %v1301 = vunpack.c.l.bf16 %v1285
        %v1302 = vunpack.c.l.bf16 %v1286
        %v1303 = vunpack.c.l.bf16 %v1287
        %v1304 = vunpack.c.l.bf16 %v1288
        %v1305 = vunpack.c.l.bf16 %v1289
        %v1306 = vunpack.c.l.bf16 %v1290
        %v1307 = vunpack.c.l.bf16 %v1291
        %v1308 = vunpack.c.l.bf16 %v1292
        %v1309 = vunpack.c.l.bf16 %v1293
        %v1310 = vunpack.c.l.bf16 %v1294
        %v1311 = vadd.f32 %v1217, %v1295
        %v1312 = vadd.f32 %v1220, %v1296
        %v1313 = vadd.f32 %v1225, %v1297
        %v1314 = vadd.f32 %v1228, %v1298
        %v1315 = vadd.f32 %v1233, %v1299
        %v1316 = vadd.f32 %v1236, %v1300
        %v1317 = vadd.f32 %v1241, %v1301
        %v1318 = vadd.f32 %v1244, %v1302
        %v1319 = vadd.f32 %v1249, %v1303
        %v1320 = vadd.f32 %v1252, %v1304
        %v1321 = vadd.f32 %v1257, %v1305
        %v1322 = vadd.f32 %v1260, %v1306
        %v1323 = vadd.f32 %v1265, %v1307
        %v1324 = vadd.f32 %v1268, %v1308
        %v1325 = vadd.f32 %v1273, %v1309
        %v1326 = vadd.f32 %v1276, %v1310
        %1327 = vst [vmem:[%s592] sm:$0xff] %v1311
        %1328 = vst [vmem:[%s592 + $0x8] sm:$0xff] %v1312
        %1329 = vst [vmem:[%s592 + $0x10] sm:$0xff] %v1313
        %1330 = vst [vmem:[%s592 + $0x18] sm:$0xff] %v1314
        %1331 = vst [vmem:[%s592 + $0x20] sm:$0xff] %v1315
        %1332 = vst [vmem:[%s592 + $0x28] sm:$0xff] %v1316
        %1333 = vst [vmem:[%s592 + $0x30] sm:$0xff] %v1317
        %1334 = vst [vmem:[%s592 + $0x38] sm:$0xff] %v1318
        %1335 = vst [vmem:[%s592 + $0x40] sm:$0xff] %v1319
        %1336 = vst [vmem:[%s592 + $0x48] sm:$0xff] %v1320
        %1337 = vst [vmem:[%s592 + $0x50] sm:$0xff] %v1321
        %1338 = vst [vmem:[%s592 + $0x58] sm:$0xff] %v1322
        %1339 = vst [vmem:[%s592 + $0x60] sm:$0xff] %v1323
        %1340 = vst [vmem:[%s592 + $0x68] sm:$0xff] %v1324
        %1341 = vst [vmem:[%s592 + $0x70] sm:$0xff] %v1325
        %1342 = vst [vmem:[%s592 + $0x78] sm:$0xff] %v1326
        %s1343 = sand.u32 %s165, 1
        %s1344 = scalar_lea.sflag [#allocation6], %s1343
        %s1345 = sand.u32 %s165, 1
        %s1346 = smul.addr %s1345, 128
        %s1347 = scalar_lea.vmem [#allocation5], %s1346
        // Predicated region
        $region161: #{forward.3} parent=147 // pred_check
          %p1348 = pneg %p175
        $region162: #{forward.3} parent=147 // pred_check_branch
          %1350 = sbr.rel (%p1348) target = $region164
        $region163: #{forward.3} parent=147 // pred_region
          %s1351 = smul.u32 16, %s24
          %s1353 = ssub.s32 2048, 2048
          %1354 = vsyncadd %s1344, %s1353
          %s1355 = smul.addr %s23, 16
          %s1356 = sadd.s32 %s1351, %s1355
          %s1357 = smul.addr %s1356, 128
          %s1358 = scalar_lea.hbm %s5, %s1357
          %s1359 = sshll.u32 %s1347, 4
          %s1360 = int_to_ptr.vmem [resolvable:$true] %s1359
          %1365 = dma.vmem_to_hbm [thread:$0]  %s1360, 2048, %s1358, %s1344, 128, 128, 8
        $region164: #{forward.3} parent=147 // pred_fallthru
          _
      $region148: #{forward.3} parent=5 // pred_fallthru
        _
      %p1366 = scmp.le.s32.totalorder 2, %s14
      // Predicated region
      $region165: #{forward.3} parent=5 // pred_check
        %p1367 = pneg %p1366
      $region166: #{forward.3} parent=5 // pred_check_branch
        %1369 = sbr.rel (%p1367) target = $region168
      $region167: #{forward.3} parent=5 // pred_region
        %s1370 = ssub.s32 %s14, 2
        // Predicated region
        $region169: #{forward.3} parent=167 // pred_check
          %p1371 = pneg %p181
        $region170: #{forward.3} parent=167 // pred_check_branch
          %1373 = sbr.rel (%p1371) target = $region172
        $region171: #{forward.3} parent=167 // pred_region
          %s1374 = sand.u32 %s166, 1
          %s1375 = scalar_lea.sflag [#allocation6], %s1374
          %s1376 = sand.u32 %s166, 1
          %s1377 = smul.addr %s1376, 128
          %s1378 = scalar_lea.vmem [#allocation5], %s1377
          %1379 = dma.done %s1375, 2048
        $region172: #{forward.3} parent=167 // pred_fallthru
          _
      $region168: #{forward.3} parent=5 // pred_fallthru
        _
    $region6: #{forward.3} parent=1 // loop_footer
      %s18 = sadd.s32 1, %s14
    $region7: #{forward.3} parent=1 // loop_footer_branch
      %13 = sbr.rel target = $region3
    $region8: #{forward.3} parent=1 // loop_exit
      _
    %1380 = vsyncpa [#allocation6], 1
    %s1381 = scalar_lea.sflag [#allocation6], 1
    %1382 = vsyncpa %s1381, 1

// kernel: forward.2
$region0: #{forward.2}
  #allocation0 [shape = 'u32[]', space=smem, size = 0x4, offset = 0x4, fixed_abs, tag = 'smem constant byte address 0x4 - core index']
  #allocation1 [shape = 'u32[144,128]{1,0:T(1,128)}', space=vmem, size = 0x12000, scoped, tag = 'internal scratch']
  #allocation2 [shape = 'f32[256,384]{1,0:T(8,128)}', space=vmem, size = 0x60000, scoped, tag = 'scratch operand']
  %s0 = inlined_call_operand.hbm [shape: f32[256,128], index: 0, kind: input, shape index: {}]
  %s1 = inlined_call_operand.hbm [shape: bf16[128,384], index: 1, kind: input, shape index: {}]
  %s2 = inlined_call_operand.vmem [shape: bf16[256,384], index: 2, kind: output, shape index: {}]
  %s3 = sld [smem:[#allocation0]]
  $region34: #{forward.2} parent=0
    _
  %s5 = ssub.s32 1, %s3
  %s6 = scalar_select 0, %s5, %s3
  $region1: #{forward.2} parent=0
    #allocation3 [shape = 'u8[131072]{0}', space=vmem, size = 0x20000, scoped, tag = 'input window, operand 0, single buffered']
    #allocation4 [shape = 's32[1]{0}', space=sflag, size = 0x4, scoped, tag = 'scoped memory for forward.2']
    #allocation5 [shape = 'u8[98304]{0}', space=vmem, size = 0x18000, scoped, tag = 'input window, operand 1, single buffered']
    #allocation6 [shape = 's32[1]{0}', space=sflag, size = 0x4, scoped, tag = 'scoped memory for forward.2']
    %7 = vsyncpa [#allocation4], 0
    %8 = vsyncpa [#allocation6], 0
    // Predicated region
    $region2: #{forward.2} parent=1 // pred_check
      _
    $region3: #{forward.2} parent=1 // pred_check_branch
      %10 = sbr.rel (0) target = $region5
    $region4: #{forward.2} parent=1 // pred_region
      %s12 = ssub.s32 4096, 4096
      %13 = vsyncadd [#allocation4], %s12
      %s14 = sshll.u32 [#allocation3], 4
      %s15 = int_to_ptr.vmem [resolvable:$true] %s14
      %20 = dma.hbm_to_vmem [thread:$0]  %s0, 4096, %s15, [#allocation4], 128, 128, 8
    $region5: #{forward.2} parent=1 // pred_fallthru
      _
    // Predicated region
    $region6: #{forward.2} parent=1 // pred_check
      _
    $region7: #{forward.2} parent=1 // pred_check_branch
      %22 = sbr.rel (0) target = $region9
    $region8: #{forward.2} parent=1 // pred_region
      %s24 = ssub.s32 3072, 3072
      %25 = vsyncadd [#allocation6], %s24
      %s26 = sshll.u32 [#allocation5], 4
      %s27 = int_to_ptr.vmem [resolvable:$true] %s26
      %32 = dma.hbm_to_vmem [thread:$0]  %s1, 3072, %s27, [#allocation6], 192, 192, 12
    $region9: #{forward.2} parent=1 // pred_fallthru
      _
    // Predicated region
    $region10: #{forward.2} parent=1 // pred_check
      _
    $region11: #{forward.2} parent=1 // pred_check_branch
      %34 = sbr.rel (0) target = $region13
    $region12: #{forward.2} parent=1 // pred_region
      %35 = dma.done [#allocation4], 4096
    $region13: #{forward.2} parent=1 // pred_fallthru
      _
    // Predicated region
    $region14: #{forward.2} parent=1 // pred_check
      _
    $region15: #{forward.2} parent=1 // pred_check_branch
      %37 = sbr.rel (0) target = $region17
    $region16: #{forward.2} parent=1 // pred_region
      %38 = dma.done [#allocation6], 3072
    $region17: #{forward.2} parent=1 // pred_fallthru
      _
    %p40 = scmp.eq.s32.totalorder 0, 0
    // Predicated region
    $region18: #{forward.2} parent=1 // pred_check
      %p41 = pneg %p40
    $region19: #{forward.2} parent=1 // pred_check_branch
      %43 = sbr.rel (%p41) target = $region21
    $region20: #{forward.2} parent=1 // pred_region
      %44 = vst [vmem:[#allocation2] sm:$0xff] 0.0
      %45 = vst [vmem:[#allocation2 + $0x8] sm:$0xff] 0.0
      %46 = vst [vmem:[#allocation2 + $0x10] sm:$0xff] 0.0
      %47 = vst [vmem:[#allocation2 + $0x18] sm:$0xff] 0.0
      %48 = vst [vmem:[#allocation2 + $0x20] sm:$0xff] 0.0
      %49 = vst [vmem:[#allocation2 + $0x28] sm:$0xff] 0.0
      %50 = vst [vmem:[#allocation2 + $0x30] sm:$0xff] 0.0
      %51 = vst [vmem:[#allocation2 + $0x38] sm:$0xff] 0.0
      %52 = vst [vmem:[#allocation2 + $0x40] sm:$0xff] 0.0
      %53 = vst [vmem:[#allocation2 + $0x48] sm:$0xff] 0.0
      %54 = vst [vmem:[#allocation2 + $0x50] sm:$0xff] 0.0
      %55 = vst [vmem:[#allocation2 + $0x58] sm:$0xff] 0.0
      %56 = vst [vmem:[#allocation2 + $0x60] sm:$0xff] 0.0
      %57 = vst [vmem:[#allocation2 + $0x68] sm:$0xff] 0.0
      %58 = vst [vmem:[#allocation2 + $0x70] sm:$0xff] 0.0
      %59 = vst [vmem:[#allocation2 + $0x78] sm:$0xff] 0.0
      %60 = vst [vmem:[#allocation2 + $0x80] sm:$0xff] 0.0
      %61 = vst [vmem:[#allocation2 + $0x88] sm:$0xff] 0.0
      %62 = vst [vmem:[#allocation2 + $0x90] sm:$0xff] 0.0
      %63 = vst [vmem:[#allocation2 + $0x98] sm:$0xff] 0.0
      %64 = vst [vmem:[#allocation2 + $0xa0] sm:$0xff] 0.0
      %65 = vst [vmem:[#allocation2 + $0xa8] sm:$0xff] 0.0
      %66 = vst [vmem:[#allocation2 + $0xb0] sm:$0xff] 0.0
      %67 = vst [vmem:[#allocation2 + $0xb8] sm:$0xff] 0.0
      %68 = vst [vmem:[#allocation2 + $0xc0] sm:$0xff] 0.0
      %69 = vst [vmem:[#allocation2 + $0xc8] sm:$0xff] 0.0
      %70 = vst [vmem:[#allocation2 + $0xd0] sm:$0xff] 0.0
      %71 = vst [vmem:[#allocation2 + $0xd8] sm:$0xff] 0.0
      %72 = vst [vmem:[#allocation2 + $0xe0] sm:$0xff] 0.0
      %73 = vst [vmem:[#allocation2 + $0xe8] sm:$0xff] 0.0
      %74 = vst [vmem:[#allocation2 + $0xf0] sm:$0xff] 0.0
      %75 = vst [vmem:[#allocation2 + $0xf8] sm:$0xff] 0.0
      %76 = vst [vmem:[#allocation2 + $0x100] sm:$0xff] 0.0
      %77 = vst [vmem:[#allocation2 + $0x108] sm:$0xff] 0.0
      %78 = vst [vmem:[#allocation2 + $0x110] sm:$0xff] 0.0
      %79 = vst [vmem:[#allocation2 + $0x118] sm:$0xff] 0.0
      %80 = vst [vmem:[#allocation2 + $0x120] sm:$0xff] 0.0
      %81 = vst [vmem:[#allocation2 + $0x128] sm:$0xff] 0.0
      %82 = vst [vmem:[#allocation2 + $0x130] sm:$0xff] 0.0
      %83 = vst [vmem:[#allocation2 + $0x138] sm:$0xff] 0.0
      %84 = vst [vmem:[#allocation2 + $0x140] sm:$0xff] 0.0
      %85 = vst [vmem:[#allocation2 + $0x148] sm:$0xff] 0.0
      %86 = vst [vmem:[#allocation2 + $0x150] sm:$0xff] 0.0
      %87 = vst [vmem:[#allocation2 + $0x158] sm:$0xff] 0.0
      %88 = vst [vmem:[#allocation2 + $0x160] sm:$0xff] 0.0
      %89 = vst [vmem:[#allocation2 + $0x168] sm:$0xff] 0.0
      %90 = vst [vmem:[#allocation2 + $0x170] sm:$0xff] 0.0
      %91 = vst [vmem:[#allocation2 + $0x178] sm:$0xff] 0.0
      %92 = vst [vmem:[#allocation2 + $0x180] sm:$0xff] 0.0
      %93 = vst [vmem:[#allocation2 + $0x188] sm:$0xff] 0.0
      %94 = vst [vmem:[#allocation2 + $0x190] sm:$0xff] 0.0
      %95 = vst [vmem:[#allocation2 + $0x198] sm:$0xff] 0.0
      %96 = vst [vmem:[#allocation2 + $0x1a0] sm:$0xff] 0.0
      %97 = vst [vmem:[#allocation2 + $0x1a8] sm:$0xff] 0.0
      %98 = vst [vmem:[#allocation2 + $0x1b0] sm:$0xff] 0.0
      %99 = vst [vmem:[#allocation2 + $0x1b8] sm:$0xff] 0.0
      %100 = vst [vmem:[#allocation2 + $0x1c0] sm:$0xff] 0.0
      %101 = vst [vmem:[#allocation2 + $0x1c8] sm:$0xff] 0.0
      %102 = vst [vmem:[#allocation2 + $0x1d0] sm:$0xff] 0.0
      %103 = vst [vmem:[#allocation2 + $0x1d8] sm:$0xff] 0.0
      %104 = vst [vmem:[#allocation2 + $0x1e0] sm:$0xff] 0.0
      %105 = vst [vmem:[#allocation2 + $0x1e8] sm:$0xff] 0.0
      %106 = vst [vmem:[#allocation2 + $0x1f0] sm:$0xff] 0.0
      %107 = vst [vmem:[#allocation2 + $0x1f8] sm:$0xff] 0.0
      %108 = vst [vmem:[#allocation2 + $0x200] sm:$0xff] 0.0
      %109 = vst [vmem:[#allocation2 + $0x208] sm:$0xff] 0.0
      %110 = vst [vmem:[#allocation2 + $0x210] sm:$0xff] 0.0
      %111 = vst [vmem:[#allocation2 + $0x218] sm:$0xff] 0.0
      %112 = vst [vmem:[#allocation2 + $0x220] sm:$0xff] 0.0
      %113 = vst [vmem:[#allocation2 + $0x228] sm:$0xff] 0.0
      %114 = vst [vmem:[#allocation2 + $0x230] sm:$0xff] 0.0
      %115 = vst [vmem:[#allocation2 + $0x238] sm:$0xff] 0.0
      %116 = vst [vmem:[#allocation2 + $0x240] sm:$0xff] 0.0
      %117 = vst [vmem:[#allocation2 + $0x248] sm:$0xff] 0.0
      %118 = vst [vmem:[#allocation2 + $0x250] sm:$0xff] 0.0
      %119 = vst [vmem:[#allocation2 + $0x258] sm:$0xff] 0.0
      %120 = vst [vmem:[#allocation2 + $0x260] sm:$0xff] 0.0
      %121 = vst [vmem:[#allocation2 + $0x268] sm:$0xff] 0.0
      %122 = vst [vmem:[#allocation2 + $0x270] sm:$0xff] 0.0
      %123 = vst [vmem:[#allocation2 + $0x278] sm:$0xff] 0.0
      %124 = vst [vmem:[#allocation2 + $0x280] sm:$0xff] 0.0
      %125 = vst [vmem:[#allocation2 + $0x288] sm:$0xff] 0.0
      %126 = vst [vmem:[#allocation2 + $0x290] sm:$0xff] 0.0
      %127 = vst [vmem:[#allocation2 + $0x298] sm:$0xff] 0.0
      %128 = vst [vmem:[#allocation2 + $0x2a0] sm:$0xff] 0.0
      %129 = vst [vmem:[#allocation2 + $0x2a8] sm:$0xff] 0.0
      %130 = vst [vmem:[#allocation2 + $0x2b0] sm:$0xff] 0.0
      %131 = vst [vmem:[#allocation2 + $0x2b8] sm:$0xff] 0.0
      %132 = vst [vmem:[#allocation2 + $0x2c0] sm:$0xff] 0.0
      %133 = vst [vmem:[#allocation2 + $0x2c8] sm:$0xff] 0.0
      %134 = vst [vmem:[#allocation2 + $0x2d0] sm:$0xff] 0.0
      %135 = vst [vmem:[#allocation2 + $0x2d8] sm:$0xff] 0.0
      %136 = vst [vmem:[#allocation2 + $0x2e0] sm:$0xff] 0.0
      %137 = vst [vmem:[#allocation2 + $0x2e8] sm:$0xff] 0.0
      %138 = vst [vmem:[#allocation2 + $0x2f0] sm:$0xff] 0.0
      %139 = vst [vmem:[#allocation2 + $0x2f8] sm:$0xff] 0.0
    $region21: #{forward.2} parent=1 // pred_fallthru
      _
    %v140 = vld [vmem:[#allocation2] sm:$0xff]
    %v141 = vld [vmem:[#allocation2 + $0x8] sm:$0xff]
    %v142 = vld [vmem:[#allocation2 + $0x10] sm:$0xff]
    %v143 = vld [vmem:[#allocation2 + $0x18] sm:$0xff]
    %v144 = vld [vmem:[#allocation2 + $0x20] sm:$0xff]
    %v145 = vld [vmem:[#allocation2 + $0x28] sm:$0xff]
    %v146 = vld [vmem:[#allocation2 + $0x30] sm:$0xff]
    %v147 = vld [vmem:[#allocation2 + $0x38] sm:$0xff]
    %v148 = vld [vmem:[#allocation2 + $0x40] sm:$0xff]
    %v149 = vld [vmem:[#allocation2 + $0x48] sm:$0xff]
    %v150 = vld [vmem:[#allocation2 + $0x50] sm:$0xff]
    %v151 = vld [vmem:[#allocation2 + $0x58] sm:$0xff]
    %v152 = vld [vmem:[#allocation2 + $0x60] sm:$0xff]
    %v153 = vld [vmem:[#allocation2 + $0x68] sm:$0xff]
    %v154 = vld [vmem:[#allocation2 + $0x70] sm:$0xff]
    %v155 = vld [vmem:[#allocation2 + $0x78] sm:$0xff]
    %v156 = vld [vmem:[#allocation2 + $0x80] sm:$0xff]
    %v157 = vld [vmem:[#allocation2 + $0x88] sm:$0xff]
    %v158 = vld [vmem:[#allocation2 + $0x90] sm:$0xff]
    %v159 = vld [vmem:[#allocation2 + $0x98] sm:$0xff]
    %v160 = vld [vmem:[#allocation2 + $0xa0] sm:$0xff]
    %v161 = vld [vmem:[#allocation2 + $0xa8] sm:$0xff]
    %v162 = vld [vmem:[#allocation2 + $0xb0] sm:$0xff]
    %v163 = vld [vmem:[#allocation2 + $0xb8] sm:$0xff]
    %v164 = vld [vmem:[#allocation2 + $0xc0] sm:$0xff]
    %v165 = vld [vmem:[#allocation2 + $0xc8] sm:$0xff]
    %v166 = vld [vmem:[#allocation2 + $0xd0] sm:$0xff]
    %v167 = vld [vmem:[#allocation2 + $0xd8] sm:$0xff]
    %v168 = vld [vmem:[#allocation2 + $0xe0] sm:$0xff]
    %v169 = vld [vmem:[#allocation2 + $0xe8] sm:$0xff]
    %v170 = vld [vmem:[#allocation2 + $0xf0] sm:$0xff]
    %v171 = vld [vmem:[#allocation2 + $0xf8] sm:$0xff]
    %v172 = vld [vmem:[#allocation2 + $0x100] sm:$0xff]
    %v173 = vld [vmem:[#allocation2 + $0x108] sm:$0xff]
    %v174 = vld [vmem:[#allocation2 + $0x110] sm:$0xff]
    %v175 = vld [vmem:[#allocation2 + $0x118] sm:$0xff]
    %v176 = vld [vmem:[#allocation2 + $0x120] sm:$0xff]
    %v177 = vld [vmem:[#allocation2 + $0x128] sm:$0xff]
    %v178 = vld [vmem:[#allocation2 + $0x130] sm:$0xff]
    %v179 = vld [vmem:[#allocation2 + $0x138] sm:$0xff]
    %v180 = vld [vmem:[#allocation2 + $0x140] sm:$0xff]
    %v181 = vld [vmem:[#allocation2 + $0x148] sm:$0xff]
    %v182 = vld [vmem:[#allocation2 + $0x150] sm:$0xff]
    %v183 = vld [vmem:[#allocation2 + $0x158] sm:$0xff]
    %v184 = vld [vmem:[#allocation2 + $0x160] sm:$0xff]
    %v185 = vld [vmem:[#allocation2 + $0x168] sm:$0xff]
    %v186 = vld [vmem:[#allocation2 + $0x170] sm:$0xff]
    %v187 = vld [vmem:[#allocation2 + $0x178] sm:$0xff]
    %v188 = vld [vmem:[#allocation2 + $0x180] sm:$0xff]
    %v189 = vld [vmem:[#allocation2 + $0x188] sm:$0xff]
    %v190 = vld [vmem:[#allocation2 + $0x190] sm:$0xff]
    %v191 = vld [vmem:[#allocation2 + $0x198] sm:$0xff]
    %v192 = vld [vmem:[#allocation2 + $0x1a0] sm:$0xff]
    %v193 = vld [vmem:[#allocation2 + $0x1a8] sm:$0xff]
    %v194 = vld [vmem:[#allocation2 + $0x1b0] sm:$0xff]
    %v195 = vld [vmem:[#allocation2 + $0x1b8] sm:$0xff]
    %v196 = vld [vmem:[#allocation2 + $0x1c0] sm:$0xff]
    %v197 = vld [vmem:[#allocation2 + $0x1c8] sm:$0xff]
    %v198 = vld [vmem:[#allocation2 + $0x1d0] sm:$0xff]
    %v199 = vld [vmem:[#allocation2 + $0x1d8] sm:$0xff]
    %v200 = vld [vmem:[#allocation2 + $0x1e0] sm:$0xff]
    %v201 = vld [vmem:[#allocation2 + $0x1e8] sm:$0xff]
    %v202 = vld [vmem:[#allocation2 + $0x1f0] sm:$0xff]
    %v203 = vld [vmem:[#allocation2 + $0x1f8] sm:$0xff]
    %v204 = vld [vmem:[#allocation2 + $0x200] sm:$0xff]
    %v205 = vld [vmem:[#allocation2 + $0x208] sm:$0xff]
    %v206 = vld [vmem:[#allocation2 + $0x210] sm:$0xff]
    %v207 = vld [vmem:[#allocation2 + $0x218] sm:$0xff]
    %v208 = vld [vmem:[#allocation2 + $0x220] sm:$0xff]
    %v209 = vld [vmem:[#allocation2 + $0x228] sm:$0xff]
    %v210 = vld [vmem:[#allocation2 + $0x230] sm:$0xff]
    %v211 = vld [vmem:[#allocation2 + $0x238] sm:$0xff]
    %v212 = vld [vmem:[#allocation2 + $0x240] sm:$0xff]
    %v213 = vld [vmem:[#allocation2 + $0x248] sm:$0xff]
    %v214 = vld [vmem:[#allocation2 + $0x250] sm:$0xff]
    %v215 = vld [vmem:[#allocation2 + $0x258] sm:$0xff]
    %v216 = vld [vmem:[#allocation2 + $0x260] sm:$0xff]
    %v217 = vld [vmem:[#allocation2 + $0x268] sm:$0xff]
    %v218 = vld [vmem:[#allocation2 + $0x270] sm:$0xff]
    %v219 = vld [vmem:[#allocation2 + $0x278] sm:$0xff]
    %v220 = vld [vmem:[#allocation2 + $0x280] sm:$0xff]
    %v221 = vld [vmem:[#allocation2 + $0x288] sm:$0xff]
    %v222 = vld [vmem:[#allocation2 + $0x290] sm:$0xff]
    %v223 = vld [vmem:[#allocation2 + $0x298] sm:$0xff]
    %v224 = vld [vmem:[#allocation2 + $0x2a0] sm:$0xff]
    %v225 = vld [vmem:[#allocation2 + $0x2a8] sm:$0xff]
    %v226 = vld [vmem:[#allocation2 + $0x2b0] sm:$0xff]
    %v227 = vld [vmem:[#allocation2 + $0x2b8] sm:$0xff]
    %v228 = vld [vmem:[#allocation2 + $0x2c0] sm:$0xff]
    %v229 = vld [vmem:[#allocation2 + $0x2c8] sm:$0xff]
    %v230 = vld [vmem:[#allocation2 + $0x2d0] sm:$0xff]
    %v231 = vld [vmem:[#allocation2 + $0x2d8] sm:$0xff]
    %v232 = vld [vmem:[#allocation2 + $0x2e0] sm:$0xff]
    %v233 = vld [vmem:[#allocation2 + $0x2e8] sm:$0xff]
    %v234 = vld [vmem:[#allocation2 + $0x2f0] sm:$0xff]
    %v235 = vld [vmem:[#allocation2 + $0x2f8] sm:$0xff]
    %v236 = vld [vmem:[#allocation3] sm:$0xff]
    %v237 = vld [vmem:[#allocation3 + $0x8] sm:$0xff]
    %v238 = vld [vmem:[#allocation3 + $0x10] sm:$0xff]
    %v239 = vld [vmem:[#allocation3 + $0x18] sm:$0xff]
    %v240 = vld [vmem:[#allocation3 + $0x20] sm:$0xff]
    %v241 = vld [vmem:[#allocation3 + $0x28] sm:$0xff]
    %v242 = vld [vmem:[#allocation3 + $0x30] sm:$0xff]
    %v243 = vld [vmem:[#allocation3 + $0x38] sm:$0xff]
    %v244 = vld [vmem:[#allocation3 + $0x40] sm:$0xff]
    %v245 = vld [vmem:[#allocation3 + $0x48] sm:$0xff]
    %v246 = vld [vmem:[#allocation3 + $0x50] sm:$0xff]
    %v247 = vld [vmem:[#allocation3 + $0x58] sm:$0xff]
    %v248 = vld [vmem:[#allocation3 + $0x60] sm:$0xff]
    %v249 = vld [vmem:[#allocation3 + $0x68] sm:$0xff]
    %v250 = vld [vmem:[#allocation3 + $0x70] sm:$0xff]
    %v251 = vld [vmem:[#allocation3 + $0x78] sm:$0xff]
    %v252 = vld [vmem:[#allocation3 + $0x80] sm:$0xff]
    %v253 = vld [vmem:[#allocation3 + $0x88] sm:$0xff]
    %v254 = vld [vmem:[#allocation3 + $0x90] sm:$0xff]
    %v255 = vld [vmem:[#allocation3 + $0x98] sm:$0xff]
    %v256 = vld [vmem:[#allocation3 + $0xa0] sm:$0xff]
    %v257 = vld [vmem:[#allocation3 + $0xa8] sm:$0xff]
    %v258 = vld [vmem:[#allocation3 + $0xb0] sm:$0xff]
    %v259 = vld [vmem:[#allocation3 + $0xb8] sm:$0xff]
    %v260 = vld [vmem:[#allocation3 + $0xc0] sm:$0xff]
    %v261 = vld [vmem:[#allocation3 + $0xc8] sm:$0xff]
    %v262 = vld [vmem:[#allocation3 + $0xd0] sm:$0xff]
    %v263 = vld [vmem:[#allocation3 + $0xd8] sm:$0xff]
    %v264 = vld [vmem:[#allocation3 + $0xe0] sm:$0xff]
    %v265 = vld [vmem:[#allocation3 + $0xe8] sm:$0xff]
    %v266 = vld [vmem:[#allocation3 + $0xf0] sm:$0xff]
    %v267 = vld [vmem:[#allocation3 + $0xf8] sm:$0xff]
    %v268 = vpack.c.bf16 %v237, %v236
    %v269 = vpack.c.bf16 %v239, %v238
    %v270 = vpack.c.bf16 %v241, %v240
    %v271 = vpack.c.bf16 %v243, %v242
    %v272 = vpack.c.bf16 %v245, %v244
    %v273 = vpack.c.bf16 %v247, %v246
    %v274 = vpack.c.bf16 %v249, %v248
    %v275 = vpack.c.bf16 %v251, %v250
    %v276 = vpack.c.bf16 %v253, %v252
    %v277 = vpack.c.bf16 %v255, %v254
    %v278 = vpack.c.bf16 %v257, %v256
    %v279 = vpack.c.bf16 %v259, %v258
    %v280 = vpack.c.bf16 %v261, %v260
    %v281 = vpack.c.bf16 %v263, %v262
    %v282 = vpack.c.bf16 %v265, %v264
    %v283 = vpack.c.bf16 %v267, %v266
    %v284 = vld [vmem:[#allocation5] sm:$0xff]
    %v285 = vld [vmem:[#allocation5 + $0x8] sm:$0xf]
    %v286 = vld [vmem:[#allocation5 + $0xc] sm:$0xff]
    %v287 = vld [vmem:[#allocation5 + $0x14] sm:$0xf]
    %v288 = vld [vmem:[#allocation5 + $0x18] sm:$0xff]
    %v289 = vld [vmem:[#allocation5 + $0x20] sm:$0xf]
    %v290 = vld [vmem:[#allocation5 + $0x24] sm:$0xff]
    %v291 = vld [vmem:[#allocation5 + $0x2c] sm:$0xf]
    %v292 = vld [vmem:[#allocation5 + $0x30] sm:$0xff]
    %v293 = vld [vmem:[#allocation5 + $0x38] sm:$0xf]
    %v294 = vld [vmem:[#allocation5 + $0x3c] sm:$0xff]
    %v295 = vld [vmem:[#allocation5 + $0x44] sm:$0xf]
    %v296 = vld [vmem:[#allocation5 + $0x48] sm:$0xff]
    %v297 = vld [vmem:[#allocation5 + $0x50] sm:$0xf]
    %v298 = vld [vmem:[#allocation5 + $0x54] sm:$0xff]
    %v299 = vld [vmem:[#allocation5 + $0x5c] sm:$0xf]
    %v300 = vld [vmem:[#allocation5 + $0x60] sm:$0xff]
    %v301 = vld [vmem:[#allocation5 + $0x68] sm:$0xf]
    %v302 = vld [vmem:[#allocation5 + $0x6c] sm:$0xff]
    %v303 = vld [vmem:[#allocation5 + $0x74] sm:$0xf]
    %v304 = vld [vmem:[#allocation5 + $0x78] sm:$0xff]
    %v305 = vld [vmem:[#allocation5 + $0x80] sm:$0xf]
    %v306 = vld [vmem:[#allocation5 + $0x84] sm:$0xff]
    %v307 = vld [vmem:[#allocation5 + $0x8c] sm:$0xf]
    %v308 = vld [vmem:[#allocation5 + $0x90] sm:$0xff]
    %v309 = vld [vmem:[#allocation5 + $0x98] sm:$0xf]
    %v310 = vld [vmem:[#allocation5 + $0x9c] sm:$0xff]
    %v311 = vld [vmem:[#allocation5 + $0xa4] sm:$0xf]
    %v312 = vld [vmem:[#allocation5 + $0xa8] sm:$0xff]
    %v313 = vld [vmem:[#allocation5 + $0xb0] sm:$0xf]
    %v314 = vld [vmem:[#allocation5 + $0xb4] sm:$0xff]
    %v315 = vld [vmem:[#allocation5 + $0xbc] sm:$0xf]
    %v348 = vunpack.c.l.b16 %v284
    %v349 = vunpack.c.h.b16 %v284
    %v350 = vunpack.c.l.b16 %v285
    %v351 = vunpack.c.l.b16 %v286
    %v352 = vunpack.c.h.b16 %v286
    %v353 = vunpack.c.l.b16 %v287
    %v354 = vunpack.c.l.b16 %v288
    %v355 = vunpack.c.h.b16 %v288
    %v356 = vunpack.c.l.b16 %v289
    %v357 = vunpack.c.l.b16 %v290
    %v358 = vunpack.c.h.b16 %v290
    %v359 = vunpack.c.l.b16 %v291
    %v360 = vunpack.c.l.b16 %v292
    %v361 = vunpack.c.h.b16 %v292
    %v362 = vunpack.c.l.b16 %v293
    %v363 = vunpack.c.l.b16 %v294
    %v364 = vunpack.c.h.b16 %v294
    %v365 = vunpack.c.l.b16 %v295
    %v366 = vunpack.c.l.b16 %v296
    %v367 = vunpack.c.h.b16 %v296
    %v368 = vunpack.c.l.b16 %v297
    %v369 = vunpack.c.l.b16 %v298
    %v370 = vunpack.c.h.b16 %v298
    %v371 = vunpack.c.l.b16 %v299
    %v372 = vunpack.c.l.b16 %v300
    %v373 = vunpack.c.h.b16 %v300
    %v374 = vunpack.c.l.b16 %v301
    %v375 = vunpack.c.l.b16 %v302
    %v376 = vunpack.c.h.b16 %v302
    %v377 = vunpack.c.l.b16 %v303
    %v378 = vunpack.c.l.b16 %v304
    %v379 = vunpack.c.h.b16 %v304
    %v380 = vunpack.c.l.b16 %v305
    %v381 = vunpack.c.l.b16 %v306
    %v382 = vunpack.c.h.b16 %v306
    %v383 = vunpack.c.l.b16 %v307
    %v384 = vunpack.c.l.b16 %v308
    %v385 = vunpack.c.h.b16 %v308
    %v386 = vunpack.c.l.b16 %v309
    %v387 = vunpack.c.l.b16 %v310
    %v388 = vunpack.c.h.b16 %v310
    %v389 = vunpack.c.l.b16 %v311
    %v390 = vunpack.c.l.b16 %v312
    %v391 = vunpack.c.h.b16 %v312
    %v392 = vunpack.c.l.b16 %v313
    %v393 = vunpack.c.l.b16 %v314
    %v394 = vunpack.c.h.b16 %v314
    %v395 = vunpack.c.l.b16 %v315
    %v396 = vpack.c.b16 %v351, %v348
    %v397 = vpack.c.b16 %v352, %v349
    %v398 = vpack.c.b16 %v353, %v350
    %v399 = vpack.c.b16 %v357, %v354
    %v400 = vpack.c.b16 %v358, %v355
    %v401 = vpack.c.b16 %v359, %v356
    %v402 = vpack.c.b16 %v363, %v360
    %v403 = vpack.c.b16 %v364, %v361
    %v404 = vpack.c.b16 %v365, %v362
    %v405 = vpack.c.b16 %v369, %v366
    %v406 = vpack.c.b16 %v370, %v367
    %v407 = vpack.c.b16 %v371, %v368
    %v408 = vpack.c.b16 %v375, %v372
    %v409 = vpack.c.b16 %v376, %v373
    %v410 = vpack.c.b16 %v377, %v374
    %v411 = vpack.c.b16 %v381, %v378
    %v412 = vpack.c.b16 %v382, %v379
    %v413 = vpack.c.b16 %v383, %v380
    %v414 = vpack.c.b16 %v387, %v384
    %v415 = vpack.c.b16 %v388, %v385
    %v416 = vpack.c.b16 %v389, %v386
    %v417 = vpack.c.b16 %v393, %v390
    %v418 = vpack.c.b16 %v394, %v391
    %v419 = vpack.c.b16 %v395, %v392
    %444 = vmatprep.subr.bf16.mxu0 %v418
    %445 = vmatpush1.bf16.msra.mxu0 %v417
    %446 = vmatprep.subr.bf16.mxu0 %v415
    %447 = vmatpush1.bf16.msra.mxu0 %v414
    %448 = vmatprep.subr.bf16.mxu0 %v412
    %449 = vmatpush1.bf16.msra.mxu0 %v411
    %450 = vmatprep.subr.bf16.mxu0 %v409
    %451 = vmatpush1.bf16.msra.mxu0 %v408
    %452 = vmatprep.subr.bf16.mxu0 %v406
    %453 = vmatpush1.bf16.msra.mxu0 %v405
    %454 = vmatprep.subr.bf16.mxu0 %v403
    %455 = vmatpush1.bf16.msra.mxu0 %v402
    %456 = vmatprep.subr.bf16.mxu0 %v400
    %457 = vmatpush1.bf16.msra.mxu0 %v399
    %458 = vmatprep.subr.bf16.mxu0 %v397
    %459 = vmatpush1.bf16.msra.mxu0 %v396
    %460 = vmatprep.subr.bf16.mxu0 0
    %461 = vmatpush2.bf16.msra.mxu0 0
    %462 = vmatprep.subr.bf16.mxu0 0
    %463 = vmatpush2.bf16.msra.mxu0 0
    %464 = vmatprep.subr.bf16.mxu0 0
    %465 = vmatpush2.bf16.msra.mxu0 0
    %466 = vmatprep.subr.bf16.mxu0 0
    %467 = vmatpush2.bf16.msra.mxu0 0
    %468 = vmatprep.subr.bf16.mxu0 0
    %469 = vmatpush2.bf16.msra.mxu0 0
    %470 = vmatprep.subr.bf16.mxu0 0
    %471 = vmatpush2.bf16.msra.mxu0 0
    %472 = vmatprep.subr.bf16.mxu0 0
    %473 = vmatpush2.bf16.msra.mxu0 0
    %474 = vmatprep.subr.bf16.mxu0 0
    %475 = vmatpush2.bf16.msra.mxu0 0
    %476 = vmatprep.mubr.bf16.mxu0 0
    %477 = vmatmul.mubr.bf16.gmra.mxu0 %v268
    %v478 = vpop.f32.mrf.mxu0
    %v479 = vadd.f32 0.0, %v478
    %v480 = vpop.f32.mrf.mxu0
    %v481 = vadd.f32 0.0, %v480
    %v482 = vpop.f32.mrf.mxu0
    %v483 = vadd.f32 0.0, %v482
    %v484 = vpop.f32.mrf.mxu0
    %v485 = vadd.f32 0.0, %v484
    %486 = vmatprep.mubr.bf16.mxu0 0
    %487 = vmatmul.mubr.bf16.gmra.mxu0 %v269
    %v488 = vpop.f32.mrf.mxu0
    %v489 = vadd.f32 0.0, %v488
    %v490 = vpop.f32.mrf.mxu0
    %v491 = vadd.f32 0.0, %v490
    %v492 = vpop.f32.mrf.mxu0
    %v493 = vadd.f32 0.0, %v492
    %v494 = vpop.f32.mrf.mxu0
    %v495 = vadd.f32 0.0, %v494
    %496 = vmatprep.mubr.bf16.mxu0 0
    %497 = vmatmul.mubr.bf16.gmra.mxu0 %v270
    %v498 = vpop.f32.mrf.mxu0
    %v499 = vadd.f32 0.0, %v498
    %v500 = vpop.f32.mrf.mxu0
    %v501 = vadd.f32 0.0, %v500
    %v502 = vpop.f32.mrf.mxu0
    %v503 = vadd.f32 0.0, %v502
    %v504 = vpop.f32.mrf.mxu0
    %v505 = vadd.f32 0.0, %v504
    %506 = vmatprep.mubr.bf16.mxu0 0
    %507 = vmatmul.mubr.bf16.gmra.mxu0 %v271
    %v508 = vpop.f32.mrf.mxu0
    %v509 = vadd.f32 0.0, %v508
    %v510 = vpop.f32.mrf.mxu0
    %v511 = vadd.f32 0.0, %v510
    %v512 = vpop.f32.mrf.mxu0
    %v513 = vadd.f32 0.0, %v512
    %v514 = vpop.f32.mrf.mxu0
    %v515 = vadd.f32 0.0, %v514
    %516 = vmatprep.mubr.bf16.mxu0 0
    %517 = vmatmul.mubr.bf16.gmra.mxu0 %v272
    %v518 = vpop.f32.mrf.mxu0
    %v519 = vadd.f32 0.0, %v518
    %v520 = vpop.f32.mrf.mxu0
    %v521 = vadd.f32 0.0, %v520
    %v522 = vpop.f32.mrf.mxu0
    %v523 = vadd.f32 0.0, %v522
    %v524 = vpop.f32.mrf.mxu0
    %v525 = vadd.f32 0.0, %v524
    %526 = vmatprep.mubr.bf16.mxu0 0
    %527 = vmatmul.mubr.bf16.gmra.mxu0 %v273
    %v528 = vpop.f32.mrf.mxu0
    %v529 = vadd.f32 0.0, %v528
    %v530 = vpop.f32.mrf.mxu0
    %v531 = vadd.f32 0.0, %v530
    %v532 = vpop.f32.mrf.mxu0
    %v533 = vadd.f32 0.0, %v532
    %v534 = vpop.f32.mrf.mxu0
    %v535 = vadd.f32 0.0, %v534
    %536 = vmatprep.mubr.bf16.mxu0 0
    %537 = vmatmul.mubr.bf16.gmra.mxu0 %v274
    %v538 = vpop.f32.mrf.mxu0
    %v539 = vadd.f32 0.0, %v538
    %v540 = vpop.f32.mrf.mxu0
    %v541 = vadd.f32 0.0, %v540
    %v542 = vpop.f32.mrf.mxu0
    %v543 = vadd.f32 0.0, %v542
    %v544 = vpop.f32.mrf.mxu0
    %v545 = vadd.f32 0.0, %v544
    %546 = vmatprep.mubr.bf16.mxu0 0
    %547 = vmatmul.mubr.bf16.gmra.mxu0 %v275
    %v548 = vpop.f32.mrf.mxu0
    %v549 = vadd.f32 0.0, %v548
    %v550 = vpop.f32.mrf.mxu0
    %v551 = vadd.f32 0.0, %v550
    %v552 = vpop.f32.mrf.mxu0
    %v553 = vadd.f32 0.0, %v552
    %v554 = vpop.f32.mrf.mxu0
    %v555 = vadd.f32 0.0, %v554
    %556 = vmatprep.mubr.bf16.mxu0 0
    %557 = vmatmul.mubr.bf16.gmra.mxu0 %v276
    %v558 = vpop.f32.mrf.mxu0
    %v559 = vadd.f32 0.0, %v558
    %v560 = vpop.f32.mrf.mxu0
    %v561 = vadd.f32 0.0, %v560
    %v562 = vpop.f32.mrf.mxu0
    %v563 = vadd.f32 0.0, %v562
    %v564 = vpop.f32.mrf.mxu0
    %v565 = vadd.f32 0.0, %v564
    %566 = vmatprep.mubr.bf16.mxu0 0
    %567 = vmatmul.mubr.bf16.gmra.mxu0 %v277
    %v568 = vpop.f32.mrf.mxu0
    %v569 = vadd.f32 0.0, %v568
    %v570 = vpop.f32.mrf.mxu0
    %v571 = vadd.f32 0.0, %v570
    %v572 = vpop.f32.mrf.mxu0
    %v573 = vadd.f32 0.0, %v572
    %v574 = vpop.f32.mrf.mxu0
    %v575 = vadd.f32 0.0, %v574
    %576 = vmatprep.mubr.bf16.mxu0 0
    %577 = vmatmul.mubr.bf16.gmra.mxu0 %v278
    %v578 = vpop.f32.mrf.mxu0
    %v579 = vadd.f32 0.0, %v578
    %v580 = vpop.f32.mrf.mxu0
    %v581 = vadd.f32 0.0, %v580
    %v582 = vpop.f32.mrf.mxu0
    %v583 = vadd.f32 0.0, %v582
    %v584 = vpop.f32.mrf.mxu0
    %v585 = vadd.f32 0.0, %v584
    %586 = vmatprep.mubr.bf16.mxu0 0
    %587 = vmatmul.mubr.bf16.gmra.mxu0 %v279
    %v588 = vpop.f32.mrf.mxu0
    %v589 = vadd.f32 0.0, %v588
    %v590 = vpop.f32.mrf.mxu0
    %v591 = vadd.f32 0.0, %v590
    %v592 = vpop.f32.mrf.mxu0
    %v593 = vadd.f32 0.0, %v592
    %v594 = vpop.f32.mrf.mxu0
    %v595 = vadd.f32 0.0, %v594
    %596 = vmatprep.mubr.bf16.mxu0 0
    %597 = vmatmul.mubr.bf16.gmra.mxu0 %v280
    %v598 = vpop.f32.mrf.mxu0
    %v599 = vadd.f32 0.0, %v598
    %v600 = vpop.f32.mrf.mxu0
    %v601 = vadd.f32 0.0, %v600
    %v602 = vpop.f32.mrf.mxu0
    %v603 = vadd.f32 0.0, %v602
    %v604 = vpop.f32.mrf.mxu0
    %v605 = vadd.f32 0.0, %v604
    %606 = vmatprep.mubr.bf16.mxu0 0
    %607 = vmatmul.mubr.bf16.gmra.mxu0 %v281
    %v608 = vpop.f32.mrf.mxu0
    %v609 = vadd.f32 0.0, %v608
    %v610 = vpop.f32.mrf.mxu0
    %v611 = vadd.f32 0.0, %v610
    %v612 = vpop.f32.mrf.mxu0
    %v613 = vadd.f32 0.0, %v612
    %v614 = vpop.f32.mrf.mxu0
    %v615 = vadd.f32 0.0, %v614
    %616 = vmatprep.mubr.bf16.mxu0 0
    %617 = vmatmul.mubr.bf16.gmra.mxu0 %v282
    %v618 = vpop.f32.mrf.mxu0
    %v619 = vadd.f32 0.0, %v618
    %v620 = vpop.f32.mrf.mxu0
    %v621 = vadd.f32 0.0, %v620
    %v622 = vpop.f32.mrf.mxu0
    %v623 = vadd.f32 0.0, %v622
    %v624 = vpop.f32.mrf.mxu0
    %v625 = vadd.f32 0.0, %v624
    %626 = vmatprep.mubr.bf16.mxu0 0
    %627 = vmatmul.mubr.bf16.gmra.mxu0 %v283
    %v628 = vpop.f32.mrf.mxu0
    %v629 = vadd.f32 0.0, %v628
    %v630 = vpop.f32.mrf.mxu0
    %v631 = vadd.f32 0.0, %v630
    %v632 = vpop.f32.mrf.mxu0
    %v633 = vadd.f32 0.0, %v632
    %v634 = vpop.f32.mrf.mxu0
    %v635 = vadd.f32 0.0, %v634
    %636 = vdwg.mxu0
    %637 = vmatprep.subr.bf16.mxu0 0
    %638 = vmatpush1.bf16.msra.mxu0 %v419
    %639 = vmatprep.subr.bf16.mxu0 0
    %640 = vmatpush1.bf16.msra.mxu0 %v416
    %641 = vmatprep.subr.bf16.mxu0 0
    %642 = vmatpush1.bf16.msra.mxu0 %v413
    %643 = vmatprep.subr.bf16.mxu0 0
    %644 = vmatpush1.bf16.msra.mxu0 %v410
    %645 = vmatprep.subr.bf16.mxu0 0
    %646 = vmatpush1.bf16.msra.mxu0 %v407
    %647 = vmatprep.subr.bf16.mxu0 0
    %648 = vmatpush1.bf16.msra.mxu0 %v404
    %649 = vmatprep.subr.bf16.mxu0 0
    %650 = vmatpush1.bf16.msra.mxu0 %v401
    %651 = vmatprep.subr.bf16.mxu0 0
    %652 = vmatpush1.bf16.msra.mxu0 %v398
    %653 = vmatprep.subr.bf16.mxu0 0
    %654 = vmatpush2.bf16.msra.mxu0 0
    %655 = vmatprep.subr.bf16.mxu0 0
    %656 = vmatpush2.bf16.msra.mxu0 0
    %657 = vmatprep.subr.bf16.mxu0 0
    %658 = vmatpush2.bf16.msra.mxu0 0
    %659 = vmatprep.subr.bf16.mxu0 0
    %660 = vmatpush2.bf16.msra.mxu0 0
    %661 = vmatprep.subr.bf16.mxu0 0
    %662 = vmatpush2.bf16.msra.mxu0 0
    %663 = vmatprep.subr.bf16.mxu0 0
    %664 = vmatpush2.bf16.msra.mxu0 0
    %665 = vmatprep.subr.bf16.mxu0 0
    %666 = vmatpush2.bf16.msra.mxu0 0
    %667 = vmatprep.subr.bf16.mxu0 0
    %668 = vmatpush2.bf16.msra.mxu0 0
    %669 = vmatprep.mubr.bf16.mxu0 0
    %670 = vmatmul.mubr.bf16.gmra.mxu0 %v268
    %v671 = vpop.f32.mrf.mxu0
    %v672 = vadd.f32 0.0, %v671
    %v673 = vpop.f32.mrf.mxu0
    %v674 = vpop.f32.mrf.mxu0
    %v675 = vadd.f32 0.0, %v674
    %v676 = vpop.f32.mrf.mxu0
    %677 = vmatprep.mubr.bf16.mxu0 0
    %678 = vmatmul.mubr.bf16.gmra.mxu0 %v269
    %v679 = vpop.f32.mrf.mxu0
    %v680 = vadd.f32 0.0, %v679
    %v681 = vpop.f32.mrf.mxu0
    %v682 = vpop.f32.mrf.mxu0
    %v683 = vadd.f32 0.0, %v682
    %v684 = vpop.f32.mrf.mxu0
    %685 = vmatprep.mubr.bf16.mxu0 0
    %686 = vmatmul.mubr.bf16.gmra.mxu0 %v270
    %v687 = vpop.f32.mrf.mxu0
    %v688 = vadd.f32 0.0, %v687
    %v689 = vpop.f32.mrf.mxu0
    %v690 = vpop.f32.mrf.mxu0
    %v691 = vadd.f32 0.0, %v690
    %v692 = vpop.f32.mrf.mxu0
    %693 = vmatprep.mubr.bf16.mxu0 0
    %694 = vmatmul.mubr.bf16.gmra.mxu0 %v271
    %v695 = vpop.f32.mrf.mxu0
    %v696 = vadd.f32 0.0, %v695
    %v697 = vpop.f32.mrf.mxu0
    %v698 = vpop.f32.mrf.mxu0
    %v699 = vadd.f32 0.0, %v698
    %v700 = vpop.f32.mrf.mxu0
    %701 = vmatprep.mubr.bf16.mxu0 0
    %702 = vmatmul.mubr.bf16.gmra.mxu0 %v272
    %v703 = vpop.f32.mrf.mxu0
    %v704 = vadd.f32 0.0, %v703
    %v705 = vpop.f32.mrf.mxu0
    %v706 = vpop.f32.mrf.mxu0
    %v707 = vadd.f32 0.0, %v706
    %v708 = vpop.f32.mrf.mxu0
    %709 = vmatprep.mubr.bf16.mxu0 0
    %710 = vmatmul.mubr.bf16.gmra.mxu0 %v273
    %v711 = vpop.f32.mrf.mxu0
    %v712 = vadd.f32 0.0, %v711
    %v713 = vpop.f32.mrf.mxu0
    %v714 = vpop.f32.mrf.mxu0
    %v715 = vadd.f32 0.0, %v714
    %v716 = vpop.f32.mrf.mxu0
    %717 = vmatprep.mubr.bf16.mxu0 0
    %718 = vmatmul.mubr.bf16.gmra.mxu0 %v274
    %v719 = vpop.f32.mrf.mxu0
    %v720 = vadd.f32 0.0, %v719
    %v721 = vpop.f32.mrf.mxu0
    %v722 = vpop.f32.mrf.mxu0
    %v723 = vadd.f32 0.0, %v722
    %v724 = vpop.f32.mrf.mxu0
    %725 = vmatprep.mubr.bf16.mxu0 0
    %726 = vmatmul.mubr.bf16.gmra.mxu0 %v275
    %v727 = vpop.f32.mrf.mxu0
    %v728 = vadd.f32 0.0, %v727
    %v729 = vpop.f32.mrf.mxu0
    %v730 = vpop.f32.mrf.mxu0
    %v731 = vadd.f32 0.0, %v730
    %v732 = vpop.f32.mrf.mxu0
    %733 = vmatprep.mubr.bf16.mxu0 0
    %734 = vmatmul.mubr.bf16.gmra.mxu0 %v276
    %v735 = vpop.f32.mrf.mxu0
    %v736 = vadd.f32 0.0, %v735
    %v737 = vpop.f32.mrf.mxu0
    %v738 = vpop.f32.mrf.mxu0
    %v739 = vadd.f32 0.0, %v738
    %v740 = vpop.f32.mrf.mxu0
    %741 = vmatprep.mubr.bf16.mxu0 0
    %742 = vmatmul.mubr.bf16.gmra.mxu0 %v277
    %v743 = vpop.f32.mrf.mxu0
    %v744 = vadd.f32 0.0, %v743
    %v745 = vpop.f32.mrf.mxu0
    %v746 = vpop.f32.mrf.mxu0
    %v747 = vadd.f32 0.0, %v746
    %v748 = vpop.f32.mrf.mxu0
    %749 = vmatprep.mubr.bf16.mxu0 0
    %750 = vmatmul.mubr.bf16.gmra.mxu0 %v278
    %v751 = vpop.f32.mrf.mxu0
    %v752 = vadd.f32 0.0, %v751
    %v753 = vpop.f32.mrf.mxu0
    %v754 = vpop.f32.mrf.mxu0
    %v755 = vadd.f32 0.0, %v754
    %v756 = vpop.f32.mrf.mxu0
    %757 = vmatprep.mubr.bf16.mxu0 0
    %758 = vmatmul.mubr.bf16.gmra.mxu0 %v279
    %v759 = vpop.f32.mrf.mxu0
    %v760 = vadd.f32 0.0, %v759
    %v761 = vpop.f32.mrf.mxu0
    %v762 = vpop.f32.mrf.mxu0
    %v763 = vadd.f32 0.0, %v762
    %v764 = vpop.f32.mrf.mxu0
    %765 = vmatprep.mubr.bf16.mxu0 0
    %766 = vmatmul.mubr.bf16.gmra.mxu0 %v280
    %v767 = vpop.f32.mrf.mxu0
    %v768 = vadd.f32 0.0, %v767
    %v769 = vpop.f32.mrf.mxu0
    %v770 = vpop.f32.mrf.mxu0
    %v771 = vadd.f32 0.0, %v770
    %v772 = vpop.f32.mrf.mxu0
    %773 = vmatprep.mubr.bf16.mxu0 0
    %774 = vmatmul.mubr.bf16.gmra.mxu0 %v281
    %v775 = vpop.f32.mrf.mxu0
    %v776 = vadd.f32 0.0, %v775
    %v777 = vpop.f32.mrf.mxu0
    %v778 = vpop.f32.mrf.mxu0
    %v779 = vadd.f32 0.0, %v778
    %v780 = vpop.f32.mrf.mxu0
    %781 = vmatprep.mubr.bf16.mxu0 0
    %782 = vmatmul.mubr.bf16.gmra.mxu0 %v282
    %v783 = vpop.f32.mrf.mxu0
    %v784 = vadd.f32 0.0, %v783
    %v785 = vpop.f32.mrf.mxu0
    %v786 = vpop.f32.mrf.mxu0
    %v787 = vadd.f32 0.0, %v786
    %v788 = vpop.f32.mrf.mxu0
    %789 = vmatprep.mubr.bf16.mxu0 0
    %790 = vmatmul.mubr.bf16.gmra.mxu0 %v283
    %v791 = vpop.f32.mrf.mxu0
    %v792 = vadd.f32 0.0, %v791
    %v793 = vpop.f32.mrf.mxu0
    %v794 = vpop.f32.mrf.mxu0
    %v795 = vadd.f32 0.0, %v794
    %v796 = vpop.f32.mrf.mxu0
    %797 = vdwg.mxu0
    %v798 = vadd.f32 %v140, %v479
    %v799 = vadd.f32 %v141, %v481
    %v800 = vadd.f32 %v142, %v672
    %v801 = vadd.f32 %v143, %v483
    %v802 = vadd.f32 %v144, %v485
    %v803 = vadd.f32 %v145, %v675
    %v804 = vadd.f32 %v146, %v489
    %v805 = vadd.f32 %v147, %v491
    %v806 = vadd.f32 %v148, %v680
    %v807 = vadd.f32 %v149, %v493
    %v808 = vadd.f32 %v150, %v495
    %v809 = vadd.f32 %v151, %v683
    %v810 = vadd.f32 %v152, %v499
    %v811 = vadd.f32 %v153, %v501
    %v812 = vadd.f32 %v154, %v688
    %v813 = vadd.f32 %v155, %v503
    %v814 = vadd.f32 %v156, %v505
    %v815 = vadd.f32 %v157, %v691
    %v816 = vadd.f32 %v158, %v509
    %v817 = vadd.f32 %v159, %v511
    %v818 = vadd.f32 %v160, %v696
    %v819 = vadd.f32 %v161, %v513
    %v820 = vadd.f32 %v162, %v515
    %v821 = vadd.f32 %v163, %v699
    %v822 = vadd.f32 %v164, %v519
    %v823 = vadd.f32 %v165, %v521
    %v824 = vadd.f32 %v166, %v704
    %v825 = vadd.f32 %v167, %v523
    %v826 = vadd.f32 %v168, %v525
    %v827 = vadd.f32 %v169, %v707
    %v828 = vadd.f32 %v170, %v529
    %v829 = vadd.f32 %v171, %v531
    %v830 = vadd.f32 %v172, %v712
    %v831 = vadd.f32 %v173, %v533
    %v832 = vadd.f32 %v174, %v535
    %v833 = vadd.f32 %v175, %v715
    %v834 = vadd.f32 %v176, %v539
    %v835 = vadd.f32 %v177, %v541
    %v836 = vadd.f32 %v178, %v720
    %v837 = vadd.f32 %v179, %v543
    %v838 = vadd.f32 %v180, %v545
    %v839 = vadd.f32 %v181, %v723
    %v840 = vadd.f32 %v182, %v549
    %v841 = vadd.f32 %v183, %v551
    %v842 = vadd.f32 %v184, %v728
    %v843 = vadd.f32 %v185, %v553
    %v844 = vadd.f32 %v186, %v555
    %v845 = vadd.f32 %v187, %v731
    %v846 = vadd.f32 %v188, %v559
    %v847 = vadd.f32 %v189, %v561
    %v848 = vadd.f32 %v190, %v736
    %v849 = vadd.f32 %v191, %v563
    %v850 = vadd.f32 %v192, %v565
    %v851 = vadd.f32 %v193, %v739
    %v852 = vadd.f32 %v194, %v569
    %v853 = vadd.f32 %v195, %v571
    %v854 = vadd.f32 %v196, %v744
    %v855 = vadd.f32 %v197, %v573
    %v856 = vadd.f32 %v198, %v575
    %v857 = vadd.f32 %v199, %v747
    %v858 = vadd.f32 %v200, %v579
    %v859 = vadd.f32 %v201, %v581
    %v860 = vadd.f32 %v202, %v752
    %v861 = vadd.f32 %v203, %v583
    %v862 = vadd.f32 %v204, %v585
    %v863 = vadd.f32 %v205, %v755
    %v864 = vadd.f32 %v206, %v589
    %v865 = vadd.f32 %v207, %v591
    %v866 = vadd.f32 %v208, %v760
    %v867 = vadd.f32 %v209, %v593
    %v868 = vadd.f32 %v210, %v595
    %v869 = vadd.f32 %v211, %v763
    %v870 = vadd.f32 %v212, %v599
    %v871 = vadd.f32 %v213, %v601
    %v872 = vadd.f32 %v214, %v768
    %v873 = vadd.f32 %v215, %v603
    %v874 = vadd.f32 %v216, %v605
    %v875 = vadd.f32 %v217, %v771
    %v876 = vadd.f32 %v218, %v609
    %v877 = vadd.f32 %v219, %v611
    %v878 = vadd.f32 %v220, %v776
    %v879 = vadd.f32 %v221, %v613
    %v880 = vadd.f32 %v222, %v615
    %v881 = vadd.f32 %v223, %v779
    %v882 = vadd.f32 %v224, %v619
    %v883 = vadd.f32 %v225, %v621
    %v884 = vadd.f32 %v226, %v784
    %v885 = vadd.f32 %v227, %v623
    %v886 = vadd.f32 %v228, %v625
    %v887 = vadd.f32 %v229, %v787
    %v888 = vadd.f32 %v230, %v629
    %v889 = vadd.f32 %v231, %v631
    %v890 = vadd.f32 %v232, %v792
    %v891 = vadd.f32 %v233, %v633
    %v892 = vadd.f32 %v234, %v635
    %v893 = vadd.f32 %v235, %v795
    %894 = vst [vmem:[#allocation2] sm:$0xff] %v798
    %895 = vst [vmem:[#allocation2 + $0x8] sm:$0xff] %v799
    %896 = vst [vmem:[#allocation2 + $0x10] sm:$0xff] %v800
    %897 = vst [vmem:[#allocation2 + $0x18] sm:$0xff] %v801
    %898 = vst [vmem:[#allocation2 + $0x20] sm:$0xff] %v802
    %899 = vst [vmem:[#allocation2 + $0x28] sm:$0xff] %v803
    %900 = vst [vmem:[#allocation2 + $0x30] sm:$0xff] %v804
    %901 = vst [vmem:[#allocation2 + $0x38] sm:$0xff] %v805
    %902 = vst [vmem:[#allocation2 + $0x40] sm:$0xff] %v806
    %903 = vst [vmem:[#allocation2 + $0x48] sm:$0xff] %v807
    %904 = vst [vmem:[#allocation2 + $0x50] sm:$0xff] %v808
    %905 = vst [vmem:[#allocation2 + $0x58] sm:$0xff] %v809
    %906 = vst [vmem:[#allocation2 + $0x60] sm:$0xff] %v810
    %907 = vst [vmem:[#allocation2 + $0x68] sm:$0xff] %v811
    %908 = vst [vmem:[#allocation2 + $0x70] sm:$0xff] %v812
    %909 = vst [vmem:[#allocation2 + $0x78] sm:$0xff] %v813
    %910 = vst [vmem:[#allocation2 + $0x80] sm:$0xff] %v814
    %911 = vst [vmem:[#allocation2 + $0x88] sm:$0xff] %v815
    %912 = vst [vmem:[#allocation2 + $0x90] sm:$0xff] %v816
    %913 = vst [vmem:[#allocation2 + $0x98] sm:$0xff] %v817
    %914 = vst [vmem:[#allocation2 + $0xa0] sm:$0xff] %v818
    %915 = vst [vmem:[#allocation2 + $0xa8] sm:$0xff] %v819
    %916 = vst [vmem:[#allocation2 + $0xb0] sm:$0xff] %v820
    %917 = vst [vmem:[#allocation2 + $0xb8] sm:$0xff] %v821
    %918 = vst [vmem:[#allocation2 + $0xc0] sm:$0xff] %v822
    %919 = vst [vmem:[#allocation2 + $0xc8] sm:$0xff] %v823
    %920 = vst [vmem:[#allocation2 + $0xd0] sm:$0xff] %v824
    %921 = vst [vmem:[#allocation2 + $0xd8] sm:$0xff] %v825
    %922 = vst [vmem:[#allocation2 + $0xe0] sm:$0xff] %v826
    %923 = vst [vmem:[#allocation2 + $0xe8] sm:$0xff] %v827
    %924 = vst [vmem:[#allocation2 + $0xf0] sm:$0xff] %v828
    %925 = vst [vmem:[#allocation2 + $0xf8] sm:$0xff] %v829
    %926 = vst [vmem:[#allocation2 + $0x100] sm:$0xff] %v830
    %927 = vst [vmem:[#allocation2 + $0x108] sm:$0xff] %v831
    %928 = vst [vmem:[#allocation2 + $0x110] sm:$0xff] %v832
    %929 = vst [vmem:[#allocation2 + $0x118] sm:$0xff] %v833
    %930 = vst [vmem:[#allocation2 + $0x120] sm:$0xff] %v834
    %931 = vst [vmem:[#allocation2 + $0x128] sm:$0xff] %v835
    %932 = vst [vmem:[#allocation2 + $0x130] sm:$0xff] %v836
    %933 = vst [vmem:[#allocation2 + $0x138] sm:$0xff] %v837
    %934 = vst [vmem:[#allocation2 + $0x140] sm:$0xff] %v838
    %935 = vst [vmem:[#allocation2 + $0x148] sm:$0xff] %v839
    %936 = vst [vmem:[#allocation2 + $0x150] sm:$0xff] %v840
    %937 = vst [vmem:[#allocation2 + $0x158] sm:$0xff] %v841
    %938 = vst [vmem:[#allocation2 + $0x160] sm:$0xff] %v842
    %939 = vst [vmem:[#allocation2 + $0x168] sm:$0xff] %v843
    %940 = vst [vmem:[#allocation2 + $0x170] sm:$0xff] %v844
    %941 = vst [vmem:[#allocation2 + $0x178] sm:$0xff] %v845
    %942 = vst [vmem:[#allocation2 + $0x180] sm:$0xff] %v846
    %943 = vst [vmem:[#allocation2 + $0x188] sm:$0xff] %v847
    %944 = vst [vmem:[#allocation2 + $0x190] sm:$0xff] %v848
    %945 = vst [vmem:[#allocation2 + $0x198] sm:$0xff] %v849
    %946 = vst [vmem:[#allocation2 + $0x1a0] sm:$0xff] %v850
    %947 = vst [vmem:[#allocation2 + $0x1a8] sm:$0xff] %v851
    %948 = vst [vmem:[#allocation2 + $0x1b0] sm:$0xff] %v852
    %949 = vst [vmem:[#allocation2 + $0x1b8] sm:$0xff] %v853
    %950 = vst [vmem:[#allocation2 + $0x1c0] sm:$0xff] %v854
    %951 = vst [vmem:[#allocation2 + $0x1c8] sm:$0xff] %v855
    %952 = vst [vmem:[#allocation2 + $0x1d0] sm:$0xff] %v856
    %953 = vst [vmem:[#allocation2 + $0x1d8] sm:$0xff] %v857
    %954 = vst [vmem:[#allocation2 + $0x1e0] sm:$0xff] %v858
    %955 = vst [vmem:[#allocation2 + $0x1e8] sm:$0xff] %v859
    %956 = vst [vmem:[#allocation2 + $0x1f0] sm:$0xff] %v860
    %957 = vst [vmem:[#allocation2 + $0x1f8] sm:$0xff] %v861
    %958 = vst [vmem:[#allocation2 + $0x200] sm:$0xff] %v862
    %959 = vst [vmem:[#allocation2 + $0x208] sm:$0xff] %v863
    %960 = vst [vmem:[#allocation2 + $0x210] sm:$0xff] %v864
    %961 = vst [vmem:[#allocation2 + $0x218] sm:$0xff] %v865
    %962 = vst [vmem:[#allocation2 + $0x220] sm:$0xff] %v866
    %963 = vst [vmem:[#allocation2 + $0x228] sm:$0xff] %v867
    %964 = vst [vmem:[#allocation2 + $0x230] sm:$0xff] %v868
    %965 = vst [vmem:[#allocation2 + $0x238] sm:$0xff] %v869
    %966 = vst [vmem:[#allocation2 + $0x240] sm:$0xff] %v870
    %967 = vst [vmem:[#allocation2 + $0x248] sm:$0xff] %v871
    %968 = vst [vmem:[#allocation2 + $0x250] sm:$0xff] %v872
    %969 = vst [vmem:[#allocation2 + $0x258] sm:$0xff] %v873
    %970 = vst [vmem:[#allocation2 + $0x260] sm:$0xff] %v874
    %971 = vst [vmem:[#allocation2 + $0x268] sm:$0xff] %v875
    %972 = vst [vmem:[#allocation2 + $0x270] sm:$0xff] %v876
    %973 = vst [vmem:[#allocation2 + $0x278] sm:$0xff] %v877
    %974 = vst [vmem:[#allocation2 + $0x280] sm:$0xff] %v878
    %975 = vst [vmem:[#allocation2 + $0x288] sm:$0xff] %v879
    %976 = vst [vmem:[#allocation2 + $0x290] sm:$0xff] %v880
    %977 = vst [vmem:[#allocation2 + $0x298] sm:$0xff] %v881
    %978 = vst [vmem:[#allocation2 + $0x2a0] sm:$0xff] %v882
    %979 = vst [vmem:[#allocation2 + $0x2a8] sm:$0xff] %v883
    %980 = vst [vmem:[#allocation2 + $0x2b0] sm:$0xff] %v884
    %981 = vst [vmem:[#allocation2 + $0x2b8] sm:$0xff] %v885
    %982 = vst [vmem:[#allocation2 + $0x2c0] sm:$0xff] %v886
    %983 = vst [vmem:[#allocation2 + $0x2c8] sm:$0xff] %v887
    %984 = vst [vmem:[#allocation2 + $0x2d0] sm:$0xff] %v888
    %985 = vst [vmem:[#allocation2 + $0x2d8] sm:$0xff] %v889
    %986 = vst [vmem:[#allocation2 + $0x2e0] sm:$0xff] %v890
    %987 = vst [vmem:[#allocation2 + $0x2e8] sm:$0xff] %v891
    %988 = vst [vmem:[#allocation2 + $0x2f0] sm:$0xff] %v892
    %989 = vst [vmem:[#allocation2 + $0x2f8] sm:$0xff] %v893
    // Predicated region
    $region22: #{forward.2} parent=1 // pred_check
      %p990 = pneg %p40
    $region23: #{forward.2} parent=1 // pred_check_branch
      %992 = sbr.rel (%p990) target = $region25
    $region24: #{forward.2} parent=1 // pred_region
      %v993 = vld [vmem:[#allocation2] sm:$0xff]
      %v994 = vld [vmem:[#allocation2 + $0x8] sm:$0xff]
      %v995 = vld [vmem:[#allocation2 + $0x10] sm:$0xff]
      %v996 = vld [vmem:[#allocation2 + $0x18] sm:$0xff]
      %v997 = vld [vmem:[#allocation2 + $0x20] sm:$0xff]
      %v998 = vld [vmem:[#allocation2 + $0x28] sm:$0xff]
      %v999 = vld [vmem:[#allocation2 + $0x30] sm:$0xff]
      %v1000 = vld [vmem:[#allocation2 + $0x38] sm:$0xff]
      %v1001 = vld [vmem:[#allocation2 + $0x40] sm:$0xff]
      %v1002 = vld [vmem:[#allocation2 + $0x48] sm:$0xff]
      %v1003 = vld [vmem:[#allocation2 + $0x50] sm:$0xff]
      %v1004 = vld [vmem:[#allocation2 + $0x58] sm:$0xff]
      %v1005 = vld [vmem:[#allocation2 + $0x60] sm:$0xff]
      %v1006 = vld [vmem:[#allocation2 + $0x68] sm:$0xff]
      %v1007 = vld [vmem:[#allocation2 + $0x70] sm:$0xff]
      %v1008 = vld [vmem:[#allocation2 + $0x78] sm:$0xff]
      %v1009 = vld [vmem:[#allocation2 + $0x80] sm:$0xff]
      %v1010 = vld [vmem:[#allocation2 + $0x88] sm:$0xff]
      %v1011 = vld [vmem:[#allocation2 + $0x90] sm:$0xff]
      %v1012 = vld [vmem:[#allocation2 + $0x98] sm:$0xff]
      %v1013 = vld [vmem:[#allocation2 + $0xa0] sm:$0xff]
      %v1014 = vld [vmem:[#allocation2 + $0xa8] sm:$0xff]
      %v1015 = vld [vmem:[#allocation2 + $0xb0] sm:$0xff]
      %v1016 = vld [vmem:[#allocation2 + $0xb8] sm:$0xff]
      %v1017 = vld [vmem:[#allocation2 + $0xc0] sm:$0xff]
      %v1018 = vld [vmem:[#allocation2 + $0xc8] sm:$0xff]
      %v1019 = vld [vmem:[#allocation2 + $0xd0] sm:$0xff]
      %v1020 = vld [vmem:[#allocation2 + $0xd8] sm:$0xff]
      %v1021 = vld [vmem:[#allocation2 + $0xe0] sm:$0xff]
      %v1022 = vld [vmem:[#allocation2 + $0xe8] sm:$0xff]
      %v1023 = vld [vmem:[#allocation2 + $0xf0] sm:$0xff]
      %v1024 = vld [vmem:[#allocation2 + $0xf8] sm:$0xff]
      %v1025 = vld [vmem:[#allocation2 + $0x100] sm:$0xff]
      %v1026 = vld [vmem:[#allocation2 + $0x108] sm:$0xff]
      %v1027 = vld [vmem:[#allocation2 + $0x110] sm:$0xff]
      %v1028 = vld [vmem:[#allocation2 + $0x118] sm:$0xff]
      %v1029 = vld [vmem:[#allocation2 + $0x120] sm:$0xff]
      %v1030 = vld [vmem:[#allocation2 + $0x128] sm:$0xff]
      %v1031 = vld [vmem:[#allocation2 + $0x130] sm:$0xff]
      %v1032 = vld [vmem:[#allocation2 + $0x138] sm:$0xff]
      %v1033 = vld [vmem:[#allocation2 + $0x140] sm:$0xff]
      %v1034 = vld [vmem:[#allocation2 + $0x148] sm:$0xff]
      %v1035 = vld [vmem:[#allocation2 + $0x150] sm:$0xff]
      %v1036 = vld [vmem:[#allocation2 + $0x158] sm:$0xff]
      %v1037 = vld [vmem:[#allocation2 + $0x160] sm:$0xff]
      %v1038 = vld [vmem:[#allocation2 + $0x168] sm:$0xff]
      %v1039 = vld [vmem:[#allocation2 + $0x170] sm:$0xff]
      %v1040 = vld [vmem:[#allocation2 + $0x178] sm:$0xff]
      %v1041 = vld [vmem:[#allocation2 + $0x180] sm:$0xff]
      %v1042 = vld [vmem:[#allocation2 + $0x188] sm:$0xff]
      %v1043 = vld [vmem:[#allocation2 + $0x190] sm:$0xff]
      %v1044 = vld [vmem:[#allocation2 + $0x198] sm:$0xff]
      %v1045 = vld [vmem:[#allocation2 + $0x1a0] sm:$0xff]
      %v1046 = vld [vmem:[#allocation2 + $0x1a8] sm:$0xff]
      %v1047 = vld [vmem:[#allocation2 + $0x1b0] sm:$0xff]
      %v1048 = vld [vmem:[#allocation2 + $0x1b8] sm:$0xff]
      %v1049 = vld [vmem:[#allocation2 + $0x1c0] sm:$0xff]
      %v1050 = vld [vmem:[#allocation2 + $0x1c8] sm:$0xff]
      %v1051 = vld [vmem:[#allocation2 + $0x1d0] sm:$0xff]
      %v1052 = vld [vmem:[#allocation2 + $0x1d8] sm:$0xff]
      %v1053 = vld [vmem:[#allocation2 + $0x1e0] sm:$0xff]
      %v1054 = vld [vmem:[#allocation2 + $0x1e8] sm:$0xff]
      %v1055 = vld [vmem:[#allocation2 + $0x1f0] sm:$0xff]
      %v1056 = vld [vmem:[#allocation2 + $0x1f8] sm:$0xff]
      %v1057 = vld [vmem:[#allocation2 + $0x200] sm:$0xff]
      %v1058 = vld [vmem:[#allocation2 + $0x208] sm:$0xff]
      %v1059 = vld [vmem:[#allocation2 + $0x210] sm:$0xff]
      %v1060 = vld [vmem:[#allocation2 + $0x218] sm:$0xff]
      %v1061 = vld [vmem:[#allocation2 + $0x220] sm:$0xff]
      %v1062 = vld [vmem:[#allocation2 + $0x228] sm:$0xff]
      %v1063 = vld [vmem:[#allocation2 + $0x230] sm:$0xff]
      %v1064 = vld [vmem:[#allocation2 + $0x238] sm:$0xff]
      %v1065 = vld [vmem:[#allocation2 + $0x240] sm:$0xff]
      %v1066 = vld [vmem:[#allocation2 + $0x248] sm:$0xff]
      %v1067 = vld [vmem:[#allocation2 + $0x250] sm:$0xff]
      %v1068 = vld [vmem:[#allocation2 + $0x258] sm:$0xff]
      %v1069 = vld [vmem:[#allocation2 + $0x260] sm:$0xff]
      %v1070 = vld [vmem:[#allocation2 + $0x268] sm:$0xff]
      %v1071 = vld [vmem:[#allocation2 + $0x270] sm:$0xff]
      %v1072 = vld [vmem:[#allocation2 + $0x278] sm:$0xff]
      %v1073 = vld [vmem:[#allocation2 + $0x280] sm:$0xff]
      %v1074 = vld [vmem:[#allocation2 + $0x288] sm:$0xff]
      %v1075 = vld [vmem:[#allocation2 + $0x290] sm:$0xff]
      %v1076 = vld [vmem:[#allocation2 + $0x298] sm:$0xff]
      %v1077 = vld [vmem:[#allocation2 + $0x2a0] sm:$0xff]
      %v1078 = vld [vmem:[#allocation2 + $0x2a8] sm:$0xff]
      %v1079 = vld [vmem:[#allocation2 + $0x2b0] sm:$0xff]
      %v1080 = vld [vmem:[#allocation2 + $0x2b8] sm:$0xff]
      %v1081 = vld [vmem:[#allocation2 + $0x2c0] sm:$0xff]
      %v1082 = vld [vmem:[#allocation2 + $0x2c8] sm:$0xff]
      %v1083 = vld [vmem:[#allocation2 + $0x2d0] sm:$0xff]
      %v1084 = vld [vmem:[#allocation2 + $0x2d8] sm:$0xff]
      %v1085 = vld [vmem:[#allocation2 + $0x2e0] sm:$0xff]
      %v1086 = vld [vmem:[#allocation2 + $0x2e8] sm:$0xff]
      %v1087 = vld [vmem:[#allocation2 + $0x2f0] sm:$0xff]
      %v1088 = vld [vmem:[#allocation2 + $0x2f8] sm:$0xff]
      %v1089 = vpack.c.bf16 %v996, %v993
      %v1090 = vpack.c.bf16 %v997, %v994
      %v1091 = vpack.c.bf16 %v998, %v995
      %v1092 = vpack.c.bf16 %v1002, %v999
      %v1093 = vpack.c.bf16 %v1003, %v1000
      %v1094 = vpack.c.bf16 %v1004, %v1001
      %v1095 = vpack.c.bf16 %v1008, %v1005
      %v1096 = vpack.c.bf16 %v1009, %v1006
      %v1097 = vpack.c.bf16 %v1010, %v1007
      %v1098 = vpack.c.bf16 %v1014, %v1011
      %v1099 = vpack.c.bf16 %v1015, %v1012
      %v1100 = vpack.c.bf16 %v1016, %v1013
      %v1101 = vpack.c.bf16 %v1020, %v1017
      %v1102 = vpack.c.bf16 %v1021, %v1018
      %v1103 = vpack.c.bf16 %v1022, %v1019
      %v1104 = vpack.c.bf16 %v1026, %v1023
      %v1105 = vpack.c.bf16 %v1027, %v1024
      %v1106 = vpack.c.bf16 %v1028, %v1025
      %v1107 = vpack.c.bf16 %v1032, %v1029
      %v1108 = vpack.c.bf16 %v1033, %v1030
      %v1109 = vpack.c.bf16 %v1034, %v1031
      %v1110 = vpack.c.bf16 %v1038, %v1035
      %v1111 = vpack.c.bf16 %v1039, %v1036
      %v1112 = vpack.c.bf16 %v1040, %v1037
      %v1113 = vpack.c.bf16 %v1044, %v1041
      %v1114 = vpack.c.bf16 %v1045, %v1042
      %v1115 = vpack.c.bf16 %v1046, %v1043
      %v1116 = vpack.c.bf16 %v1050, %v1047
      %v1117 = vpack.c.bf16 %v1051, %v1048
      %v1118 = vpack.c.bf16 %v1052, %v1049
      %v1119 = vpack.c.bf16 %v1056, %v1053
      %v1120 = vpack.c.bf16 %v1057, %v1054
      %v1121 = vpack.c.bf16 %v1058, %v1055
      %v1122 = vpack.c.bf16 %v1062, %v1059
      %v1123 = vpack.c.bf16 %v1063, %v1060
      %v1124 = vpack.c.bf16 %v1064, %v1061
      %v1125 = vpack.c.bf16 %v1068, %v1065
      %v1126 = vpack.c.bf16 %v1069, %v1066
      %v1127 = vpack.c.bf16 %v1070, %v1067
      %v1128 = vpack.c.bf16 %v1074, %v1071
      %v1129 = vpack.c.bf16 %v1075, %v1072
      %v1130 = vpack.c.bf16 %v1076, %v1073
      %v1131 = vpack.c.bf16 %v1080, %v1077
      %v1132 = vpack.c.bf16 %v1081, %v1078
      %v1133 = vpack.c.bf16 %v1082, %v1079
      %v1134 = vpack.c.bf16 %v1086, %v1083
      %v1135 = vpack.c.bf16 %v1087, %v1084
      %v1136 = vpack.c.bf16 %v1088, %v1085
      %v1185 = vunpack.c.l.b16 %v1089
      %v1186 = vunpack.c.l.b16 %v1090
      %v1187 = vunpack.c.l.b16 %v1091
      %v1188 = vunpack.c.h.b16 %v1089
      %v1189 = vunpack.c.h.b16 %v1090
      %v1190 = vunpack.c.h.b16 %v1091
      %v1191 = vunpack.c.l.b16 %v1092
      %v1192 = vunpack.c.l.b16 %v1093
      %v1193 = vunpack.c.l.b16 %v1094
      %v1194 = vunpack.c.h.b16 %v1092
      %v1195 = vunpack.c.h.b16 %v1093
      %v1196 = vunpack.c.h.b16 %v1094
      %v1197 = vunpack.c.l.b16 %v1095
      %v1198 = vunpack.c.l.b16 %v1096
      %v1199 = vunpack.c.l.b16 %v1097
      %v1200 = vunpack.c.h.b16 %v1095
      %v1201 = vunpack.c.h.b16 %v1096
      %v1202 = vunpack.c.h.b16 %v1097
      %v1203 = vunpack.c.l.b16 %v1098
      %v1204 = vunpack.c.l.b16 %v1099
      %v1205 = vunpack.c.l.b16 %v1100
      %v1206 = vunpack.c.h.b16 %v1098
      %v1207 = vunpack.c.h.b16 %v1099
      %v1208 = vunpack.c.h.b16 %v1100
      %v1209 = vunpack.c.l.b16 %v1101
      %v1210 = vunpack.c.l.b16 %v1102
      %v1211 = vunpack.c.l.b16 %v1103
      %v1212 = vunpack.c.h.b16 %v1101
      %v1213 = vunpack.c.h.b16 %v1102
      %v1214 = vunpack.c.h.b16 %v1103
      %v1215 = vunpack.c.l.b16 %v1104
      %v1216 = vunpack.c.l.b16 %v1105
      %v1217 = vunpack.c.l.b16 %v1106
      %v1218 = vunpack.c.h.b16 %v1104
      %v1219 = vunpack.c.h.b16 %v1105
      %v1220 = vunpack.c.h.b16 %v1106
      %v1221 = vunpack.c.l.b16 %v1107
      %v1222 = vunpack.c.l.b16 %v1108
      %v1223 = vunpack.c.l.b16 %v1109
      %v1224 = vunpack.c.h.b16 %v1107
      %v1225 = vunpack.c.h.b16 %v1108
      %v1226 = vunpack.c.h.b16 %v1109
      %v1227 = vunpack.c.l.b16 %v1110
      %v1228 = vunpack.c.l.b16 %v1111
      %v1229 = vunpack.c.l.b16 %v1112
      %v1230 = vunpack.c.h.b16 %v1110
      %v1231 = vunpack.c.h.b16 %v1111
      %v1232 = vunpack.c.h.b16 %v1112
      %v1233 = vunpack.c.l.b16 %v1113
      %v1234 = vunpack.c.l.b16 %v1114
      %v1235 = vunpack.c.l.b16 %v1115
      %v1236 = vunpack.c.h.b16 %v1113
      %v1237 = vunpack.c.h.b16 %v1114
      %v1238 = vunpack.c.h.b16 %v1115
      %v1239 = vunpack.c.l.b16 %v1116
      %v1240 = vunpack.c.l.b16 %v1117
      %v1241 = vunpack.c.l.b16 %v1118
      %v1242 = vunpack.c.h.b16 %v1116
      %v1243 = vunpack.c.h.b16 %v1117
      %v1244 = vunpack.c.h.b16 %v1118
      %v1245 = vunpack.c.l.b16 %v1119
      %v1246 = vunpack.c.l.b16 %v1120
      %v1247 = vunpack.c.l.b16 %v1121
      %v1248 = vunpack.c.h.b16 %v1119
      %v1249 = vunpack.c.h.b16 %v1120
      %v1250 = vunpack.c.h.b16 %v1121
      %v1251 = vunpack.c.l.b16 %v1122
      %v1252 = vunpack.c.l.b16 %v1123
      %v1253 = vunpack.c.l.b16 %v1124
      %v1254 = vunpack.c.h.b16 %v1122
      %v1255 = vunpack.c.h.b16 %v1123
      %v1256 = vunpack.c.h.b16 %v1124
      %v1257 = vunpack.c.l.b16 %v1125
      %v1258 = vunpack.c.l.b16 %v1126
      %v1259 = vunpack.c.l.b16 %v1127
      %v1260 = vunpack.c.h.b16 %v1125
      %v1261 = vunpack.c.h.b16 %v1126
      %v1262 = vunpack.c.h.b16 %v1127
      %v1263 = vunpack.c.l.b16 %v1128
      %v1264 = vunpack.c.l.b16 %v1129
      %v1265 = vunpack.c.l.b16 %v1130
      %v1266 = vunpack.c.h.b16 %v1128
      %v1267 = vunpack.c.h.b16 %v1129
      %v1268 = vunpack.c.h.b16 %v1130
      %v1269 = vunpack.c.l.b16 %v1131
      %v1270 = vunpack.c.l.b16 %v1132
      %v1271 = vunpack.c.l.b16 %v1133
      %v1272 = vunpack.c.h.b16 %v1131
      %v1273 = vunpack.c.h.b16 %v1132
      %v1274 = vunpack.c.h.b16 %v1133
      %v1275 = vunpack.c.l.b16 %v1134
      %v1276 = vunpack.c.l.b16 %v1135
      %v1277 = vunpack.c.l.b16 %v1136
      %v1278 = vunpack.c.h.b16 %v1134
      %v1279 = vunpack.c.h.b16 %v1135
      %v1280 = vunpack.c.h.b16 %v1136
      %v1281 = vpack.c.b16 %v1186, %v1185
      %v1282 = vpack.c.b16 %v1187, %v1187
      %v1283 = vpack.c.b16 %v1189, %v1188
      %v1284 = vpack.c.b16 %v1190, %v1190
      %v1285 = vpack.c.b16 %v1192, %v1191
      %v1286 = vpack.c.b16 %v1193, %v1193
      %v1287 = vpack.c.b16 %v1195, %v1194
      %v1288 = vpack.c.b16 %v1196, %v1196
      %v1289 = vpack.c.b16 %v1198, %v1197
      %v1290 = vpack.c.b16 %v1199, %v1199
      %v1291 = vpack.c.b16 %v1201, %v1200
      %v1292 = vpack.c.b16 %v1202, %v1202
      %v1293 = vpack.c.b16 %v1204, %v1203
      %v1294 = vpack.c.b16 %v1205, %v1205
      %v1295 = vpack.c.b16 %v1207, %v1206
      %v1296 = vpack.c.b16 %v1208, %v1208
      %v1297 = vpack.c.b16 %v1210, %v1209
      %v1298 = vpack.c.b16 %v1211, %v1211
      %v1299 = vpack.c.b16 %v1213, %v1212
      %v1300 = vpack.c.b16 %v1214, %v1214
      %v1301 = vpack.c.b16 %v1216, %v1215
      %v1302 = vpack.c.b16 %v1217, %v1217
      %v1303 = vpack.c.b16 %v1219, %v1218
      %v1304 = vpack.c.b16 %v1220, %v1220
      %v1305 = vpack.c.b16 %v1222, %v1221
      %v1306 = vpack.c.b16 %v1223, %v1223
      %v1307 = vpack.c.b16 %v1225, %v1224
      %v1308 = vpack.c.b16 %v1226, %v1226
      %v1309 = vpack.c.b16 %v1228, %v1227
      %v1310 = vpack.c.b16 %v1229, %v1229
      %v1311 = vpack.c.b16 %v1231, %v1230
      %v1312 = vpack.c.b16 %v1232, %v1232
      %v1313 = vpack.c.b16 %v1234, %v1233
      %v1314 = vpack.c.b16 %v1235, %v1235
      %v1315 = vpack.c.b16 %v1237, %v1236
      %v1316 = vpack.c.b16 %v1238, %v1238
      %v1317 = vpack.c.b16 %v1240, %v1239
      %v1318 = vpack.c.b16 %v1241, %v1241
      %v1319 = vpack.c.b16 %v1243, %v1242
      %v1320 = vpack.c.b16 %v1244, %v1244
      %v1321 = vpack.c.b16 %v1246, %v1245
      %v1322 = vpack.c.b16 %v1247, %v1247
      %v1323 = vpack.c.b16 %v1249, %v1248
      %v1324 = vpack.c.b16 %v1250, %v1250
      %v1325 = vpack.c.b16 %v1252, %v1251
      %v1326 = vpack.c.b16 %v1253, %v1253
      %v1327 = vpack.c.b16 %v1255, %v1254
      %v1328 = vpack.c.b16 %v1256, %v1256
      %v1329 = vpack.c.b16 %v1258, %v1257
      %v1330 = vpack.c.b16 %v1259, %v1259
      %v1331 = vpack.c.b16 %v1261, %v1260
      %v1332 = vpack.c.b16 %v1262, %v1262
      %v1333 = vpack.c.b16 %v1264, %v1263
      %v1334 = vpack.c.b16 %v1265, %v1265
      %v1335 = vpack.c.b16 %v1267, %v1266
      %v1336 = vpack.c.b16 %v1268, %v1268
      %v1337 = vpack.c.b16 %v1270, %v1269
      %v1338 = vpack.c.b16 %v1271, %v1271
      %v1339 = vpack.c.b16 %v1273, %v1272
      %v1340 = vpack.c.b16 %v1274, %v1274
      %v1341 = vpack.c.b16 %v1276, %v1275
      %v1342 = vpack.c.b16 %v1277, %v1277
      %v1343 = vpack.c.b16 %v1279, %v1278
      %v1344 = vpack.c.b16 %v1280, %v1280
      %1409 = vst [vmem:[%s2] sm:$0xff] %v1281
      %1410 = vst [vmem:[%s2 + $0x8] sm:$0xf] %v1282
      %1411 = vst [vmem:[%s2 + $0xc] sm:$0xff] %v1283
      %1412 = vst [vmem:[%s2 + $0x14] sm:$0xf] %v1284
      %1413 = vst [vmem:[%s2 + $0x18] sm:$0xff] %v1285
      %1414 = vst [vmem:[%s2 + $0x20] sm:$0xf] %v1286
      %1415 = vst [vmem:[%s2 + $0x24] sm:$0xff] %v1287
      %1416 = vst [vmem:[%s2 + $0x2c] sm:$0xf] %v1288
      %1417 = vst [vmem:[%s2 + $0x30] sm:$0xff] %v1289
      %1418 = vst [vmem:[%s2 + $0x38] sm:$0xf] %v1290
      %1419 = vst [vmem:[%s2 + $0x3c] sm:$0xff] %v1291
      %1420 = vst [vmem:[%s2 + $0x44] sm:$0xf] %v1292
      %1421 = vst [vmem:[%s2 + $0x48] sm:$0xff] %v1293
      %1422 = vst [vmem:[%s2 + $0x50] sm:$0xf] %v1294
      %1423 = vst [vmem:[%s2 + $0x54] sm:$0xff] %v1295
      %1424 = vst [vmem:[%s2 + $0x5c] sm:$0xf] %v1296
      %1425 = vst [vmem:[%s2 + $0x60] sm:$0xff] %v1297
      %1426 = vst [vmem:[%s2 + $0x68] sm:$0xf] %v1298
      %1427 = vst [vmem:[%s2 + $0x6c] sm:$0xff] %v1299
      %1428 = vst [vmem:[%s2 + $0x74] sm:$0xf] %v1300
      %1429 = vst [vmem:[%s2 + $0x78] sm:$0xff] %v1301
      %1430 = vst [vmem:[%s2 + $0x80] sm:$0xf] %v1302
      %1431 = vst [vmem:[%s2 + $0x84] sm:$0xff] %v1303
      %1432 = vst [vmem:[%s2 + $0x8c] sm:$0xf] %v1304
      %1433 = vst [vmem:[%s2 + $0x90] sm:$0xff] %v1305
      %1434 = vst [vmem:[%s2 + $0x98] sm:$0xf] %v1306
      %1435 = vst [vmem:[%s2 + $0x9c] sm:$0xff] %v1307
      %1436 = vst [vmem:[%s2 + $0xa4] sm:$0xf] %v1308
      %1437 = vst [vmem:[%s2 + $0xa8] sm:$0xff] %v1309
      %1438 = vst [vmem:[%s2 + $0xb0] sm:$0xf] %v1310
      %1439 = vst [vmem:[%s2 + $0xb4] sm:$0xff] %v1311
      %1440 = vst [vmem:[%s2 + $0xbc] sm:$0xf] %v1312
      %1441 = vst [vmem:[%s2 + $0xc0] sm:$0xff] %v1313
      %1442 = vst [vmem:[%s2 + $0xc8] sm:$0xf] %v1314
      %1443 = vst [vmem:[%s2 + $0xcc] sm:$0xff] %v1315
      %1444 = vst [vmem:[%s2 + $0xd4] sm:$0xf] %v1316
      %1445 = vst [vmem:[%s2 + $0xd8] sm:$0xff] %v1317
      %1446 = vst [vmem:[%s2 + $0xe0] sm:$0xf] %v1318
      %1447 = vst [vmem:[%s2 + $0xe4] sm:$0xff] %v1319
      %1448 = vst [vmem:[%s2 + $0xec] sm:$0xf] %v1320
      %1449 = vst [vmem:[%s2 + $0xf0] sm:$0xff] %v1321
      %1450 = vst [vmem:[%s2 + $0xf8] sm:$0xf] %v1322
      %1451 = vst [vmem:[%s2 + $0xfc] sm:$0xff] %v1323
      %1452 = vst [vmem:[%s2 + $0x104] sm:$0xf] %v1324
      %1453 = vst [vmem:[%s2 + $0x108] sm:$0xff] %v1325
      %1454 = vst [vmem:[%s2 + $0x110] sm:$0xf] %v1326
      %1455 = vst [vmem:[%s2 + $0x114] sm:$0xff] %v1327
      %1456 = vst [vmem:[%s2 + $0x11c] sm:$0xf] %v1328
      %1457 = vst [vmem:[%s2 + $0x120] sm:$0xff] %v1329
      %1458 = vst [vmem:[%s2 + $0x128] sm:$0xf] %v1330
      %1459 = vst [vmem:[%s2 + $0x12c] sm:$0xff] %v1331
      %1460 = vst [vmem:[%s2 + $0x134] sm:$0xf] %v1332
      %1461 = vst [vmem:[%s2 + $0x138] sm:$0xff] %v1333
      %1462 = vst [vmem:[%s2 + $0x140] sm:$0xf] %v1334
      %1463 = vst [vmem:[%s2 + $0x144] sm:$0xff] %v1335
      %1464 = vst [vmem:[%s2 + $0x14c] sm:$0xf] %v1336
      %1465 = vst [vmem:[%s2 + $0x150] sm:$0xff] %v1337
      %1466 = vst [vmem:[%s2 + $0x158] sm:$0xf] %v1338
      %1467 = vst [vmem:[%s2 + $0x15c] sm:$0xff] %v1339
      %1468 = vst [vmem:[%s2 + $0x164] sm:$0xf] %v1340
      %1469 = vst [vmem:[%s2 + $0x168] sm:$0xff] %v1341
      %1470 = vst [vmem:[%s2 + $0x170] sm:$0xf] %v1342
      %1471 = vst [vmem:[%s2 + $0x174] sm:$0xff] %v1343
      %1472 = vst [vmem:[%s2 + $0x17c] sm:$0xf] %v1344
    $region25: #{forward.2} parent=1 // pred_fallthru
      _
    // Predicated region
    $region26: #{forward.2} parent=1 // pred_check
      _
    $region27: #{forward.2} parent=1 // pred_check_branch
      %1474 = sbr.rel (0) target = $region29
    $region28: #{forward.2} parent=1 // pred_region
      _
    $region29: #{forward.2} parent=1 // pred_fallthru
      _
    // Predicated region
    $region30: #{forward.2} parent=1 // pred_check
      _
    $region31: #{forward.2} parent=1 // pred_check_branch
      %1476 = sbr.rel (0) target = $region33
    $region32: #{forward.2} parent=1 // pred_region
      _
    $region33: #{forward.2} parent=1 // pred_fallthru
      _
    %1477 = vsyncpa [#allocation4], 1
    %1478 = vsyncpa [#allocation6], 1

</llo_original>
